<compile_context>
chip_gen: v7x
topology: tpu7x:2x2x1
jax: 0.10.0
libtpu: 0.0.40
codegen_flags: <defaults>
</compile_context>

<pallas_src>
import functools

import jax
import jax.numpy as jnp
from jax.experimental import pallas as pl
from jax.experimental.pallas import tpu as pltpu


_VMEM_LIMIT = 48 * 1024 * 1024   # <= 64 MiB physical on v7x; plenty of headroom on v5e/v6e


def _round_up(x, m):
    return (x + m - 1) // m * m


def _pad_to(x, shape):
    return jnp.pad(x, [(0, t - s) for s, t in zip(x.shape, shape)])


def _tile(dim, unit, cap):
    """Largest tile <= cap (multiple of `unit`) that evenly covers `dim` after padding."""
    padded = _round_up(dim, unit)
    nt = -(-padded // cap)
    t = _round_up(-(-dim // nt), unit)
    return t, _round_up(dim, t)


def _group(nt, t, cap):
    """Largest multiple f*t of the base tile t (f a divisor of nt) not exceeding cap."""
    f = 1
    for d in range(1, nt + 1):
        if nt % d == 0 and d * t <= cap:
            f = d
    return f * t


# ---------------------------------------------------------------------------
# Kernel A : tiled bf16 matmul with f32 scratch accumulator
#            -> bf16 output block + per-channel (sum, centered-sumsq) rows
# ---------------------------------------------------------------------------
def _mm_stats_kernel(a_ref, w_ref, y_ref, s_ref, acc_ref):
    k = pl.program_id(2)

    @pl.when(k == 0)
    def _():
        acc_ref[...] = jnp.zeros_like(acc_ref)

    acc_ref[...] += jnp.dot(a_ref[...], w_ref[...],
                            preferred_element_type=jnp.float32)

    @pl.when(k == pl.num_programs(2) - 1)
    def _():
        acc = acc_ref[...]
        col_sum = jnp.sum(acc, axis=0, keepdims=True)              # (1, TN)
        c = col_sum * (1.0 / acc.shape[0])                         # tile column mean
        d = acc - c
        css = jnp.sum(d * d, axis=0, keepdims=True)                # centered sumsq
        s_ref[0:1, :] = col_sum
        s_ref[1:2, :] = css
        y_ref[...] = acc.astype(y_ref.dtype)                       # bf16 writeback


# ---------------------------------------------------------------------------
# Kernel B : folded BN affine (+ residual) (+ ReLU), bf16 in / bf16 out
# ---------------------------------------------------------------------------
def _bn_act_kernel(relu, has_res, *refs):
    if has_res:
        y_ref, sc_ref, sh_ref, r_ref, o_ref = refs
    else:
        y_ref, sc_ref, sh_ref, o_ref = refs
    out = y_ref[...].astype(jnp.float32) * sc_ref[...] + sh_ref[...]
    if has_res:
        out = out + r_ref[...].astype(jnp.float32)
    if relu:
        out = jnp.maximum(out, 0.0)
    o_ref[...] = out.astype(o_ref.dtype)


# ---------------------------------------------------------------------------
# Fused kernel (Mt == 1): matmul + batch-stats BN + residual + ReLU in one call
# ---------------------------------------------------------------------------
def _fused_mm_bn_kernel(relu, has_res, inv_m, n_pad_rows, eps, *refs):
    if has_res:
        a_ref, w_ref, g_ref, b_ref, r_ref, o_ref, acc_ref = refs
    else:
        a_ref, w_ref, g_ref, b_ref, o_ref, acc_ref = refs
    k = pl.program_id(1)

    @pl.when(k == 0)
    def _():
        acc_ref[...] = jnp.zeros_like(acc_ref)

    acc_ref[...] += jnp.dot(a_ref[...], w_ref[...],
                            preferred_element_type=jnp.float32)

    @pl.when(k == pl.num_programs(1) - 1)
    def _():
        acc = acc_ref[...]
        mean = jnp.sum(acc, axis=0, keepdims=True) * inv_m          # (1, TN)
        d = acc - mean
        css = jnp.sum(d * d, axis=0, keepdims=True)
        # remove the (0 - mean)^2 contribution of the zero-padded M rows
        var = jnp.maximum((css - n_pad_rows * mean * mean) * inv_m, 0.0)
        scale = g_ref[...] * jax.lax.rsqrt(var + eps)
        shift = b_ref[...] - mean * scale
        out = acc * scale + shift
        if has_res:
            out = out + r_ref[...].astype(jnp.float32)
        if relu:
            out = jnp.maximum(out, 0.0)
        o_ref[...] = out.astype(o_ref.dtype)


# ---------------------------------------------------------------------------
# Fused conv-as-matmul + training-mode BatchNorm + residual + ReLU dispatcher
# ---------------------------------------------------------------------------
def matmul_bn_act(A, Wm, gamma, beta, R=None, *, relu, eps=1e-5):
    """relu?( BN_batchstats(A @ Wm) (+ R) ) -> bfloat16 (M, Cout)."""
    M, K = A.shape
    Nc = Wm.shape[1]
    has_res = R is not None

    TM, Mp = _tile(M, 8, 512)
    TN, Np = _tile(Nc, 128, 512)
    Mt, Nt = Mp // TM, Np // TN
    fused = Mt == 1
    TK, Kp = _tile(K, 128, 2048 if fused else 1024)
    Kt = Kp // TK

    if fused and Nt == 1 and TN >= 256:
        # keep >= 2 tiles on the 'parallel' n axis so both v7x TensorCores get work
        TN //= 2
        Np = _round_up(Nc, TN)
        Nt = Np // TN

    A_p = _pad_to(A.astype(jnp.bfloat16), (Mp, Kp))
    W_p = _pad_to(Wm.astype(jnp.bfloat16), (Kp, Np))

    # ---------------- fused single-launch path (deep / tiny-M convs) ----------------
    if fused:
        g_p = _pad_to(gamma.reshape(1, Nc).astype(jnp.float32), (1, Np))
        b_p = _pad_to(beta.reshape(1, Nc).astype(jnp.float32), (1, Np))
        in_specs = [
            pl.BlockSpec((TM, TK), lambda n, k: (0, k)),   # patches
            pl.BlockSpec((TK, TN), lambda n, k: (k, n)),   # weights
            pl.BlockSpec((1, TN), lambda n, k: (0, n)),    # gamma
            pl.BlockSpec((1, TN), lambda n, k: (0, n)),    # beta
        ]
        args = [A_p, W_p, g_p, b_p]
        if has_res:
            in_specs.append(pl.BlockSpec((TM, TN), lambda n, k: (0, n)))
            args.append(_pad_to(R.astype(jnp.bfloat16), (Mp, Np)))

        out = pl.pallas_call(
            functools.partial(_fused_mm_bn_kernel, relu, has_res,
                              1.0 / M, float(Mp - M), eps),
            out_shape=jax.ShapeDtypeStruct((Mp, Np), jnp.bfloat16),
            grid_spec=pltpu.PrefetchScalarGridSpec(
                num_scalar_prefetch=0,
                grid=(Nt, Kt),
                in_specs=in_specs,
                out_specs=pl.BlockSpec((TM, TN), lambda n, k: (0, n)),
                scratch_shapes=[pltpu.VMEM((TM, TN), jnp.float32)],
            ),
            compiler_params=pltpu.CompilerParams(
                dimension_semantics=("parallel", "arbitrary"),
                vmem_limit_bytes=_VMEM_LIMIT),
        )(*args)
        return out[:M, :Nc]

    # ---------------- two-kernel path (large-M convs: stem / early layers) ----------------
    y, stats = pl.pallas_call(
        _mm_stats_kernel,
        out_shape=(jax.ShapeDtypeStruct((Mp, Np), jnp.bfloat16),
                   jax.ShapeDtypeStruct((Mt * 8, Np), jnp.float32)),
        grid_spec=pltpu.PrefetchScalarGridSpec(
            num_scalar_prefetch=0,
            grid=(Mt, Nt, Kt),
            in_specs=[
                pl.BlockSpec((TM, TK), lambda m, n, k: (m, k)),   # patches
                pl.BlockSpec((TK, TN), lambda m, n, k: (k, n)),   # weights
            ],
            out_specs=[
                pl.BlockSpec((TM, TN), lambda m, n, k: (m, n)),   # conv out (bf16)
                pl.BlockSpec((8, TN), lambda m, n, k: (m, n)),    # tile stats
            ],
            scratch_shapes=[pltpu.VMEM((TM, TN), jnp.float32)],
        ),
        compiler_params=pltpu.CompilerParams(
            dimension_semantics=("parallel", "parallel", "arbitrary"),
            vmem_limit_bytes=_VMEM_LIMIT),
    )(A_p, W_p)

    # Tiny per-channel glue: tile-mean-shifted stats combine (numerically centered).
    st = stats.reshape(Mt, 8, Np)[:, :2, :Nc]
    sum_t = st[:, 0, :]                                   # (Mt, Nc)
    css_t = st[:, 1, :]                                   # centered about c_t over TM rows
    c_t = sum_t * (1.0 / TM)
    n_real = jnp.full((Mt, 1), float(TM), jnp.float32).at[-1, 0].set(float(TM - (Mp - M)))
    n_pad = float(TM) - n_real
    mean = jnp.sum(sum_t, axis=0) * (1.0 / M)             # (Nc,)
    d = mean[None, :] - c_t
    css_real = css_t - n_pad * c_t * c_t                  # drop zero-padded rows' term
    corr = -2.0 * d * (sum_t - n_real * c_t) + n_real * d * d
    var = jnp.maximum(jnp.sum(css_real + corr, axis=0) * (1.0 / M), 0.0)
    scale = gamma * jax.lax.rsqrt(var + eps)
    shift = beta - mean * scale

    scale_p = _pad_to(scale.reshape(1, Nc).astype(jnp.float32), (1, Np))
    shift_p = _pad_to(shift.reshape(1, Nc).astype(jnp.float32), (1, Np))

    # Kernel B with its own, larger tiles (divisor-aligned to the matmul tiling),
    # n-outer grid so scale/shift re-DMA only when the channel tile changes.
    TMB = _group(Mt, TM, 1024)
    TNB = _group(Nt, TN, 1024)
    MtB, NtB = Mp // TMB, Np // TNB

    in_specs = [
        pl.BlockSpec((TMB, TNB), lambda n, m: (m, n)),    # conv out (bf16)
        pl.BlockSpec((1, TNB), lambda n, m: (0, n)),      # scale
        pl.BlockSpec((1, TNB), lambda n, m: (0, n)),      # shift
    ]
    args = [y, scale_p, shift_p]
    if has_res:
        in_specs.append(pl.BlockSpec((TMB, TNB), lambda n, m: (m, n)))
        args.append(_pad_to(R.astype(jnp.bfloat16), (Mp, Np)))

    out = pl.pallas_call(
        functools.partial(_bn_act_kernel, relu, has_res),
        out_shape=jax.ShapeDtypeStruct((Mp, Np), jnp.bfloat16),
        grid_spec=pltpu.PrefetchScalarGridSpec(
            num_scalar_prefetch=0,
            grid=(NtB, MtB),
            in_specs=in_specs,
            out_specs=pl.BlockSpec((TMB, TNB), lambda n, m: (m, n)),
        ),
        compiler_params=pltpu.CompilerParams(
            dimension_semantics=("parallel", "parallel"),
            vmem_limit_bytes=_VMEM_LIMIT),
    )(*args)
    return out[:M, :Nc]


# ---------------------------------------------------------------------------
# Plain-JAX glue: patch extraction (im2col), maxpool
# ---------------------------------------------------------------------------
def im2col(x, kh, kw, stride, pad):
    """x: (N,H,W,C) -> (N*Ho*Wo, kh*kw*C), patch elements ordered (i,j,c)."""
    N, H, W, C = x.shape
    xp = jnp.pad(x, ((0, 0), (pad, pad), (pad, pad), (0, 0)))
    Hp, Wp = H + 2 * pad, W + 2 * pad
    Ho = (Hp - kh) // stride + 1
    Wo = (Wp - kw) // stride + 1
    cols = []
    for i in range(kh):
        for j in range(kw):
            cols.append(xp[:, i:i + stride * Ho:stride,
                           j:j + stride * Wo:stride, :])
    patches = jnp.stack(cols, axis=3)            # (N,Ho,Wo,kh*kw,C)
    return patches.reshape(N * Ho * Wo, kh * kw * C), Ho, Wo


@functools.partial(jax.jit, static_argnames=("stride", "pad", "relu"))
def conv_bn_act(x, w, gamma, beta, *, stride, pad, relu, residual=None):
    """x: (N,H,W,Cin) bf16; w: (Cout,Cin,kh,kw) (PyTorch layout)."""
    N = x.shape[0]
    Cout, Cin, kh, kw = w.shape
    A, Ho, Wo = im2col(x, kh, kw, stride, pad)
    Wm = jnp.transpose(w, (2, 3, 1, 0)).reshape(kh * kw * Cin, Cout)
    R = None if residual is None else residual.reshape(A.shape[0], Cout)
    y = matmul_bn_act(A, Wm, gamma, beta, R, relu=relu)
    return y.reshape(N, Ho, Wo, Cout)


def maxpool_3x3_s2_p1(x):
    # cheap reduction, kept in plain JAX glue (kernel hot path is the convs)
    init = jnp.array(-jnp.inf, dtype=x.dtype)
    return jax.lax.reduce_window(
        x, init, jax.lax.max,
        window_dimensions=(1, 3, 3, 1), window_strides=(1, 2, 2, 1),
        padding=((0, 0), (1, 1), (1, 1), (0, 0)))


# ---------------------------------------------------------------------------
# Deterministic parameter construction (ResNet-50 + head)
# ---------------------------------------------------------------------------
class ParamInit:
    def __init__(self, seed=0):
        self._key = jax.random.PRNGKey(seed)
        self._n = 0

    def _next(self):
        self._n += 1
        return jax.random.fold_in(self._key, self._n)

    def conv(self, cout, cin, kh, kw):
        fan_in = cin * kh * kw
        return (jax.random.normal(self._next(), (cout, cin, kh, kw),
                                  jnp.float32) * (2.0 / fan_in) ** 0.5)

    def bn(self, c):
        g = 1.0 + 0.1 * jax.random.normal(self._next(), (c,), jnp.float32)
        b = 0.1 * jax.random.normal(self._next(), (c,), jnp.float32)
        return g, b


def make_bottleneck(init, inplanes, planes, stride, downsample):
    p = {
        "w1": init.conv(planes, inplanes, 1, 1), "bn1": init.bn(planes),
        "w2": init.conv(planes, planes, 3, 3),   "bn2": init.bn(planes),
        "w3": init.conv(planes * 4, planes, 1, 1), "bn3": init.bn(planes * 4),
        "stride": stride,
    }
    if downsample:
        p["wd"] = init.conv(planes * 4, inplanes, 1, 1)
        p["bnd"] = init.bn(planes * 4)
    return p


def make_backbone_params(out_channels=256, seed=0):
    init = ParamInit(seed)
    params = {"conv1": init.conv(64, 3, 7, 7), "bn1": init.bn(64)}
    inplanes = 64
    cfg = [("layer1", 64, 3, 1), ("layer2", 128, 4, 2),
           ("layer3", 256, 6, 2), ("layer4", 512, 3, 2)]
    for name, planes, blocks, stride in cfg:
        layer = []
        ds = (stride != 1) or (inplanes != planes * 4)
        layer.append(make_bottleneck(init, inplanes, planes, stride, ds))
        inplanes = planes * 4
        for _ in range(1, blocks):
            layer.append(make_bottleneck(init, inplanes, planes, 1, False))
        params[name] = layer
    # head "self.layer2": Conv2d(2048, out_channels, 3, stride=2, padding=1)
    #                     + BatchNorm2d + ReLU
    # (conv bias omitted: it is exactly cancelled by the batch-norm mean
    #  subtraction when BN uses batch statistics)
    params["head_w"] = init.conv(out_channels, 2048, 3, 3)
    params["head_bn"] = init.bn(out_channels)
    return params


# ---------------------------------------------------------------------------
# Forward pass (mirrors BackboneLayer.forward)
# ---------------------------------------------------------------------------
def bottleneck_forward(x, p):
    identity = x
    out = conv_bn_act(x, p["w1"], *p["bn1"], stride=1, pad=0, relu=True)
    out = conv_bn_act(out, p["w2"], *p["bn2"], stride=p["stride"], pad=1,
                      relu=True)
    if "wd" in p:
        identity = conv_bn_act(x, p["wd"], *p["bnd"], stride=p["stride"],
                               pad=0, relu=False)
    out = conv_bn_act(out, p["w3"], *p["bn3"], stride=1, pad=0, relu=True,
                      residual=identity)
    return out


def backbone_layer_forward(x_nchw, params):
    """Returns (layer1, layer2, layer3, layer4, head) feature maps in NCHW f32."""
    x = jnp.transpose(x_nchw, (0, 2, 3, 1)).astype(jnp.bfloat16)  # NCHW->NHWC
    # ResNet-50 stem
    x = conv_bn_act(x, params["conv1"], *params["bn1"], stride=2, pad=3,
                    relu=True)
    x = maxpool_3x3_s2_p1(x)
    # body with intermediate-layer taps (IntermediateLayerGetter equivalent)
    feats = []
    for name in ("layer1", "layer2", "layer3", "layer4"):
        for blk in params[name]:
            x = bottleneck_forward(x, blk)
        feats.append(x)
    # extra head on layer4 output
    out2 = conv_bn_act(feats[-1], params["head_w"], *params["head_bn"],
                       stride=2, pad=1, relu=True)
    to_nchw = lambda t: jnp.transpose(t, (0, 3, 1, 2)).astype(jnp.float32)
    return tuple(to_nchw(t) for t in (*feats, out2))


if __name__ == "__main__":
    params = make_backbone_params(out_channels=256, seed=0)
    x = jax.random.normal(jax.random.PRNGKey(0), (2, 3, 64, 64), jnp.float32)

    outs = backbone_layer_forward(x, params)
    outs = jax.block_until_ready(outs)

    expected = [(2, 256, 16, 16), (2, 512, 8, 8), (2, 1024, 4, 4),
                (2, 2048, 2, 2), (2, 256, 1, 1)]
    got = [tuple(int(d) for d in o.shape) for o in outs]
    assert got == expected, got
    assert all(bool(jnp.all(jnp.isfinite(o))) for o in outs)
    print("KERNEL_OK")
</pallas_src>

<mosaic_0001>
module attributes {stable_mosaic.version = 11 : i64} {
  func.func @_mm_stats_kernel(%arg0: i32, %arg1: i32, %arg2: i32, %arg3: memref<512x256xbf16, #tpu.memory_space<vmem>>, %arg4: memref<256x128xbf16, #tpu.memory_space<vmem>>, %arg5: memref<512x128xbf16, #tpu.memory_space<vmem>>, %arg6: memref<8x128xf32, #tpu.memory_space<vmem>>, %arg7: memref<512x128xf32, #tpu.memory_space<vmem>>) attributes {dimension_semantics = [#tpu.dimension_semantics<parallel>, #tpu.dimension_semantics<parallel>, #tpu.dimension_semantics<arbitrary>], iteration_bounds = array<i64: 4, 1, 1>, scalar_prefetch = 0 : i64, scratch_operands = 1 : i64, tpu.core_type = #tpu.core_type<tc>, window_params = [{transform_indices = @transform_0, window_bounds = array<i64: 512, 256>}, {transform_indices = @transform_1, window_bounds = array<i64: 256, 128>}, {transform_indices = @transform_2, window_bounds = array<i64: 512, 128>}, {transform_indices = @transform_3, window_bounds = array<i64: 8, 128>}]} {
    %c0_i32 = arith.constant 0 : i32
    %0 = arith.cmpi eq, %arg2, %c0_i32 : i32
    %1 = arith.extui %0 : i1 to i32
    %c0_i32_0 = arith.constant 0 : i32
    %2 = arith.cmpi ne, %1, %c0_i32_0 : i32
    scf.if %2 {
      %cst_10 = arith.constant 0.000000e+00 : f32
      %12 = vector.broadcast %cst_10 : f32 to vector<512x128xf32>
      %c0_11 = arith.constant 0 : index
      %c0_12 = arith.constant 0 : index
      %13 = vector.load %arg7[%c0_11, %c0_12] : memref<512x128xf32, #tpu.memory_space<vmem>>, vector<512x128xf32>
      tpu.vector_store %arg7[%c0_11, %c0_12], %12 {strides = array<i32>} : memref<512x128xf32, #tpu.memory_space<vmem>>, vector<512x128xf32>,
    } else {
    }
    %c0 = arith.constant 0 : index
    %c0_1 = arith.constant 0 : index
    %3 = vector.load %arg7[%c0, %c0_1] : memref<512x128xf32, #tpu.memory_space<vmem>>, vector<512x128xf32>
    %c0_2 = arith.constant 0 : index
    %c0_3 = arith.constant 0 : index
    %4 = vector.load %arg3[%c0_2, %c0_3] : memref<512x256xbf16, #tpu.memory_space<vmem>>, vector<512x256xbf16>
    %c0_4 = arith.constant 0 : index
    %c0_5 = arith.constant 0 : index
    %5 = vector.load %arg4[%c0_4, %c0_5] : memref<256x128xbf16, #tpu.memory_space<vmem>>, vector<256x128xbf16>
    %cst = arith.constant dense<0.000000e+00> : vector<512x128xf32>
    %6 = tpu.matmul %4, %5, %cst {dimension_numbers = #tpu.dot_dimension_numbers<[1], [0], [0], [1], [0, 0, 1, 1], [], []>} : vector<512x256xbf16>, vector<256x128xbf16>, vector<512x128xf32> -> vector<512x128xf32>
    %7 = arith.addf %3, %6 : vector<512x128xf32>
    %c0_6 = arith.constant 0 : index
    %c0_7 = arith.constant 0 : index
    %8 = vector.load %arg7[%c0_6, %c0_7] : memref<512x128xf32, #tpu.memory_space<vmem>>, vector<512x128xf32>
    tpu.vector_store %arg7[%c0_6, %c0_7], %7 {strides = array<i32>} : memref<512x128xf32, #tpu.memory_space<vmem>>, vector<512x128xf32>,
    %c0_i32_8 = arith.constant 0 : i32
    %9 = arith.cmpi eq, %arg2, %c0_i32_8 : i32
    %10 = arith.extui %9 : i1 to i32
    %c0_i32_9 = arith.constant 0 : i32
    %11 = arith.cmpi ne, %10, %c0_i32_9 : i32
    scf.if %11 {
      %c0_10 = arith.constant 0 : index
      %c0_11 = arith.constant 0 : index
      %12 = vector.load %arg7[%c0_10, %c0_11] : memref<512x128xf32, #tpu.memory_space<vmem>>, vector<512x128xf32>
      %cst_12 = arith.constant dense<0.000000e+00> : vector<128xf32>
      %13 = vector.multi_reduction <add>, %12, %cst_12 [0] : vector<512x128xf32> to vector<128xf32>
      %14 = vector.shape_cast %13 : vector<128xf32> to vector<1x128xf32>
      %cst_13 = arith.constant 0.001953125 : f32
      %15 = vector.broadcast %cst_13 : f32 to vector<1x128xf32>
      %16 = arith.mulf %14, %15 : vector<1x128xf32>
      %17 = vector.broadcast %16 : vector<1x128xf32> to vector<512x128xf32>
      %18 = arith.subf %12, %17 : vector<512x128xf32>
      %19 = arith.mulf %18, %18 : vector<512x128xf32>
      %cst_14 = arith.constant dense<0.000000e+00> : vector<128xf32>
      %20 = vector.multi_reduction <add>, %19, %cst_14 [0] : vector<512x128xf32> to vector<128xf32>
      %21 = vector.shape_cast %20 : vector<128xf32> to vector<1x128xf32>
      %c0_15 = arith.constant 0 : index
      %c0_16 = arith.constant 0 : index
      %22 = vector.load %arg6[%c0_15, %c0_16] : memref<8x128xf32, #tpu.memory_space<vmem>>, vector<1x128xf32>
      tpu.vector_store %arg6[%c0_15, %c0_16], %14 {strides = array<i32>} : memref<8x128xf32, #tpu.memory_space<vmem>>, vector<1x128xf32>,
      %c1 = arith.constant 1 : index
      %c0_17 = arith.constant 0 : index
      %23 = vector.load %arg6[%c1, %c0_17] : memref<8x128xf32, #tpu.memory_space<vmem>>, vector<1x128xf32>
      tpu.vector_store %arg6[%c1, %c0_17], %21 {strides = array<i32>} : memref<8x128xf32, #tpu.memory_space<vmem>>, vector<1x128xf32>,
      %24 = arith.truncf %12 : vector<512x128xf32> to vector<512x128xbf16>
      %c0_18 = arith.constant 0 : index
      %c0_19 = arith.constant 0 : index
      %25 = vector.load %arg5[%c0_18, %c0_19] : memref<512x128xbf16, #tpu.memory_space<vmem>>, vector<512x128xbf16>
      tpu.vector_store %arg5[%c0_18, %c0_19], %24 {strides = array<i32>} : memref<512x128xbf16, #tpu.memory_space<vmem>>, vector<512x128xbf16>,
    } else {
    }
    return
  }
  func.func @transform_0(%arg0: i32, %arg1: i32, %arg2: i32) -> (i32, i32) {
    %c0_i32 = arith.constant 0 : i32
    return %arg0, %arg2 : i32, i32
  }
  func.func @transform_1(%arg0: i32, %arg1: i32, %arg2: i32) -> (i32, i32) {
    %c0_i32 = arith.constant 0 : i32
    return %arg2, %arg1 : i32, i32
  }
  func.func @transform_2(%arg0: i32, %arg1: i32, %arg2: i32) -> (i32, i32) {
    %c0_i32 = arith.constant 0 : i32
    return %arg0, %arg1 : i32, i32
  }
  func.func @transform_3(%arg0: i32, %arg1: i32, %arg2: i32) -> (i32, i32) {
    %c0_i32 = arith.constant 0 : i32
    return %arg0, %arg1 : i32, i32
  }
}

module attributes {stable_mosaic.version = 11 : i64} {
  func.func @_bn_act_kernel(%arg0: i32, %arg1: i32, %arg2: memref<1024x128xbf16, #tpu.memory_space<vmem>>, %arg3: memref<1x128xf32, #tpu.memory_space<vmem>>, %arg4: memref<1x128xf32, #tpu.memory_space<vmem>>, %arg5: memref<1024x128xbf16, #tpu.memory_space<vmem>>) attributes {dimension_semantics = [#tpu.dimension_semantics<parallel>, #tpu.dimension_semantics<parallel>], iteration_bounds = array<i64: 1, 2>, scalar_prefetch = 0 : i64, scratch_operands = 0 : i64, tpu.core_type = #tpu.core_type<tc>, window_params = [{transform_indices = @transform_0, window_bounds = array<i64: 1024, 128>}, {transform_indices = @transform_1, window_bounds = array<i64: 1, 128>}, {transform_indices = @transform_2, window_bounds = array<i64: 1, 128>}, {transform_indices = @transform_3, window_bounds = array<i64: 1024, 128>}]} {
    %c0 = arith.constant 0 : index
    %c0_0 = arith.constant 0 : index
    %0 = vector.load %arg2[%c0, %c0_0] : memref<1024x128xbf16, #tpu.memory_space<vmem>>, vector<1024x128xbf16>
    %1 = arith.extf %0 : vector<1024x128xbf16> to vector<1024x128xf32>
    %c0_1 = arith.constant 0 : index
    %c0_2 = arith.constant 0 : index
    %2 = vector.load %arg3[%c0_1, %c0_2] : memref<1x128xf32, #tpu.memory_space<vmem>>, vector<1x128xf32>
    %3 = vector.broadcast %2 : vector<1x128xf32> to vector<1024x128xf32>
    %4 = arith.mulf %1, %3 : vector<1024x128xf32>
    %c0_3 = arith.constant 0 : index
    %c0_4 = arith.constant 0 : index
    %5 = vector.load %arg4[%c0_3, %c0_4] : memref<1x128xf32, #tpu.memory_space<vmem>>, vector<1x128xf32>
    %6 = vector.broadcast %5 : vector<1x128xf32> to vector<1024x128xf32>
    %7 = arith.addf %4, %6 : vector<1024x128xf32>
    %cst = arith.constant 0.000000e+00 : f32
    %8 = vector.broadcast %cst : f32 to vector<1024x128xf32>
    %9 = arith.maximumf %7, %8 : vector<1024x128xf32>
    %10 = arith.truncf %9 : vector<1024x128xf32> to vector<1024x128xbf16>
    %c0_5 = arith.constant 0 : index
    %c0_6 = arith.constant 0 : index
    %11 = vector.load %arg5[%c0_5, %c0_6] : memref<1024x128xbf16, #tpu.memory_space<vmem>>, vector<1024x128xbf16>
    tpu.vector_store %arg5[%c0_5, %c0_6], %10 {strides = array<i32>} : memref<1024x128xbf16, #tpu.memory_space<vmem>>, vector<1024x128xbf16>,
    return
  }
  func.func @transform_0(%arg0: i32, %arg1: i32) -> (i32, i32) {
    %c0_i32 = arith.constant 0 : i32
    return %arg1, %arg0 : i32, i32
  }
  func.func @transform_1(%arg0: i32, %arg1: i32) -> (i32, i32) {
    %c0_i32 = arith.constant 0 : i32
    %c0_i32_0 = arith.constant 0 : i32
    return %c0_i32, %arg0 : i32, i32
  }
  func.func @transform_2(%arg0: i32, %arg1: i32) -> (i32, i32) {
    %c0_i32 = arith.constant 0 : i32
    %c0_i32_0 = arith.constant 0 : i32
    return %c0_i32, %arg0 : i32, i32
  }
  func.func @transform_3(%arg0: i32, %arg1: i32) -> (i32, i32) {
    %c0_i32 = arith.constant 0 : i32
    return %arg1, %arg0 : i32, i32
  }
}

</mosaic_0001>

<llo_original>
// kernel: conv_bn_act.3
$region0: #{conv_bn_act.3}
  #allocation0 [shape = 'u32[]', space=smem, size = 0x4, offset = 0x4, fixed_abs, tag = 'smem constant byte address 0x4 - core index']
  #allocation1 [shape = 'u32[144,128]{1,0:T(1,128)}', space=vmem, size = 0x12000, scoped, tag = 'internal scratch']
  %s0 = inlined_call_operand.vmem [shape: bf16[2048,128], index: 0, kind: input, shape index: {}]
  %s1 = inlined_call_operand.vmem [shape: f32[1,128], index: 1, kind: input, shape index: {}]
  %s2 = inlined_call_operand.vmem [shape: f32[1,128], index: 2, kind: input, shape index: {}]
  %s3 = inlined_call_operand.hbm [shape: bf16[2048,128], index: 3, kind: output, shape index: {}]
  %s4 = sld [smem:[#allocation0]]
  $region45: #{conv_bn_act.3} parent=0
    _
  %s6 = ssub.s32 1, %s4
  %s7 = scalar_select 0, %s6, %s4
  $region1: #{conv_bn_act.3} parent=0
    #allocation2 [shape = 'u8[524288]{0}', space=vmem, size = 0x80000, scoped, tag = 'output window, operand 0']
    #allocation3 [shape = 's32[2]{0}', space=sflag, size = 0x8, scoped, tag = 'scoped memory for conv_bn_act.3']
    %8 = vsyncpa [#allocation3], 0
    %s9 = scalar_lea.sflag [#allocation3], 1
    %10 = vsyncpa %s9, 0
    loop: start=0, step=1, limit=4
    $region2: #{conv_bn_act.3} parent=1 // loop_pre_header
      _
    $region3: #{conv_bn_act.3} parent=1 // loop_header
      %s12 = sphi 0, %s16
      %p13 = scmp.ge.s32.totalorder %s12, 4
      %s19 = sphi 0, %s31
      %s20 = sphi 0, %s27
      %s21 = sphi 0, %s19
      %s22 = sphi 0, %s20
      %s23 = sphi 0, %s21
      %s24 = sphi 0, %s22
      %s36 = sphi 0, %s38
      %s39 = sphi 0, %s36
      %s40 = sphi 0, %s39
      %s56 = sphi 0, %s40
      %s62 = sphi 0, %s64
      %s65 = sphi 0, %s62
      %s66 = sphi 0, %s65
      %s82 = sphi 0, %s66
      %s88 = sphi 0, %s90
      %s91 = sphi 0, %s88
      %s92 = sphi 0, %s91
      %s108 = sphi 0, %s92
      %s116 = sphi 0, %s118
      %s119 = sphi 0, %s116
      %s120 = sphi 0, %s119
      %s136 = sphi 0, %s120
    $region4: #{conv_bn_act.3} parent=1 // loop_header_branch
      %15 = sbr.rel (%p13) target = $region8
    $region5: #{conv_bn_act.3} parent=1 // loop_body
      %s17 = ssub.s32 %s12, 1
      %s18 = ssub.s32 %s12, 2
      %s25 = sadd.s32 1, %s20
      %p26 = scmp.ge.s32.totalorder %s25, 2
      %s27 = scalar_select %p26, 0, %s25
      %s28 = sadd.s32 1, %s19
      %s29 = scalar_select %p26, %s28, %s19
      %p30 = scmp.ge.s32.totalorder %s29, 1
      %s31 = scalar_select %p30, 0, %s29
      %s32 = ssub.s32 %s20, %s27
      %s33 = ssub.s32 %s19, %s31
      %s34 = sor.u32 %s32, %s33
      %p35 = scmp.eq.s32.totalorder %s34, 0
      %s37 = sadd.s32 %s36, 1
      %s38 = scalar_select %p35, %s36, %s37
      %p41 = pneg %p35
      %p42 = scmp.eq.s32.totalorder %s12, 1
      %p43 = por %p41, %p42
      %p44 = scmp.ne.s32.totalorder %s36, %s39
      %p45 = scmp.eq.s32.totalorder %s12, 0
      %p46 = por %p44, %p45
      %p47 = scmp.ne.s32.totalorder %s36, %s39
      %p48 = scmp.eq.s32.totalorder %s17, 1
      %p49 = por %p47, %p48
      %p50 = scmp.ne.s32.totalorder %s39, %s40
      %p51 = scmp.eq.s32.totalorder %s17, 0
      %p52 = por %p50, %p51
      %p53 = scmp.ne.s32.totalorder %s39, %s40
      %p54 = scmp.eq.s32.totalorder %s18, 1
      %p55 = por %p53, %p54
      %p57 = scmp.ne.s32.totalorder %s40, %s56
      %p58 = scmp.eq.s32.totalorder %s18, 0
      %p59 = por %p57, %p58
      %s60 = ssub.s32 %s19, %s31
      %p61 = scmp.eq.s32.totalorder %s60, 0
      %s63 = sadd.s32 %s62, 1
      %s64 = scalar_select %p61, %s62, %s63
      %p67 = pneg %p61
      %p68 = scmp.eq.s32.totalorder %s12, 1
      %p69 = por %p67, %p68
      %p70 = scmp.ne.s32.totalorder %s62, %s65
      %p71 = scmp.eq.s32.totalorder %s12, 0
      %p72 = por %p70, %p71
      %p73 = scmp.ne.s32.totalorder %s62, %s65
      %p74 = scmp.eq.s32.totalorder %s17, 1
      %p75 = por %p73, %p74
      %p76 = scmp.ne.s32.totalorder %s65, %s66
      %p77 = scmp.eq.s32.totalorder %s17, 0
      %p78 = por %p76, %p77
      %p79 = scmp.ne.s32.totalorder %s65, %s66
      %p80 = scmp.eq.s32.totalorder %s18, 1
      %p81 = por %p79, %p80
      %p83 = scmp.ne.s32.totalorder %s66, %s82
      %p84 = scmp.eq.s32.totalorder %s18, 0
      %p85 = por %p83, %p84
      %s86 = ssub.s32 %s19, %s31
      %p87 = scmp.eq.s32.totalorder %s86, 0
      %s89 = sadd.s32 %s88, 1
      %s90 = scalar_select %p87, %s88, %s89
      %p93 = pneg %p87
      %p94 = scmp.eq.s32.totalorder %s12, 1
      %p95 = por %p93, %p94
      %p96 = scmp.ne.s32.totalorder %s88, %s91
      %p97 = scmp.eq.s32.totalorder %s12, 0
      %p98 = por %p96, %p97
      %p99 = scmp.ne.s32.totalorder %s88, %s91
      %p100 = scmp.eq.s32.totalorder %s17, 1
      %p101 = por %p99, %p100
      %p102 = scmp.ne.s32.totalorder %s91, %s92
      %p103 = scmp.eq.s32.totalorder %s17, 0
      %p104 = por %p102, %p103
      %p105 = scmp.ne.s32.totalorder %s91, %s92
      %p106 = scmp.eq.s32.totalorder %s18, 1
      %p107 = por %p105, %p106
      %p109 = scmp.ne.s32.totalorder %s92, %s108
      %p110 = scmp.eq.s32.totalorder %s18, 0
      %p111 = por %p109, %p110
      %s112 = ssub.s32 %s20, %s27
      %s113 = ssub.s32 %s19, %s31
      %s114 = sor.u32 %s112, %s113
      %p115 = scmp.eq.s32.totalorder %s114, 0
      %s117 = sadd.s32 %s116, 1
      %s118 = scalar_select %p115, %s116, %s117
      %p121 = pneg %p115
      %p122 = scmp.eq.s32.totalorder %s12, 1
      %p123 = por %p121, %p122
      %p124 = scmp.ne.s32.totalorder %s116, %s119
      %p125 = scmp.eq.s32.totalorder %s12, 0
      %p126 = por %p124, %p125
      %p127 = scmp.ne.s32.totalorder %s116, %s119
      %p128 = scmp.eq.s32.totalorder %s17, 1
      %p129 = por %p127, %p128
      %p130 = scmp.ne.s32.totalorder %s119, %s120
      %p131 = scmp.eq.s32.totalorder %s17, 0
      %p132 = por %p130, %p131
      %p133 = scmp.ne.s32.totalorder %s119, %s120
      %p134 = scmp.eq.s32.totalorder %s18, 1
      %p135 = por %p133, %p134
      %p137 = scmp.ne.s32.totalorder %s120, %s136
      %p138 = scmp.eq.s32.totalorder %s18, 0
      %p139 = por %p137, %p138
      %p140 = scmp.le.s32.totalorder 1, %s12
      %p141 = scmp.lt.s32.totalorder %s12, 3
      %p142 = pnand %p140, %p141
      %p143 = pneg %p142
      // Predicated region
      $region9: #{conv_bn_act.3} parent=5 // pred_check
        _
      $region10: #{conv_bn_act.3} parent=5 // pred_check_branch
        %145 = sbr.rel (%p142) target = $region12
      $region11: #{conv_bn_act.3} parent=5 // pred_region
        %s146 = ssub.s32 %s12, 1
        // Predicated region
        $region13: #{conv_bn_act.3} parent=11 // pred_check
          %p147 = pneg %p78
        $region14: #{conv_bn_act.3} parent=11 // pred_check_branch
          %149 = sbr.rel (%p147) target = $region16
        $region15: #{conv_bn_act.3} parent=11 // pred_region
          %p150 = scmp.lt.s32.totalorder %s21, 0
          %s151 = scalar_select %p150, %s21, 0
          %s152 = scalar_lea.vmem %s1, %s151
        $region16: #{conv_bn_act.3} parent=11 // pred_fallthru
          _
        // Predicated region
        $region17: #{conv_bn_act.3} parent=11 // pred_check
          %p153 = pneg %p104
        $region18: #{conv_bn_act.3} parent=11 // pred_check_branch
          %155 = sbr.rel (%p153) target = $region20
        $region19: #{conv_bn_act.3} parent=11 // pred_region
          %p156 = scmp.lt.s32.totalorder %s21, 0
          %s157 = scalar_select %p156, %s21, 0
          %s158 = scalar_lea.vmem %s2, %s157
        $region20: #{conv_bn_act.3} parent=11 // pred_fallthru
          _
      $region12: #{conv_bn_act.3} parent=5 // pred_fallthru
        _
      %p159 = scmp.lt.s32.totalorder %s12, 2
      // Predicated region
      $region21: #{conv_bn_act.3} parent=5 // pred_check
        %p160 = pneg %p159
      $region22: #{conv_bn_act.3} parent=5 // pred_check_branch
        %162 = sbr.rel (%p160) target = $region24
      $region23: #{conv_bn_act.3} parent=5 // pred_region
        // Predicated region
        $region25: #{conv_bn_act.3} parent=23 // pred_check
          %p163 = pneg %p46
        $region26: #{conv_bn_act.3} parent=23 // pred_check_branch
          %165 = sbr.rel (%p163) target = $region28
        $region27: #{conv_bn_act.3} parent=23 // pred_region
          %s166 = smul.u32 128, %s20
          %p167 = scmp.lt.s32.totalorder %s166, 255
          %s168 = scalar_select %p167, %s166, 255
          %p169 = scmp.lt.s32.totalorder %s19, 0
          %s170 = scalar_select %p169, %s19, 0
          %s171 = sadd.s32 %s170, %s168
          %s172 = smul.addr %s171, 4
          %s173 = scalar_lea.vmem %s0, %s172
          %s174 = smul.u32 128, %s20
        $region28: #{conv_bn_act.3} parent=23 // pred_fallthru
          _
      $region24: #{conv_bn_act.3} parent=5 // pred_fallthru
        _
      %p175 = scmp.le.s32.totalorder 1, %s12
      %p176 = scmp.lt.s32.totalorder %s12, 3
      %p177 = pnand %p175, %p176
      %p178 = pneg %p177
      // Predicated region
      $region29: #{conv_bn_act.3} parent=5 // pred_check
        _
      $region30: #{conv_bn_act.3} parent=5 // pred_check_branch
        %180 = sbr.rel (%p177) target = $region32
      $region31: #{conv_bn_act.3} parent=5 // pred_region
        %s181 = ssub.s32 %s12, 1
        %s182 = smul.u32 128, %s22
        %p183 = scmp.lt.s32.totalorder %s182, 255
        %s184 = scalar_select %p183, %s182, 255
        %p185 = scmp.lt.s32.totalorder %s21, 0
        %s186 = scalar_select %p185, %s21, 0
        %s187 = sadd.s32 %s186, %s184
        %s188 = smul.addr %s187, 4
        %s189 = scalar_lea.vmem %s0, %s188
        %p190 = pneg %p52
        %p191 = pneg %p49
        %p192 = scmp.lt.s32.totalorder %s21, 0
        %s193 = scalar_select %p192, %s21, 0
        %s194 = scalar_lea.vmem %s1, %s193
        %p195 = pneg %p78
        %p196 = pneg %p75
        %p197 = scmp.lt.s32.totalorder %s21, 0
        %s198 = scalar_select %p197, %s21, 0
        %s199 = scalar_lea.vmem %s2, %s198
        %p200 = pneg %p104
        %p201 = pneg %p101
        %p202 = pneg %p132
        %p203 = pneg %p129
        %s204 = sand.u32 %s119, 1
        %s205 = scalar_lea.sflag [#allocation3], %s204
        %s206 = sand.u32 %s119, 1
        %s207 = smul.addr %s206, 512
        %s208 = scalar_lea.vmem [#allocation2], %s207
        %s209 = smul.u32 128, %s22
        %p210 = scmp.lt.s32.totalorder %s209, 255
        %s211 = scalar_select %p210, %s209, 255
        %p212 = scmp.lt.s32.totalorder %s21, 0
        %s213 = scalar_select %p212, %s21, 0
        %s214 = sadd.s32 %s213, %s211
        %s215 = smul.addr %s214, 4
        %s216 = scalar_lea.vmem %s0, %s215
        %s217 = smul.u32 128, %s22
        %p218 = scmp.lt.s32.totalorder %s21, 0
        %s219 = scalar_select %p218, %s21, 0
        %s220 = scalar_lea.vmem %s1, %s219
        %p221 = scmp.lt.s32.totalorder %s21, 0
        %s222 = scalar_select %p221, %s21, 0
        %s223 = scalar_lea.vmem %s2, %s222
        %s224 = smul.u32 128, %s22
        %v225 = vld [vmem:[%s216] sm:$0xf]
        %v226 = vld [vmem:[%s216 + $0x4] sm:$0xf]
        %v227 = vld [vmem:[%s216 + $0x8] sm:$0xf]
        %v228 = vld [vmem:[%s216 + $0xc] sm:$0xf]
        %v229 = vld [vmem:[%s216 + $0x10] sm:$0xf]
        %v230 = vld [vmem:[%s216 + $0x14] sm:$0xf]
        %v231 = vld [vmem:[%s216 + $0x18] sm:$0xf]
        %v232 = vld [vmem:[%s216 + $0x1c] sm:$0xf]
        %v233 = vld [vmem:[%s216 + $0x20] sm:$0xf]
        %v234 = vld [vmem:[%s216 + $0x24] sm:$0xf]
        %v235 = vld [vmem:[%s216 + $0x28] sm:$0xf]
        %v236 = vld [vmem:[%s216 + $0x2c] sm:$0xf]
        %v237 = vld [vmem:[%s216 + $0x30] sm:$0xf]
        %v238 = vld [vmem:[%s216 + $0x34] sm:$0xf]
        %v239 = vld [vmem:[%s216 + $0x38] sm:$0xf]
        %v240 = vld [vmem:[%s216 + $0x3c] sm:$0xf]
        %v241 = vld [vmem:[%s216 + $0x40] sm:$0xf]
        %v242 = vld [vmem:[%s216 + $0x44] sm:$0xf]
        %v243 = vld [vmem:[%s216 + $0x48] sm:$0xf]
        %v244 = vld [vmem:[%s216 + $0x4c] sm:$0xf]
        %v245 = vld [vmem:[%s216 + $0x50] sm:$0xf]
        %v246 = vld [vmem:[%s216 + $0x54] sm:$0xf]
        %v247 = vld [vmem:[%s216 + $0x58] sm:$0xf]
        %v248 = vld [vmem:[%s216 + $0x5c] sm:$0xf]
        %v249 = vld [vmem:[%s216 + $0x60] sm:$0xf]
        %v250 = vld [vmem:[%s216 + $0x64] sm:$0xf]
        %v251 = vld [vmem:[%s216 + $0x68] sm:$0xf]
        %v252 = vld [vmem:[%s216 + $0x6c] sm:$0xf]
        %v253 = vld [vmem:[%s216 + $0x70] sm:$0xf]
        %v254 = vld [vmem:[%s216 + $0x74] sm:$0xf]
        %v255 = vld [vmem:[%s216 + $0x78] sm:$0xf]
        %v256 = vld [vmem:[%s216 + $0x7c] sm:$0xf]
        %v257 = vld [vmem:[%s216 + $0x80] sm:$0xf]
        %v258 = vld [vmem:[%s216 + $0x84] sm:$0xf]
        %v259 = vld [vmem:[%s216 + $0x88] sm:$0xf]
        %v260 = vld [vmem:[%s216 + $0x8c] sm:$0xf]
        %v261 = vld [vmem:[%s216 + $0x90] sm:$0xf]
        %v262 = vld [vmem:[%s216 + $0x94] sm:$0xf]
        %v263 = vld [vmem:[%s216 + $0x98] sm:$0xf]
        %v264 = vld [vmem:[%s216 + $0x9c] sm:$0xf]
        %v265 = vld [vmem:[%s216 + $0xa0] sm:$0xf]
        %v266 = vld [vmem:[%s216 + $0xa4] sm:$0xf]
        %v267 = vld [vmem:[%s216 + $0xa8] sm:$0xf]
        %v268 = vld [vmem:[%s216 + $0xac] sm:$0xf]
        %v269 = vld [vmem:[%s216 + $0xb0] sm:$0xf]
        %v270 = vld [vmem:[%s216 + $0xb4] sm:$0xf]
        %v271 = vld [vmem:[%s216 + $0xb8] sm:$0xf]
        %v272 = vld [vmem:[%s216 + $0xbc] sm:$0xf]
        %v273 = vld [vmem:[%s216 + $0xc0] sm:$0xf]
        %v274 = vld [vmem:[%s216 + $0xc4] sm:$0xf]
        %v275 = vld [vmem:[%s216 + $0xc8] sm:$0xf]
        %v276 = vld [vmem:[%s216 + $0xcc] sm:$0xf]
        %v277 = vld [vmem:[%s216 + $0xd0] sm:$0xf]
        %v278 = vld [vmem:[%s216 + $0xd4] sm:$0xf]
        %v279 = vld [vmem:[%s216 + $0xd8] sm:$0xf]
        %v280 = vld [vmem:[%s216 + $0xdc] sm:$0xf]
        %v281 = vld [vmem:[%s216 + $0xe0] sm:$0xf]
        %v282 = vld [vmem:[%s216 + $0xe4] sm:$0xf]
        %v283 = vld [vmem:[%s216 + $0xe8] sm:$0xf]
        %v284 = vld [vmem:[%s216 + $0xec] sm:$0xf]
        %v285 = vld [vmem:[%s216 + $0xf0] sm:$0xf]
        %v286 = vld [vmem:[%s216 + $0xf4] sm:$0xf]
        %v287 = vld [vmem:[%s216 + $0xf8] sm:$0xf]
        %v288 = vld [vmem:[%s216 + $0xfc] sm:$0xf]
        %v289 = vld [vmem:[%s216 + $0x100] sm:$0xf]
        %v290 = vld [vmem:[%s216 + $0x104] sm:$0xf]
        %v291 = vld [vmem:[%s216 + $0x108] sm:$0xf]
        %v292 = vld [vmem:[%s216 + $0x10c] sm:$0xf]
        %v293 = vld [vmem:[%s216 + $0x110] sm:$0xf]
        %v294 = vld [vmem:[%s216 + $0x114] sm:$0xf]
        %v295 = vld [vmem:[%s216 + $0x118] sm:$0xf]
        %v296 = vld [vmem:[%s216 + $0x11c] sm:$0xf]
        %v297 = vld [vmem:[%s216 + $0x120] sm:$0xf]
        %v298 = vld [vmem:[%s216 + $0x124] sm:$0xf]
        %v299 = vld [vmem:[%s216 + $0x128] sm:$0xf]
        %v300 = vld [vmem:[%s216 + $0x12c] sm:$0xf]
        %v301 = vld [vmem:[%s216 + $0x130] sm:$0xf]
        %v302 = vld [vmem:[%s216 + $0x134] sm:$0xf]
        %v303 = vld [vmem:[%s216 + $0x138] sm:$0xf]
        %v304 = vld [vmem:[%s216 + $0x13c] sm:$0xf]
        %v305 = vld [vmem:[%s216 + $0x140] sm:$0xf]
        %v306 = vld [vmem:[%s216 + $0x144] sm:$0xf]
        %v307 = vld [vmem:[%s216 + $0x148] sm:$0xf]
        %v308 = vld [vmem:[%s216 + $0x14c] sm:$0xf]
        %v309 = vld [vmem:[%s216 + $0x150] sm:$0xf]
        %v310 = vld [vmem:[%s216 + $0x154] sm:$0xf]
        %v311 = vld [vmem:[%s216 + $0x158] sm:$0xf]
        %v312 = vld [vmem:[%s216 + $0x15c] sm:$0xf]
        %v313 = vld [vmem:[%s216 + $0x160] sm:$0xf]
        %v314 = vld [vmem:[%s216 + $0x164] sm:$0xf]
        %v315 = vld [vmem:[%s216 + $0x168] sm:$0xf]
        %v316 = vld [vmem:[%s216 + $0x16c] sm:$0xf]
        %v317 = vld [vmem:[%s216 + $0x170] sm:$0xf]
        %v318 = vld [vmem:[%s216 + $0x174] sm:$0xf]
        %v319 = vld [vmem:[%s216 + $0x178] sm:$0xf]
        %v320 = vld [vmem:[%s216 + $0x17c] sm:$0xf]
        %v321 = vld [vmem:[%s216 + $0x180] sm:$0xf]
        %v322 = vld [vmem:[%s216 + $0x184] sm:$0xf]
        %v323 = vld [vmem:[%s216 + $0x188] sm:$0xf]
        %v324 = vld [vmem:[%s216 + $0x18c] sm:$0xf]
        %v325 = vld [vmem:[%s216 + $0x190] sm:$0xf]
        %v326 = vld [vmem:[%s216 + $0x194] sm:$0xf]
        %v327 = vld [vmem:[%s216 + $0x198] sm:$0xf]
        %v328 = vld [vmem:[%s216 + $0x19c] sm:$0xf]
        %v329 = vld [vmem:[%s216 + $0x1a0] sm:$0xf]
        %v330 = vld [vmem:[%s216 + $0x1a4] sm:$0xf]
        %v331 = vld [vmem:[%s216 + $0x1a8] sm:$0xf]
        %v332 = vld [vmem:[%s216 + $0x1ac] sm:$0xf]
        %v333 = vld [vmem:[%s216 + $0x1b0] sm:$0xf]
        %v334 = vld [vmem:[%s216 + $0x1b4] sm:$0xf]
        %v335 = vld [vmem:[%s216 + $0x1b8] sm:$0xf]
        %v336 = vld [vmem:[%s216 + $0x1bc] sm:$0xf]
        %v337 = vld [vmem:[%s216 + $0x1c0] sm:$0xf]
        %v338 = vld [vmem:[%s216 + $0x1c4] sm:$0xf]
        %v339 = vld [vmem:[%s216 + $0x1c8] sm:$0xf]
        %v340 = vld [vmem:[%s216 + $0x1cc] sm:$0xf]
        %v341 = vld [vmem:[%s216 + $0x1d0] sm:$0xf]
        %v342 = vld [vmem:[%s216 + $0x1d4] sm:$0xf]
        %v343 = vld [vmem:[%s216 + $0x1d8] sm:$0xf]
        %v344 = vld [vmem:[%s216 + $0x1dc] sm:$0xf]
        %v345 = vld [vmem:[%s216 + $0x1e0] sm:$0xf]
        %v346 = vld [vmem:[%s216 + $0x1e4] sm:$0xf]
        %v347 = vld [vmem:[%s216 + $0x1e8] sm:$0xf]
        %v348 = vld [vmem:[%s216 + $0x1ec] sm:$0xf]
        %v349 = vld [vmem:[%s216 + $0x1f0] sm:$0xf]
        %v350 = vld [vmem:[%s216 + $0x1f4] sm:$0xf]
        %v351 = vld [vmem:[%s216 + $0x1f8] sm:$0xf]
        %v352 = vld [vmem:[%s216 + $0x1fc] sm:$0xf]
        %v353 = vunpack.c.l.bf16 %v225
        %v354 = vunpack.c.l.bf16 %v226
        %v355 = vunpack.c.l.bf16 %v227
        %v356 = vunpack.c.l.bf16 %v228
        %v357 = vunpack.c.l.bf16 %v229
        %v358 = vunpack.c.l.bf16 %v230
        %v359 = vunpack.c.l.bf16 %v231
        %v360 = vunpack.c.l.bf16 %v232
        %v361 = vunpack.c.l.bf16 %v233
        %v362 = vunpack.c.l.bf16 %v234
        %v363 = vunpack.c.l.bf16 %v235
        %v364 = vunpack.c.l.bf16 %v236
        %v365 = vunpack.c.l.bf16 %v237
        %v366 = vunpack.c.l.bf16 %v238
        %v367 = vunpack.c.l.bf16 %v239
        %v368 = vunpack.c.l.bf16 %v240
        %v369 = vunpack.c.l.bf16 %v241
        %v370 = vunpack.c.l.bf16 %v242
        %v371 = vunpack.c.l.bf16 %v243
        %v372 = vunpack.c.l.bf16 %v244
        %v373 = vunpack.c.l.bf16 %v245
        %v374 = vunpack.c.l.bf16 %v246
        %v375 = vunpack.c.l.bf16 %v247
        %v376 = vunpack.c.l.bf16 %v248
        %v377 = vunpack.c.l.bf16 %v249
        %v378 = vunpack.c.l.bf16 %v250
        %v379 = vunpack.c.l.bf16 %v251
        %v380 = vunpack.c.l.bf16 %v252
        %v381 = vunpack.c.l.bf16 %v253
        %v382 = vunpack.c.l.bf16 %v254
        %v383 = vunpack.c.l.bf16 %v255
        %v384 = vunpack.c.l.bf16 %v256
        %v385 = vunpack.c.l.bf16 %v257
        %v386 = vunpack.c.l.bf16 %v258
        %v387 = vunpack.c.l.bf16 %v259
        %v388 = vunpack.c.l.bf16 %v260
        %v389 = vunpack.c.l.bf16 %v261
        %v390 = vunpack.c.l.bf16 %v262
        %v391 = vunpack.c.l.bf16 %v263
        %v392 = vunpack.c.l.bf16 %v264
        %v393 = vunpack.c.l.bf16 %v265
        %v394 = vunpack.c.l.bf16 %v266
        %v395 = vunpack.c.l.bf16 %v267
        %v396 = vunpack.c.l.bf16 %v268
        %v397 = vunpack.c.l.bf16 %v269
        %v398 = vunpack.c.l.bf16 %v270
        %v399 = vunpack.c.l.bf16 %v271
        %v400 = vunpack.c.l.bf16 %v272
        %v401 = vunpack.c.l.bf16 %v273
        %v402 = vunpack.c.l.bf16 %v274
        %v403 = vunpack.c.l.bf16 %v275
        %v404 = vunpack.c.l.bf16 %v276
        %v405 = vunpack.c.l.bf16 %v277
        %v406 = vunpack.c.l.bf16 %v278
        %v407 = vunpack.c.l.bf16 %v279
        %v408 = vunpack.c.l.bf16 %v280
        %v409 = vunpack.c.l.bf16 %v281
        %v410 = vunpack.c.l.bf16 %v282
        %v411 = vunpack.c.l.bf16 %v283
        %v412 = vunpack.c.l.bf16 %v284
        %v413 = vunpack.c.l.bf16 %v285
        %v414 = vunpack.c.l.bf16 %v286
        %v415 = vunpack.c.l.bf16 %v287
        %v416 = vunpack.c.l.bf16 %v288
        %v417 = vunpack.c.l.bf16 %v289
        %v418 = vunpack.c.l.bf16 %v290
        %v419 = vunpack.c.l.bf16 %v291
        %v420 = vunpack.c.l.bf16 %v292
        %v421 = vunpack.c.l.bf16 %v293
        %v422 = vunpack.c.l.bf16 %v294
        %v423 = vunpack.c.l.bf16 %v295
        %v424 = vunpack.c.l.bf16 %v296
        %v425 = vunpack.c.l.bf16 %v297
        %v426 = vunpack.c.l.bf16 %v298
        %v427 = vunpack.c.l.bf16 %v299
        %v428 = vunpack.c.l.bf16 %v300
        %v429 = vunpack.c.l.bf16 %v301
        %v430 = vunpack.c.l.bf16 %v302
        %v431 = vunpack.c.l.bf16 %v303
        %v432 = vunpack.c.l.bf16 %v304
        %v433 = vunpack.c.l.bf16 %v305
        %v434 = vunpack.c.l.bf16 %v306
        %v435 = vunpack.c.l.bf16 %v307
        %v436 = vunpack.c.l.bf16 %v308
        %v437 = vunpack.c.l.bf16 %v309
        %v438 = vunpack.c.l.bf16 %v310
        %v439 = vunpack.c.l.bf16 %v311
        %v440 = vunpack.c.l.bf16 %v312
        %v441 = vunpack.c.l.bf16 %v313
        %v442 = vunpack.c.l.bf16 %v314
        %v443 = vunpack.c.l.bf16 %v315
        %v444 = vunpack.c.l.bf16 %v316
        %v445 = vunpack.c.l.bf16 %v317
        %v446 = vunpack.c.l.bf16 %v318
        %v447 = vunpack.c.l.bf16 %v319
        %v448 = vunpack.c.l.bf16 %v320
        %v449 = vunpack.c.l.bf16 %v321
        %v450 = vunpack.c.l.bf16 %v322
        %v451 = vunpack.c.l.bf16 %v323
        %v452 = vunpack.c.l.bf16 %v324
        %v453 = vunpack.c.l.bf16 %v325
        %v454 = vunpack.c.l.bf16 %v326
        %v455 = vunpack.c.l.bf16 %v327
        %v456 = vunpack.c.l.bf16 %v328
        %v457 = vunpack.c.l.bf16 %v329
        %v458 = vunpack.c.l.bf16 %v330
        %v459 = vunpack.c.l.bf16 %v331
        %v460 = vunpack.c.l.bf16 %v332
        %v461 = vunpack.c.l.bf16 %v333
        %v462 = vunpack.c.l.bf16 %v334
        %v463 = vunpack.c.l.bf16 %v335
        %v464 = vunpack.c.l.bf16 %v336
        %v465 = vunpack.c.l.bf16 %v337
        %v466 = vunpack.c.l.bf16 %v338
        %v467 = vunpack.c.l.bf16 %v339
        %v468 = vunpack.c.l.bf16 %v340
        %v469 = vunpack.c.l.bf16 %v341
        %v470 = vunpack.c.l.bf16 %v342
        %v471 = vunpack.c.l.bf16 %v343
        %v472 = vunpack.c.l.bf16 %v344
        %v473 = vunpack.c.l.bf16 %v345
        %v474 = vunpack.c.l.bf16 %v346
        %v475 = vunpack.c.l.bf16 %v347
        %v476 = vunpack.c.l.bf16 %v348
        %v477 = vunpack.c.l.bf16 %v349
        %v478 = vunpack.c.l.bf16 %v350
        %v479 = vunpack.c.l.bf16 %v351
        %v480 = vunpack.c.l.bf16 %v352
        %v481 = vld [vmem:[%s220] sm:$0x1]
        %v483 = vlaneseq
        %v484 = vshrl.u32 %v483, 7
        %v485 = vsub.s32 0, %v484
        %v486 = vrot.slane %v481, %v485
        %v488 = vmul.f32 %v353, %v486
        %v489 = vmul.f32 %v354, %v486
        %v490 = vmul.f32 %v355, %v486
        %v491 = vmul.f32 %v356, %v486
        %v492 = vmul.f32 %v357, %v486
        %v493 = vmul.f32 %v358, %v486
        %v494 = vmul.f32 %v359, %v486
        %v495 = vmul.f32 %v360, %v486
        %v496 = vmul.f32 %v361, %v486
        %v497 = vmul.f32 %v362, %v486
        %v498 = vmul.f32 %v363, %v486
        %v499 = vmul.f32 %v364, %v486
        %v500 = vmul.f32 %v365, %v486
        %v501 = vmul.f32 %v366, %v486
        %v502 = vmul.f32 %v367, %v486
        %v503 = vmul.f32 %v368, %v486
        %v504 = vmul.f32 %v369, %v486
        %v505 = vmul.f32 %v370, %v486
        %v506 = vmul.f32 %v371, %v486
        %v507 = vmul.f32 %v372, %v486
        %v508 = vmul.f32 %v373, %v486
        %v509 = vmul.f32 %v374, %v486
        %v510 = vmul.f32 %v375, %v486
        %v511 = vmul.f32 %v376, %v486
        %v512 = vmul.f32 %v377, %v486
        %v513 = vmul.f32 %v378, %v486
        %v514 = vmul.f32 %v379, %v486
        %v515 = vmul.f32 %v380, %v486
        %v516 = vmul.f32 %v381, %v486
        %v517 = vmul.f32 %v382, %v486
        %v518 = vmul.f32 %v383, %v486
        %v519 = vmul.f32 %v384, %v486
        %v520 = vmul.f32 %v385, %v486
        %v521 = vmul.f32 %v386, %v486
        %v522 = vmul.f32 %v387, %v486
        %v523 = vmul.f32 %v388, %v486
        %v524 = vmul.f32 %v389, %v486
        %v525 = vmul.f32 %v390, %v486
        %v526 = vmul.f32 %v391, %v486
        %v527 = vmul.f32 %v392, %v486
        %v528 = vmul.f32 %v393, %v486
        %v529 = vmul.f32 %v394, %v486
        %v530 = vmul.f32 %v395, %v486
        %v531 = vmul.f32 %v396, %v486
        %v532 = vmul.f32 %v397, %v486
        %v533 = vmul.f32 %v398, %v486
        %v534 = vmul.f32 %v399, %v486
        %v535 = vmul.f32 %v400, %v486
        %v536 = vmul.f32 %v401, %v486
        %v537 = vmul.f32 %v402, %v486
        %v538 = vmul.f32 %v403, %v486
        %v539 = vmul.f32 %v404, %v486
        %v540 = vmul.f32 %v405, %v486
        %v541 = vmul.f32 %v406, %v486
        %v542 = vmul.f32 %v407, %v486
        %v543 = vmul.f32 %v408, %v486
        %v544 = vmul.f32 %v409, %v486
        %v545 = vmul.f32 %v410, %v486
        %v546 = vmul.f32 %v411, %v486
        %v547 = vmul.f32 %v412, %v486
        %v548 = vmul.f32 %v413, %v486
        %v549 = vmul.f32 %v414, %v486
        %v550 = vmul.f32 %v415, %v486
        %v551 = vmul.f32 %v416, %v486
        %v552 = vmul.f32 %v417, %v486
        %v553 = vmul.f32 %v418, %v486
        %v554 = vmul.f32 %v419, %v486
        %v555 = vmul.f32 %v420, %v486
        %v556 = vmul.f32 %v421, %v486
        %v557 = vmul.f32 %v422, %v486
        %v558 = vmul.f32 %v423, %v486
        %v559 = vmul.f32 %v424, %v486
        %v560 = vmul.f32 %v425, %v486
        %v561 = vmul.f32 %v426, %v486
        %v562 = vmul.f32 %v427, %v486
        %v563 = vmul.f32 %v428, %v486
        %v564 = vmul.f32 %v429, %v486
        %v565 = vmul.f32 %v430, %v486
        %v566 = vmul.f32 %v431, %v486
        %v567 = vmul.f32 %v432, %v486
        %v568 = vmul.f32 %v433, %v486
        %v569 = vmul.f32 %v434, %v486
        %v570 = vmul.f32 %v435, %v486
        %v571 = vmul.f32 %v436, %v486
        %v572 = vmul.f32 %v437, %v486
        %v573 = vmul.f32 %v438, %v486
        %v574 = vmul.f32 %v439, %v486
        %v575 = vmul.f32 %v440, %v486
        %v576 = vmul.f32 %v441, %v486
        %v577 = vmul.f32 %v442, %v486
        %v578 = vmul.f32 %v443, %v486
        %v579 = vmul.f32 %v444, %v486
        %v580 = vmul.f32 %v445, %v486
        %v581 = vmul.f32 %v446, %v486
        %v582 = vmul.f32 %v447, %v486
        %v583 = vmul.f32 %v448, %v486
        %v584 = vmul.f32 %v449, %v486
        %v585 = vmul.f32 %v450, %v486
        %v586 = vmul.f32 %v451, %v486
        %v587 = vmul.f32 %v452, %v486
        %v588 = vmul.f32 %v453, %v486
        %v589 = vmul.f32 %v454, %v486
        %v590 = vmul.f32 %v455, %v486
        %v591 = vmul.f32 %v456, %v486
        %v592 = vmul.f32 %v457, %v486
        %v593 = vmul.f32 %v458, %v486
        %v594 = vmul.f32 %v459, %v486
        %v595 = vmul.f32 %v460, %v486
        %v596 = vmul.f32 %v461, %v486
        %v597 = vmul.f32 %v462, %v486
        %v598 = vmul.f32 %v463, %v486
        %v599 = vmul.f32 %v464, %v486
        %v600 = vmul.f32 %v465, %v486
        %v601 = vmul.f32 %v466, %v486
        %v602 = vmul.f32 %v467, %v486
        %v603 = vmul.f32 %v468, %v486
        %v604 = vmul.f32 %v469, %v486
        %v605 = vmul.f32 %v470, %v486
        %v606 = vmul.f32 %v471, %v486
        %v607 = vmul.f32 %v472, %v486
        %v608 = vmul.f32 %v473, %v486
        %v609 = vmul.f32 %v474, %v486
        %v610 = vmul.f32 %v475, %v486
        %v611 = vmul.f32 %v476, %v486
        %v612 = vmul.f32 %v477, %v486
        %v613 = vmul.f32 %v478, %v486
        %v614 = vmul.f32 %v479, %v486
        %v615 = vmul.f32 %v480, %v486
        %v616 = vld [vmem:[%s223] sm:$0x1]
        %v618 = vlaneseq
        %v619 = vshrl.u32 %v618, 7
        %v620 = vsub.s32 0, %v619
        %v621 = vrot.slane %v616, %v620
        %v623 = vadd.f32 %v488, %v621
        %v624 = vadd.f32 %v489, %v621
        %v625 = vadd.f32 %v490, %v621
        %v626 = vadd.f32 %v491, %v621
        %v627 = vadd.f32 %v492, %v621
        %v628 = vadd.f32 %v493, %v621
        %v629 = vadd.f32 %v494, %v621
        %v630 = vadd.f32 %v495, %v621
        %v631 = vadd.f32 %v496, %v621
        %v632 = vadd.f32 %v497, %v621
        %v633 = vadd.f32 %v498, %v621
        %v634 = vadd.f32 %v499, %v621
        %v635 = vadd.f32 %v500, %v621
        %v636 = vadd.f32 %v501, %v621
        %v637 = vadd.f32 %v502, %v621
        %v638 = vadd.f32 %v503, %v621
        %v639 = vadd.f32 %v504, %v621
        %v640 = vadd.f32 %v505, %v621
        %v641 = vadd.f32 %v506, %v621
        %v642 = vadd.f32 %v507, %v621
        %v643 = vadd.f32 %v508, %v621
        %v644 = vadd.f32 %v509, %v621
        %v645 = vadd.f32 %v510, %v621
        %v646 = vadd.f32 %v511, %v621
        %v647 = vadd.f32 %v512, %v621
        %v648 = vadd.f32 %v513, %v621
        %v649 = vadd.f32 %v514, %v621
        %v650 = vadd.f32 %v515, %v621
        %v651 = vadd.f32 %v516, %v621
        %v652 = vadd.f32 %v517, %v621
        %v653 = vadd.f32 %v518, %v621
        %v654 = vadd.f32 %v519, %v621
        %v655 = vadd.f32 %v520, %v621
        %v656 = vadd.f32 %v521, %v621
        %v657 = vadd.f32 %v522, %v621
        %v658 = vadd.f32 %v523, %v621
        %v659 = vadd.f32 %v524, %v621
        %v660 = vadd.f32 %v525, %v621
        %v661 = vadd.f32 %v526, %v621
        %v662 = vadd.f32 %v527, %v621
        %v663 = vadd.f32 %v528, %v621
        %v664 = vadd.f32 %v529, %v621
        %v665 = vadd.f32 %v530, %v621
        %v666 = vadd.f32 %v531, %v621
        %v667 = vadd.f32 %v532, %v621
        %v668 = vadd.f32 %v533, %v621
        %v669 = vadd.f32 %v534, %v621
        %v670 = vadd.f32 %v535, %v621
        %v671 = vadd.f32 %v536, %v621
        %v672 = vadd.f32 %v537, %v621
        %v673 = vadd.f32 %v538, %v621
        %v674 = vadd.f32 %v539, %v621
        %v675 = vadd.f32 %v540, %v621
        %v676 = vadd.f32 %v541, %v621
        %v677 = vadd.f32 %v542, %v621
        %v678 = vadd.f32 %v543, %v621
        %v679 = vadd.f32 %v544, %v621
        %v680 = vadd.f32 %v545, %v621
        %v681 = vadd.f32 %v546, %v621
        %v682 = vadd.f32 %v547, %v621
        %v683 = vadd.f32 %v548, %v621
        %v684 = vadd.f32 %v549, %v621
        %v685 = vadd.f32 %v550, %v621
        %v686 = vadd.f32 %v551, %v621
        %v687 = vadd.f32 %v552, %v621
        %v688 = vadd.f32 %v553, %v621
        %v689 = vadd.f32 %v554, %v621
        %v690 = vadd.f32 %v555, %v621
        %v691 = vadd.f32 %v556, %v621
        %v692 = vadd.f32 %v557, %v621
        %v693 = vadd.f32 %v558, %v621
        %v694 = vadd.f32 %v559, %v621
        %v695 = vadd.f32 %v560, %v621
        %v696 = vadd.f32 %v561, %v621
        %v697 = vadd.f32 %v562, %v621
        %v698 = vadd.f32 %v563, %v621
        %v699 = vadd.f32 %v564, %v621
        %v700 = vadd.f32 %v565, %v621
        %v701 = vadd.f32 %v566, %v621
        %v702 = vadd.f32 %v567, %v621
        %v703 = vadd.f32 %v568, %v621
        %v704 = vadd.f32 %v569, %v621
        %v705 = vadd.f32 %v570, %v621
        %v706 = vadd.f32 %v571, %v621
        %v707 = vadd.f32 %v572, %v621
        %v708 = vadd.f32 %v573, %v621
        %v709 = vadd.f32 %v574, %v621
        %v710 = vadd.f32 %v575, %v621
        %v711 = vadd.f32 %v576, %v621
        %v712 = vadd.f32 %v577, %v621
        %v713 = vadd.f32 %v578, %v621
        %v714 = vadd.f32 %v579, %v621
        %v715 = vadd.f32 %v580, %v621
        %v716 = vadd.f32 %v581, %v621
        %v717 = vadd.f32 %v582, %v621
        %v718 = vadd.f32 %v583, %v621
        %v719 = vadd.f32 %v584, %v621
        %v720 = vadd.f32 %v585, %v621
        %v721 = vadd.f32 %v586, %v621
        %v722 = vadd.f32 %v587, %v621
        %v723 = vadd.f32 %v588, %v621
        %v724 = vadd.f32 %v589, %v621
        %v725 = vadd.f32 %v590, %v621
        %v726 = vadd.f32 %v591, %v621
        %v727 = vadd.f32 %v592, %v621
        %v728 = vadd.f32 %v593, %v621
        %v729 = vadd.f32 %v594, %v621
        %v730 = vadd.f32 %v595, %v621
        %v731 = vadd.f32 %v596, %v621
        %v732 = vadd.f32 %v597, %v621
        %v733 = vadd.f32 %v598, %v621
        %v734 = vadd.f32 %v599, %v621
        %v735 = vadd.f32 %v600, %v621
        %v736 = vadd.f32 %v601, %v621
        %v737 = vadd.f32 %v602, %v621
        %v738 = vadd.f32 %v603, %v621
        %v739 = vadd.f32 %v604, %v621
        %v740 = vadd.f32 %v605, %v621
        %v741 = vadd.f32 %v606, %v621
        %v742 = vadd.f32 %v607, %v621
        %v743 = vadd.f32 %v608, %v621
        %v744 = vadd.f32 %v609, %v621
        %v745 = vadd.f32 %v610, %v621
        %v746 = vadd.f32 %v611, %v621
        %v747 = vadd.f32 %v612, %v621
        %v748 = vadd.f32 %v613, %v621
        %v749 = vadd.f32 %v614, %v621
        %v750 = vadd.f32 %v615, %v621
        %v751 = vmax.f32 %v623, 0.0
        %v752 = vmax.f32 %v624, 0.0
        %v753 = vmax.f32 %v625, 0.0
        %v754 = vmax.f32 %v626, 0.0
        %v755 = vmax.f32 %v627, 0.0
        %v756 = vmax.f32 %v628, 0.0
        %v757 = vmax.f32 %v629, 0.0
        %v758 = vmax.f32 %v630, 0.0
        %v759 = vmax.f32 %v631, 0.0
        %v760 = vmax.f32 %v632, 0.0
        %v761 = vmax.f32 %v633, 0.0
        %v762 = vmax.f32 %v634, 0.0
        %v763 = vmax.f32 %v635, 0.0
        %v764 = vmax.f32 %v636, 0.0
        %v765 = vmax.f32 %v637, 0.0
        %v766 = vmax.f32 %v638, 0.0
        %v767 = vmax.f32 %v639, 0.0
        %v768 = vmax.f32 %v640, 0.0
        %v769 = vmax.f32 %v641, 0.0
        %v770 = vmax.f32 %v642, 0.0
        %v771 = vmax.f32 %v643, 0.0
        %v772 = vmax.f32 %v644, 0.0
        %v773 = vmax.f32 %v645, 0.0
        %v774 = vmax.f32 %v646, 0.0
        %v775 = vmax.f32 %v647, 0.0
        %v776 = vmax.f32 %v648, 0.0
        %v777 = vmax.f32 %v649, 0.0
        %v778 = vmax.f32 %v650, 0.0
        %v779 = vmax.f32 %v651, 0.0
        %v780 = vmax.f32 %v652, 0.0
        %v781 = vmax.f32 %v653, 0.0
        %v782 = vmax.f32 %v654, 0.0
        %v783 = vmax.f32 %v655, 0.0
        %v784 = vmax.f32 %v656, 0.0
        %v785 = vmax.f32 %v657, 0.0
        %v786 = vmax.f32 %v658, 0.0
        %v787 = vmax.f32 %v659, 0.0
        %v788 = vmax.f32 %v660, 0.0
        %v789 = vmax.f32 %v661, 0.0
        %v790 = vmax.f32 %v662, 0.0
        %v791 = vmax.f32 %v663, 0.0
        %v792 = vmax.f32 %v664, 0.0
        %v793 = vmax.f32 %v665, 0.0
        %v794 = vmax.f32 %v666, 0.0
        %v795 = vmax.f32 %v667, 0.0
        %v796 = vmax.f32 %v668, 0.0
        %v797 = vmax.f32 %v669, 0.0
        %v798 = vmax.f32 %v670, 0.0
        %v799 = vmax.f32 %v671, 0.0
        %v800 = vmax.f32 %v672, 0.0
        %v801 = vmax.f32 %v673, 0.0
        %v802 = vmax.f32 %v674, 0.0
        %v803 = vmax.f32 %v675, 0.0
        %v804 = vmax.f32 %v676, 0.0
        %v805 = vmax.f32 %v677, 0.0
        %v806 = vmax.f32 %v678, 0.0
        %v807 = vmax.f32 %v679, 0.0
        %v808 = vmax.f32 %v680, 0.0
        %v809 = vmax.f32 %v681, 0.0
        %v810 = vmax.f32 %v682, 0.0
        %v811 = vmax.f32 %v683, 0.0
        %v812 = vmax.f32 %v684, 0.0
        %v813 = vmax.f32 %v685, 0.0
        %v814 = vmax.f32 %v686, 0.0
        %v815 = vmax.f32 %v687, 0.0
        %v816 = vmax.f32 %v688, 0.0
        %v817 = vmax.f32 %v689, 0.0
        %v818 = vmax.f32 %v690, 0.0
        %v819 = vmax.f32 %v691, 0.0
        %v820 = vmax.f32 %v692, 0.0
        %v821 = vmax.f32 %v693, 0.0
        %v822 = vmax.f32 %v694, 0.0
        %v823 = vmax.f32 %v695, 0.0
        %v824 = vmax.f32 %v696, 0.0
        %v825 = vmax.f32 %v697, 0.0
        %v826 = vmax.f32 %v698, 0.0
        %v827 = vmax.f32 %v699, 0.0
        %v828 = vmax.f32 %v700, 0.0
        %v829 = vmax.f32 %v701, 0.0
        %v830 = vmax.f32 %v702, 0.0
        %v831 = vmax.f32 %v703, 0.0
        %v832 = vmax.f32 %v704, 0.0
        %v833 = vmax.f32 %v705, 0.0
        %v834 = vmax.f32 %v706, 0.0
        %v835 = vmax.f32 %v707, 0.0
        %v836 = vmax.f32 %v708, 0.0
        %v837 = vmax.f32 %v709, 0.0
        %v838 = vmax.f32 %v710, 0.0
        %v839 = vmax.f32 %v711, 0.0
        %v840 = vmax.f32 %v712, 0.0
        %v841 = vmax.f32 %v713, 0.0
        %v842 = vmax.f32 %v714, 0.0
        %v843 = vmax.f32 %v715, 0.0
        %v844 = vmax.f32 %v716, 0.0
        %v845 = vmax.f32 %v717, 0.0
        %v846 = vmax.f32 %v718, 0.0
        %v847 = vmax.f32 %v719, 0.0
        %v848 = vmax.f32 %v720, 0.0
        %v849 = vmax.f32 %v721, 0.0
        %v850 = vmax.f32 %v722, 0.0
        %v851 = vmax.f32 %v723, 0.0
        %v852 = vmax.f32 %v724, 0.0
        %v853 = vmax.f32 %v725, 0.0
        %v854 = vmax.f32 %v726, 0.0
        %v855 = vmax.f32 %v727, 0.0
        %v856 = vmax.f32 %v728, 0.0
        %v857 = vmax.f32 %v729, 0.0
        %v858 = vmax.f32 %v730, 0.0
        %v859 = vmax.f32 %v731, 0.0
        %v860 = vmax.f32 %v732, 0.0
        %v861 = vmax.f32 %v733, 0.0
        %v862 = vmax.f32 %v734, 0.0
        %v863 = vmax.f32 %v735, 0.0
        %v864 = vmax.f32 %v736, 0.0
        %v865 = vmax.f32 %v737, 0.0
        %v866 = vmax.f32 %v738, 0.0
        %v867 = vmax.f32 %v739, 0.0
        %v868 = vmax.f32 %v740, 0.0
        %v869 = vmax.f32 %v741, 0.0
        %v870 = vmax.f32 %v742, 0.0
        %v871 = vmax.f32 %v743, 0.0
        %v872 = vmax.f32 %v744, 0.0
        %v873 = vmax.f32 %v745, 0.0
        %v874 = vmax.f32 %v746, 0.0
        %v875 = vmax.f32 %v747, 0.0
        %v876 = vmax.f32 %v748, 0.0
        %v877 = vmax.f32 %v749, 0.0
        %v878 = vmax.f32 %v750, 0.0
        %v879 = vpack.c.bf16 %v752, %v751
        %v880 = vpack.c.bf16 %v754, %v753
        %v881 = vpack.c.bf16 %v756, %v755
        %v882 = vpack.c.bf16 %v758, %v757
        %v883 = vpack.c.bf16 %v760, %v759
        %v884 = vpack.c.bf16 %v762, %v761
        %v885 = vpack.c.bf16 %v764, %v763
        %v886 = vpack.c.bf16 %v766, %v765
        %v887 = vpack.c.bf16 %v768, %v767
        %v888 = vpack.c.bf16 %v770, %v769
        %v889 = vpack.c.bf16 %v772, %v771
        %v890 = vpack.c.bf16 %v774, %v773
        %v891 = vpack.c.bf16 %v776, %v775
        %v892 = vpack.c.bf16 %v778, %v777
        %v893 = vpack.c.bf16 %v780, %v779
        %v894 = vpack.c.bf16 %v782, %v781
        %v895 = vpack.c.bf16 %v784, %v783
        %v896 = vpack.c.bf16 %v786, %v785
        %v897 = vpack.c.bf16 %v788, %v787
        %v898 = vpack.c.bf16 %v790, %v789
        %v899 = vpack.c.bf16 %v792, %v791
        %v900 = vpack.c.bf16 %v794, %v793
        %v901 = vpack.c.bf16 %v796, %v795
        %v902 = vpack.c.bf16 %v798, %v797
        %v903 = vpack.c.bf16 %v800, %v799
        %v904 = vpack.c.bf16 %v802, %v801
        %v905 = vpack.c.bf16 %v804, %v803
        %v906 = vpack.c.bf16 %v806, %v805
        %v907 = vpack.c.bf16 %v808, %v807
        %v908 = vpack.c.bf16 %v810, %v809
        %v909 = vpack.c.bf16 %v812, %v811
        %v910 = vpack.c.bf16 %v814, %v813
        %v911 = vpack.c.bf16 %v816, %v815
        %v912 = vpack.c.bf16 %v818, %v817
        %v913 = vpack.c.bf16 %v820, %v819
        %v914 = vpack.c.bf16 %v822, %v821
        %v915 = vpack.c.bf16 %v824, %v823
        %v916 = vpack.c.bf16 %v826, %v825
        %v917 = vpack.c.bf16 %v828, %v827
        %v918 = vpack.c.bf16 %v830, %v829
        %v919 = vpack.c.bf16 %v832, %v831
        %v920 = vpack.c.bf16 %v834, %v833
        %v921 = vpack.c.bf16 %v836, %v835
        %v922 = vpack.c.bf16 %v838, %v837
        %v923 = vpack.c.bf16 %v840, %v839
        %v924 = vpack.c.bf16 %v842, %v841
        %v925 = vpack.c.bf16 %v844, %v843
        %v926 = vpack.c.bf16 %v846, %v845
        %v927 = vpack.c.bf16 %v848, %v847
        %v928 = vpack.c.bf16 %v850, %v849
        %v929 = vpack.c.bf16 %v852, %v851
        %v930 = vpack.c.bf16 %v854, %v853
        %v931 = vpack.c.bf16 %v856, %v855
        %v932 = vpack.c.bf16 %v858, %v857
        %v933 = vpack.c.bf16 %v860, %v859
        %v934 = vpack.c.bf16 %v862, %v861
        %v935 = vpack.c.bf16 %v864, %v863
        %v936 = vpack.c.bf16 %v866, %v865
        %v937 = vpack.c.bf16 %v868, %v867
        %v938 = vpack.c.bf16 %v870, %v869
        %v939 = vpack.c.bf16 %v872, %v871
        %v940 = vpack.c.bf16 %v874, %v873
        %v941 = vpack.c.bf16 %v876, %v875
        %v942 = vpack.c.bf16 %v878, %v877
        %v1007 = vunpack.c.l.b16 %v879
        %v1008 = vunpack.c.h.b16 %v879
        %v1009 = vunpack.c.l.b16 %v880
        %v1010 = vunpack.c.h.b16 %v880
        %v1011 = vunpack.c.l.b16 %v881
        %v1012 = vunpack.c.h.b16 %v881
        %v1013 = vunpack.c.l.b16 %v882
        %v1014 = vunpack.c.h.b16 %v882
        %v1015 = vunpack.c.l.b16 %v883
        %v1016 = vunpack.c.h.b16 %v883
        %v1017 = vunpack.c.l.b16 %v884
        %v1018 = vunpack.c.h.b16 %v884
        %v1019 = vunpack.c.l.b16 %v885
        %v1020 = vunpack.c.h.b16 %v885
        %v1021 = vunpack.c.l.b16 %v886
        %v1022 = vunpack.c.h.b16 %v886
        %v1023 = vunpack.c.l.b16 %v887
        %v1024 = vunpack.c.h.b16 %v887
        %v1025 = vunpack.c.l.b16 %v888
        %v1026 = vunpack.c.h.b16 %v888
        %v1027 = vunpack.c.l.b16 %v889
        %v1028 = vunpack.c.h.b16 %v889
        %v1029 = vunpack.c.l.b16 %v890
        %v1030 = vunpack.c.h.b16 %v890
        %v1031 = vunpack.c.l.b16 %v891
        %v1032 = vunpack.c.h.b16 %v891
        %v1033 = vunpack.c.l.b16 %v892
        %v1034 = vunpack.c.h.b16 %v892
        %v1035 = vunpack.c.l.b16 %v893
        %v1036 = vunpack.c.h.b16 %v893
        %v1037 = vunpack.c.l.b16 %v894
        %v1038 = vunpack.c.h.b16 %v894
        %v1039 = vunpack.c.l.b16 %v895
        %v1040 = vunpack.c.h.b16 %v895
        %v1041 = vunpack.c.l.b16 %v896
        %v1042 = vunpack.c.h.b16 %v896
        %v1043 = vunpack.c.l.b16 %v897
        %v1044 = vunpack.c.h.b16 %v897
        %v1045 = vunpack.c.l.b16 %v898
        %v1046 = vunpack.c.h.b16 %v898
        %v1047 = vunpack.c.l.b16 %v899
        %v1048 = vunpack.c.h.b16 %v899
        %v1049 = vunpack.c.l.b16 %v900
        %v1050 = vunpack.c.h.b16 %v900
        %v1051 = vunpack.c.l.b16 %v901
        %v1052 = vunpack.c.h.b16 %v901
        %v1053 = vunpack.c.l.b16 %v902
        %v1054 = vunpack.c.h.b16 %v902
        %v1055 = vunpack.c.l.b16 %v903
        %v1056 = vunpack.c.h.b16 %v903
        %v1057 = vunpack.c.l.b16 %v904
        %v1058 = vunpack.c.h.b16 %v904
        %v1059 = vunpack.c.l.b16 %v905
        %v1060 = vunpack.c.h.b16 %v905
        %v1061 = vunpack.c.l.b16 %v906
        %v1062 = vunpack.c.h.b16 %v906
        %v1063 = vunpack.c.l.b16 %v907
        %v1064 = vunpack.c.h.b16 %v907
        %v1065 = vunpack.c.l.b16 %v908
        %v1066 = vunpack.c.h.b16 %v908
        %v1067 = vunpack.c.l.b16 %v909
        %v1068 = vunpack.c.h.b16 %v909
        %v1069 = vunpack.c.l.b16 %v910
        %v1070 = vunpack.c.h.b16 %v910
        %v1071 = vunpack.c.l.b16 %v911
        %v1072 = vunpack.c.h.b16 %v911
        %v1073 = vunpack.c.l.b16 %v912
        %v1074 = vunpack.c.h.b16 %v912
        %v1075 = vunpack.c.l.b16 %v913
        %v1076 = vunpack.c.h.b16 %v913
        %v1077 = vunpack.c.l.b16 %v914
        %v1078 = vunpack.c.h.b16 %v914
        %v1079 = vunpack.c.l.b16 %v915
        %v1080 = vunpack.c.h.b16 %v915
        %v1081 = vunpack.c.l.b16 %v916
        %v1082 = vunpack.c.h.b16 %v916
        %v1083 = vunpack.c.l.b16 %v917
        %v1084 = vunpack.c.h.b16 %v917
        %v1085 = vunpack.c.l.b16 %v918
        %v1086 = vunpack.c.h.b16 %v918
        %v1087 = vunpack.c.l.b16 %v919
        %v1088 = vunpack.c.h.b16 %v919
        %v1089 = vunpack.c.l.b16 %v920
        %v1090 = vunpack.c.h.b16 %v920
        %v1091 = vunpack.c.l.b16 %v921
        %v1092 = vunpack.c.h.b16 %v921
        %v1093 = vunpack.c.l.b16 %v922
        %v1094 = vunpack.c.h.b16 %v922
        %v1095 = vunpack.c.l.b16 %v923
        %v1096 = vunpack.c.h.b16 %v923
        %v1097 = vunpack.c.l.b16 %v924
        %v1098 = vunpack.c.h.b16 %v924
        %v1099 = vunpack.c.l.b16 %v925
        %v1100 = vunpack.c.h.b16 %v925
        %v1101 = vunpack.c.l.b16 %v926
        %v1102 = vunpack.c.h.b16 %v926
        %v1103 = vunpack.c.l.b16 %v927
        %v1104 = vunpack.c.h.b16 %v927
        %v1105 = vunpack.c.l.b16 %v928
        %v1106 = vunpack.c.h.b16 %v928
        %v1107 = vunpack.c.l.b16 %v929
        %v1108 = vunpack.c.h.b16 %v929
        %v1109 = vunpack.c.l.b16 %v930
        %v1110 = vunpack.c.h.b16 %v930
        %v1111 = vunpack.c.l.b16 %v931
        %v1112 = vunpack.c.h.b16 %v931
        %v1113 = vunpack.c.l.b16 %v932
        %v1114 = vunpack.c.h.b16 %v932
        %v1115 = vunpack.c.l.b16 %v933
        %v1116 = vunpack.c.h.b16 %v933
        %v1117 = vunpack.c.l.b16 %v934
        %v1118 = vunpack.c.h.b16 %v934
        %v1119 = vunpack.c.l.b16 %v935
        %v1120 = vunpack.c.h.b16 %v935
        %v1121 = vunpack.c.l.b16 %v936
        %v1122 = vunpack.c.h.b16 %v936
        %v1123 = vunpack.c.l.b16 %v937
        %v1124 = vunpack.c.h.b16 %v937
        %v1125 = vunpack.c.l.b16 %v938
        %v1126 = vunpack.c.h.b16 %v938
        %v1127 = vunpack.c.l.b16 %v939
        %v1128 = vunpack.c.h.b16 %v939
        %v1129 = vunpack.c.l.b16 %v940
        %v1130 = vunpack.c.h.b16 %v940
        %v1131 = vunpack.c.l.b16 %v941
        %v1132 = vunpack.c.h.b16 %v941
        %v1133 = vunpack.c.l.b16 %v942
        %v1134 = vunpack.c.h.b16 %v942
        %v1135 = vpack.c.b16 %v1007, %v1007
        %v1136 = vpack.c.b16 %v1008, %v1008
        %v1137 = vpack.c.b16 %v1009, %v1009
        %v1138 = vpack.c.b16 %v1010, %v1010
        %v1139 = vpack.c.b16 %v1011, %v1011
        %v1140 = vpack.c.b16 %v1012, %v1012
        %v1141 = vpack.c.b16 %v1013, %v1013
        %v1142 = vpack.c.b16 %v1014, %v1014
        %v1143 = vpack.c.b16 %v1015, %v1015
        %v1144 = vpack.c.b16 %v1016, %v1016
        %v1145 = vpack.c.b16 %v1017, %v1017
        %v1146 = vpack.c.b16 %v1018, %v1018
        %v1147 = vpack.c.b16 %v1019, %v1019
        %v1148 = vpack.c.b16 %v1020, %v1020
        %v1149 = vpack.c.b16 %v1021, %v1021
        %v1150 = vpack.c.b16 %v1022, %v1022
        %v1151 = vpack.c.b16 %v1023, %v1023
        %v1152 = vpack.c.b16 %v1024, %v1024
        %v1153 = vpack.c.b16 %v1025, %v1025
        %v1154 = vpack.c.b16 %v1026, %v1026
        %v1155 = vpack.c.b16 %v1027, %v1027
        %v1156 = vpack.c.b16 %v1028, %v1028
        %v1157 = vpack.c.b16 %v1029, %v1029
        %v1158 = vpack.c.b16 %v1030, %v1030
        %v1159 = vpack.c.b16 %v1031, %v1031
        %v1160 = vpack.c.b16 %v1032, %v1032
        %v1161 = vpack.c.b16 %v1033, %v1033
        %v1162 = vpack.c.b16 %v1034, %v1034
        %v1163 = vpack.c.b16 %v1035, %v1035
        %v1164 = vpack.c.b16 %v1036, %v1036
        %v1165 = vpack.c.b16 %v1037, %v1037
        %v1166 = vpack.c.b16 %v1038, %v1038
        %v1167 = vpack.c.b16 %v1039, %v1039
        %v1168 = vpack.c.b16 %v1040, %v1040
        %v1169 = vpack.c.b16 %v1041, %v1041
        %v1170 = vpack.c.b16 %v1042, %v1042
        %v1171 = vpack.c.b16 %v1043, %v1043
        %v1172 = vpack.c.b16 %v1044, %v1044
        %v1173 = vpack.c.b16 %v1045, %v1045
        %v1174 = vpack.c.b16 %v1046, %v1046
        %v1175 = vpack.c.b16 %v1047, %v1047
        %v1176 = vpack.c.b16 %v1048, %v1048
        %v1177 = vpack.c.b16 %v1049, %v1049
        %v1178 = vpack.c.b16 %v1050, %v1050
        %v1179 = vpack.c.b16 %v1051, %v1051
        %v1180 = vpack.c.b16 %v1052, %v1052
        %v1181 = vpack.c.b16 %v1053, %v1053
        %v1182 = vpack.c.b16 %v1054, %v1054
        %v1183 = vpack.c.b16 %v1055, %v1055
        %v1184 = vpack.c.b16 %v1056, %v1056
        %v1185 = vpack.c.b16 %v1057, %v1057
        %v1186 = vpack.c.b16 %v1058, %v1058
        %v1187 = vpack.c.b16 %v1059, %v1059
        %v1188 = vpack.c.b16 %v1060, %v1060
        %v1189 = vpack.c.b16 %v1061, %v1061
        %v1190 = vpack.c.b16 %v1062, %v1062
        %v1191 = vpack.c.b16 %v1063, %v1063
        %v1192 = vpack.c.b16 %v1064, %v1064
        %v1193 = vpack.c.b16 %v1065, %v1065
        %v1194 = vpack.c.b16 %v1066, %v1066
        %v1195 = vpack.c.b16 %v1067, %v1067
        %v1196 = vpack.c.b16 %v1068, %v1068
        %v1197 = vpack.c.b16 %v1069, %v1069
        %v1198 = vpack.c.b16 %v1070, %v1070
        %v1199 = vpack.c.b16 %v1071, %v1071
        %v1200 = vpack.c.b16 %v1072, %v1072
        %v1201 = vpack.c.b16 %v1073, %v1073
        %v1202 = vpack.c.b16 %v1074, %v1074
        %v1203 = vpack.c.b16 %v1075, %v1075
        %v1204 = vpack.c.b16 %v1076, %v1076
        %v1205 = vpack.c.b16 %v1077, %v1077
        %v1206 = vpack.c.b16 %v1078, %v1078
        %v1207 = vpack.c.b16 %v1079, %v1079
        %v1208 = vpack.c.b16 %v1080, %v1080
        %v1209 = vpack.c.b16 %v1081, %v1081
        %v1210 = vpack.c.b16 %v1082, %v1082
        %v1211 = vpack.c.b16 %v1083, %v1083
        %v1212 = vpack.c.b16 %v1084, %v1084
        %v1213 = vpack.c.b16 %v1085, %v1085
        %v1214 = vpack.c.b16 %v1086, %v1086
        %v1215 = vpack.c.b16 %v1087, %v1087
        %v1216 = vpack.c.b16 %v1088, %v1088
        %v1217 = vpack.c.b16 %v1089, %v1089
        %v1218 = vpack.c.b16 %v1090, %v1090
        %v1219 = vpack.c.b16 %v1091, %v1091
        %v1220 = vpack.c.b16 %v1092, %v1092
        %v1221 = vpack.c.b16 %v1093, %v1093
        %v1222 = vpack.c.b16 %v1094, %v1094
        %v1223 = vpack.c.b16 %v1095, %v1095
        %v1224 = vpack.c.b16 %v1096, %v1096
        %v1225 = vpack.c.b16 %v1097, %v1097
        %v1226 = vpack.c.b16 %v1098, %v1098
        %v1227 = vpack.c.b16 %v1099, %v1099
        %v1228 = vpack.c.b16 %v1100, %v1100
        %v1229 = vpack.c.b16 %v1101, %v1101
        %v1230 = vpack.c.b16 %v1102, %v1102
        %v1231 = vpack.c.b16 %v1103, %v1103
        %v1232 = vpack.c.b16 %v1104, %v1104
        %v1233 = vpack.c.b16 %v1105, %v1105
        %v1234 = vpack.c.b16 %v1106, %v1106
        %v1235 = vpack.c.b16 %v1107, %v1107
        %v1236 = vpack.c.b16 %v1108, %v1108
        %v1237 = vpack.c.b16 %v1109, %v1109
        %v1238 = vpack.c.b16 %v1110, %v1110
        %v1239 = vpack.c.b16 %v1111, %v1111
        %v1240 = vpack.c.b16 %v1112, %v1112
        %v1241 = vpack.c.b16 %v1113, %v1113
        %v1242 = vpack.c.b16 %v1114, %v1114
        %v1243 = vpack.c.b16 %v1115, %v1115
        %v1244 = vpack.c.b16 %v1116, %v1116
        %v1245 = vpack.c.b16 %v1117, %v1117
        %v1246 = vpack.c.b16 %v1118, %v1118
        %v1247 = vpack.c.b16 %v1119, %v1119
        %v1248 = vpack.c.b16 %v1120, %v1120
        %v1249 = vpack.c.b16 %v1121, %v1121
        %v1250 = vpack.c.b16 %v1122, %v1122
        %v1251 = vpack.c.b16 %v1123, %v1123
        %v1252 = vpack.c.b16 %v1124, %v1124
        %v1253 = vpack.c.b16 %v1125, %v1125
        %v1254 = vpack.c.b16 %v1126, %v1126
        %v1255 = vpack.c.b16 %v1127, %v1127
        %v1256 = vpack.c.b16 %v1128, %v1128
        %v1257 = vpack.c.b16 %v1129, %v1129
        %v1258 = vpack.c.b16 %v1130, %v1130
        %v1259 = vpack.c.b16 %v1131, %v1131
        %v1260 = vpack.c.b16 %v1132, %v1132
        %v1261 = vpack.c.b16 %v1133, %v1133
        %v1262 = vpack.c.b16 %v1134, %v1134
        %1391 = vst [vmem:[%s208] sm:$0xf] %v1135
        %1392 = vst [vmem:[%s208 + $0x4] sm:$0xf] %v1136
        %1393 = vst [vmem:[%s208 + $0x8] sm:$0xf] %v1137
        %1394 = vst [vmem:[%s208 + $0xc] sm:$0xf] %v1138
        %1395 = vst [vmem:[%s208 + $0x10] sm:$0xf] %v1139
        %1396 = vst [vmem:[%s208 + $0x14] sm:$0xf] %v1140
        %1397 = vst [vmem:[%s208 + $0x18] sm:$0xf] %v1141
        %1398 = vst [vmem:[%s208 + $0x1c] sm:$0xf] %v1142
        %1399 = vst [vmem:[%s208 + $0x20] sm:$0xf] %v1143
        %1400 = vst [vmem:[%s208 + $0x24] sm:$0xf] %v1144
        %1401 = vst [vmem:[%s208 + $0x28] sm:$0xf] %v1145
        %1402 = vst [vmem:[%s208 + $0x2c] sm:$0xf] %v1146
        %1403 = vst [vmem:[%s208 + $0x30] sm:$0xf] %v1147
        %1404 = vst [vmem:[%s208 + $0x34] sm:$0xf] %v1148
        %1405 = vst [vmem:[%s208 + $0x38] sm:$0xf] %v1149
        %1406 = vst [vmem:[%s208 + $0x3c] sm:$0xf] %v1150
        %1407 = vst [vmem:[%s208 + $0x40] sm:$0xf] %v1151
        %1408 = vst [vmem:[%s208 + $0x44] sm:$0xf] %v1152
        %1409 = vst [vmem:[%s208 + $0x48] sm:$0xf] %v1153
        %1410 = vst [vmem:[%s208 + $0x4c] sm:$0xf] %v1154
        %1411 = vst [vmem:[%s208 + $0x50] sm:$0xf] %v1155
        %1412 = vst [vmem:[%s208 + $0x54] sm:$0xf] %v1156
        %1413 = vst [vmem:[%s208 + $0x58] sm:$0xf] %v1157
        %1414 = vst [vmem:[%s208 + $0x5c] sm:$0xf] %v1158
        %1415 = vst [vmem:[%s208 + $0x60] sm:$0xf] %v1159
        %1416 = vst [vmem:[%s208 + $0x64] sm:$0xf] %v1160
        %1417 = vst [vmem:[%s208 + $0x68] sm:$0xf] %v1161
        %1418 = vst [vmem:[%s208 + $0x6c] sm:$0xf] %v1162
        %1419 = vst [vmem:[%s208 + $0x70] sm:$0xf] %v1163
        %1420 = vst [vmem:[%s208 + $0x74] sm:$0xf] %v1164
        %1421 = vst [vmem:[%s208 + $0x78] sm:$0xf] %v1165
        %1422 = vst [vmem:[%s208 + $0x7c] sm:$0xf] %v1166
        %1423 = vst [vmem:[%s208 + $0x80] sm:$0xf] %v1167
        %1424 = vst [vmem:[%s208 + $0x84] sm:$0xf] %v1168
        %1425 = vst [vmem:[%s208 + $0x88] sm:$0xf] %v1169
        %1426 = vst [vmem:[%s208 + $0x8c] sm:$0xf] %v1170
        %1427 = vst [vmem:[%s208 + $0x90] sm:$0xf] %v1171
        %1428 = vst [vmem:[%s208 + $0x94] sm:$0xf] %v1172
        %1429 = vst [vmem:[%s208 + $0x98] sm:$0xf] %v1173
        %1430 = vst [vmem:[%s208 + $0x9c] sm:$0xf] %v1174
        %1431 = vst [vmem:[%s208 + $0xa0] sm:$0xf] %v1175
        %1432 = vst [vmem:[%s208 + $0xa4] sm:$0xf] %v1176
        %1433 = vst [vmem:[%s208 + $0xa8] sm:$0xf] %v1177
        %1434 = vst [vmem:[%s208 + $0xac] sm:$0xf] %v1178
        %1435 = vst [vmem:[%s208 + $0xb0] sm:$0xf] %v1179
        %1436 = vst [vmem:[%s208 + $0xb4] sm:$0xf] %v1180
        %1437 = vst [vmem:[%s208 + $0xb8] sm:$0xf] %v1181
        %1438 = vst [vmem:[%s208 + $0xbc] sm:$0xf] %v1182
        %1439 = vst [vmem:[%s208 + $0xc0] sm:$0xf] %v1183
        %1440 = vst [vmem:[%s208 + $0xc4] sm:$0xf] %v1184
        %1441 = vst [vmem:[%s208 + $0xc8] sm:$0xf] %v1185
        %1442 = vst [vmem:[%s208 + $0xcc] sm:$0xf] %v1186
        %1443 = vst [vmem:[%s208 + $0xd0] sm:$0xf] %v1187
        %1444 = vst [vmem:[%s208 + $0xd4] sm:$0xf] %v1188
        %1445 = vst [vmem:[%s208 + $0xd8] sm:$0xf] %v1189
        %1446 = vst [vmem:[%s208 + $0xdc] sm:$0xf] %v1190
        %1447 = vst [vmem:[%s208 + $0xe0] sm:$0xf] %v1191
        %1448 = vst [vmem:[%s208 + $0xe4] sm:$0xf] %v1192
        %1449 = vst [vmem:[%s208 + $0xe8] sm:$0xf] %v1193
        %1450 = vst [vmem:[%s208 + $0xec] sm:$0xf] %v1194
        %1451 = vst [vmem:[%s208 + $0xf0] sm:$0xf] %v1195
        %1452 = vst [vmem:[%s208 + $0xf4] sm:$0xf] %v1196
        %1453 = vst [vmem:[%s208 + $0xf8] sm:$0xf] %v1197
        %1454 = vst [vmem:[%s208 + $0xfc] sm:$0xf] %v1198
        %1455 = vst [vmem:[%s208 + $0x100] sm:$0xf] %v1199
        %1456 = vst [vmem:[%s208 + $0x104] sm:$0xf] %v1200
        %1457 = vst [vmem:[%s208 + $0x108] sm:$0xf] %v1201
        %1458 = vst [vmem:[%s208 + $0x10c] sm:$0xf] %v1202
        %1459 = vst [vmem:[%s208 + $0x110] sm:$0xf] %v1203
        %1460 = vst [vmem:[%s208 + $0x114] sm:$0xf] %v1204
        %1461 = vst [vmem:[%s208 + $0x118] sm:$0xf] %v1205
        %1462 = vst [vmem:[%s208 + $0x11c] sm:$0xf] %v1206
        %1463 = vst [vmem:[%s208 + $0x120] sm:$0xf] %v1207
        %1464 = vst [vmem:[%s208 + $0x124] sm:$0xf] %v1208
        %1465 = vst [vmem:[%s208 + $0x128] sm:$0xf] %v1209
        %1466 = vst [vmem:[%s208 + $0x12c] sm:$0xf] %v1210
        %1467 = vst [vmem:[%s208 + $0x130] sm:$0xf] %v1211
        %1468 = vst [vmem:[%s208 + $0x134] sm:$0xf] %v1212
        %1469 = vst [vmem:[%s208 + $0x138] sm:$0xf] %v1213
        %1470 = vst [vmem:[%s208 + $0x13c] sm:$0xf] %v1214
        %1471 = vst [vmem:[%s208 + $0x140] sm:$0xf] %v1215
        %1472 = vst [vmem:[%s208 + $0x144] sm:$0xf] %v1216
        %1473 = vst [vmem:[%s208 + $0x148] sm:$0xf] %v1217
        %1474 = vst [vmem:[%s208 + $0x14c] sm:$0xf] %v1218
        %1475 = vst [vmem:[%s208 + $0x150] sm:$0xf] %v1219
        %1476 = vst [vmem:[%s208 + $0x154] sm:$0xf] %v1220
        %1477 = vst [vmem:[%s208 + $0x158] sm:$0xf] %v1221
        %1478 = vst [vmem:[%s208 + $0x15c] sm:$0xf] %v1222
        %1479 = vst [vmem:[%s208 + $0x160] sm:$0xf] %v1223
        %1480 = vst [vmem:[%s208 + $0x164] sm:$0xf] %v1224
        %1481 = vst [vmem:[%s208 + $0x168] sm:$0xf] %v1225
        %1482 = vst [vmem:[%s208 + $0x16c] sm:$0xf] %v1226
        %1483 = vst [vmem:[%s208 + $0x170] sm:$0xf] %v1227
        %1484 = vst [vmem:[%s208 + $0x174] sm:$0xf] %v1228
        %1485 = vst [vmem:[%s208 + $0x178] sm:$0xf] %v1229
        %1486 = vst [vmem:[%s208 + $0x17c] sm:$0xf] %v1230
        %1487 = vst [vmem:[%s208 + $0x180] sm:$0xf] %v1231
        %1488 = vst [vmem:[%s208 + $0x184] sm:$0xf] %v1232
        %1489 = vst [vmem:[%s208 + $0x188] sm:$0xf] %v1233
        %1490 = vst [vmem:[%s208 + $0x18c] sm:$0xf] %v1234
        %1491 = vst [vmem:[%s208 + $0x190] sm:$0xf] %v1235
        %1492 = vst [vmem:[%s208 + $0x194] sm:$0xf] %v1236
        %1493 = vst [vmem:[%s208 + $0x198] sm:$0xf] %v1237
        %1494 = vst [vmem:[%s208 + $0x19c] sm:$0xf] %v1238
        %1495 = vst [vmem:[%s208 + $0x1a0] sm:$0xf] %v1239
        %1496 = vst [vmem:[%s208 + $0x1a4] sm:$0xf] %v1240
        %1497 = vst [vmem:[%s208 + $0x1a8] sm:$0xf] %v1241
        %1498 = vst [vmem:[%s208 + $0x1ac] sm:$0xf] %v1242
        %1499 = vst [vmem:[%s208 + $0x1b0] sm:$0xf] %v1243
        %1500 = vst [vmem:[%s208 + $0x1b4] sm:$0xf] %v1244
        %1501 = vst [vmem:[%s208 + $0x1b8] sm:$0xf] %v1245
        %1502 = vst [vmem:[%s208 + $0x1bc] sm:$0xf] %v1246
        %1503 = vst [vmem:[%s208 + $0x1c0] sm:$0xf] %v1247
        %1504 = vst [vmem:[%s208 + $0x1c4] sm:$0xf] %v1248
        %1505 = vst [vmem:[%s208 + $0x1c8] sm:$0xf] %v1249
        %1506 = vst [vmem:[%s208 + $0x1cc] sm:$0xf] %v1250
        %1507 = vst [vmem:[%s208 + $0x1d0] sm:$0xf] %v1251
        %1508 = vst [vmem:[%s208 + $0x1d4] sm:$0xf] %v1252
        %1509 = vst [vmem:[%s208 + $0x1d8] sm:$0xf] %v1253
        %1510 = vst [vmem:[%s208 + $0x1dc] sm:$0xf] %v1254
        %1511 = vst [vmem:[%s208 + $0x1e0] sm:$0xf] %v1255
        %1512 = vst [vmem:[%s208 + $0x1e4] sm:$0xf] %v1256
        %1513 = vst [vmem:[%s208 + $0x1e8] sm:$0xf] %v1257
        %1514 = vst [vmem:[%s208 + $0x1ec] sm:$0xf] %v1258
        %1515 = vst [vmem:[%s208 + $0x1f0] sm:$0xf] %v1259
        %1516 = vst [vmem:[%s208 + $0x1f4] sm:$0xf] %v1260
        %1517 = vst [vmem:[%s208 + $0x1f8] sm:$0xf] %v1261
        %1518 = vst [vmem:[%s208 + $0x1fc] sm:$0xf] %v1262
        %s1519 = sand.u32 %s119, 1
        %s1520 = scalar_lea.sflag [#allocation3], %s1519
        %s1521 = sand.u32 %s119, 1
        %s1522 = smul.addr %s1521, 512
        %s1523 = scalar_lea.vmem [#allocation2], %s1522
        // Predicated region
        $region33: #{conv_bn_act.3} parent=31 // pred_check
          %p1524 = pneg %p129
        $region34: #{conv_bn_act.3} parent=31 // pred_check_branch
          %1526 = sbr.rel (%p1524) target = $region36
        $region35: #{conv_bn_act.3} parent=31 // pred_region
          %s1527 = smul.u32 128, %s22
          %s1529 = ssub.s32 8192, 8192
          %1530 = vsyncadd %s1520, %s1529
          %s1531 = sadd.s32 %s21, %s1527
          %s1532 = smul.addr %s1531, 64
          %s1533 = scalar_lea.hbm %s3, %s1532
          %s1534 = sshll.u32 %s1523, 4
          %s1535 = int_to_ptr.vmem [resolvable:$true] %s1534
          %1540 = dma.vmem_to_hbm [thread:$0]  %s1535, 8192, %s1533, %s1520, 64, 64, 4
        $region36: #{conv_bn_act.3} parent=31 // pred_fallthru
          _
      $region32: #{conv_bn_act.3} parent=5 // pred_fallthru
        _
      %p1541 = scmp.le.s32.totalorder 2, %s12
      // Predicated region
      $region37: #{conv_bn_act.3} parent=5 // pred_check
        %p1542 = pneg %p1541
      $region38: #{conv_bn_act.3} parent=5 // pred_check_branch
        %1544 = sbr.rel (%p1542) target = $region40
      $region39: #{conv_bn_act.3} parent=5 // pred_region
        %s1545 = ssub.s32 %s12, 2
        // Predicated region
        $region41: #{conv_bn_act.3} parent=39 // pred_check
          %p1546 = pneg %p135
        $region42: #{conv_bn_act.3} parent=39 // pred_check_branch
          %1548 = sbr.rel (%p1546) target = $region44
        $region43: #{conv_bn_act.3} parent=39 // pred_region
          %s1549 = sand.u32 %s120, 1
          %s1550 = scalar_lea.sflag [#allocation3], %s1549
          %s1551 = sand.u32 %s120, 1
          %s1552 = smul.addr %s1551, 512
          %s1553 = scalar_lea.vmem [#allocation2], %s1552
          %1554 = dma.done %s1550, 8192
        $region44: #{conv_bn_act.3} parent=39 // pred_fallthru
          _
      $region40: #{conv_bn_act.3} parent=5 // pred_fallthru
        _
    $region6: #{conv_bn_act.3} parent=1 // loop_footer
      %s16 = sadd.s32 1, %s12
    $region7: #{conv_bn_act.3} parent=1 // loop_footer_branch
      %11 = sbr.rel target = $region3
    $region8: #{conv_bn_act.3} parent=1 // loop_exit
      _
    %1555 = vsyncpa [#allocation3], 1
    %s1556 = scalar_lea.sflag [#allocation3], 1
    %1557 = vsyncpa %s1556, 1

// kernel: conv_bn_act.2
$region0: #{conv_bn_act.2}
  #allocation0 [shape = 'u32[]', space=smem, size = 0x4, offset = 0x4, fixed_abs, tag = 'smem constant byte address 0x4 - core index']
  #allocation1 [shape = 'u32[144,128]{1,0:T(1,128)}', space=vmem, size = 0x12000, scoped, tag = 'internal scratch']
  #allocation2 [shape = 'f32[512,128]{1,0:T(8,128)}', space=vmem, size = 0x40000, scoped, tag = 'scratch operand']
  %s0 = inlined_call_operand.vmem [shape: bf16[2048,256], index: 0, kind: input, shape index: {}]
  %s1 = inlined_call_operand.vmem [shape: bf16[256,128], index: 1, kind: input, shape index: {}]
  %s2 = inlined_call_operand.vmem [shape: bf16[2048,128], index: 2, kind: output, shape index: {0}]
  %s3 = inlined_call_operand.vmem [shape: f32[32,128], index: 3, kind: output, shape index: {1}]
  %4 = xla_tuple %s2, %s3
  %s5 = sld [smem:[#allocation0]]
  $region57: #{conv_bn_act.2} parent=0
    _
  %s7 = ssub.s32 1, %s5
  %s8 = scalar_select 0, %s7, %s5
  loop: start=0, step=1, limit=6
  $region2: #{conv_bn_act.2} parent=0 // loop_pre_header
    _
  $region3: #{conv_bn_act.2} parent=0 // loop_header
    %s10 = sphi 0, %s14
    %p11 = scmp.ge.s32.totalorder %s10, 6
    %s17 = sphi 0, %s36
    %s18 = sphi 0, %s32
    %s19 = sphi 0, %s28
    %s20 = sphi 0, %s17
    %s21 = sphi 0, %s18
    %s22 = sphi 0, %s19
    %s23 = sphi 0, %s20
    %s24 = sphi 0, %s21
    %s25 = sphi 0, %s22
    %s41 = sphi 0, %s43
    %s44 = sphi 0, %s41
    %s45 = sphi 0, %s44
    %s61 = sphi 0, %s45
    %s69 = sphi 0, %s71
    %s72 = sphi 0, %s69
    %s73 = sphi 0, %s72
    %s89 = sphi 0, %s73
    %s97 = sphi 0, %s99
    %s100 = sphi 0, %s97
    %s101 = sphi 0, %s100
    %s117 = sphi 0, %s101
    %s125 = sphi 0, %s127
    %s128 = sphi 0, %s125
    %s129 = sphi 0, %s128
    %s145 = sphi 0, %s129
  $region4: #{conv_bn_act.2} parent=0 // loop_header_branch
    %13 = sbr.rel (%p11) target = $region8
  $region5: #{conv_bn_act.2} parent=0 // loop_body
    %s15 = ssub.s32 %s10, 1
    %s16 = ssub.s32 %s10, 2
    %s26 = sadd.s32 1, %s19
    %p27 = scmp.ge.s32.totalorder %s26, 1
    %s28 = scalar_select %p27, 0, %s26
    %s29 = sadd.s32 1, %s18
    %s30 = scalar_select %p27, %s29, %s18
    %p31 = scmp.ge.s32.totalorder %s30, 1
    %s32 = scalar_select %p31, 0, %s30
    %s33 = sadd.s32 1, %s17
    %s34 = scalar_select %p31, %s33, %s17
    %p35 = scmp.ge.s32.totalorder %s34, 4
    %s36 = scalar_select %p35, 0, %s34
    %s37 = ssub.s32 %s17, %s36
    %s38 = ssub.s32 %s19, %s28
    %s39 = sor.u32 %s37, %s38
    %p40 = scmp.eq.s32.totalorder %s39, 0
    %s42 = sadd.s32 %s41, 1
    %s43 = scalar_select %p40, %s41, %s42
    %p46 = pneg %p40
    %p47 = scmp.eq.s32.totalorder %s10, 3
    %p48 = por %p46, %p47
    %p49 = scmp.ne.s32.totalorder %s41, %s44
    %p50 = scmp.eq.s32.totalorder %s10, 0
    %p51 = por %p49, %p50
    %p52 = scmp.ne.s32.totalorder %s41, %s44
    %p53 = scmp.eq.s32.totalorder %s15, 3
    %p54 = por %p52, %p53
    %p55 = scmp.ne.s32.totalorder %s44, %s45
    %p56 = scmp.eq.s32.totalorder %s15, 0
    %p57 = por %p55, %p56
    %p58 = scmp.ne.s32.totalorder %s44, %s45
    %p59 = scmp.eq.s32.totalorder %s16, 3
    %p60 = por %p58, %p59
    %p62 = scmp.ne.s32.totalorder %s45, %s61
    %p63 = scmp.eq.s32.totalorder %s16, 0
    %p64 = por %p62, %p63
    %s65 = ssub.s32 %s19, %s28
    %s66 = ssub.s32 %s18, %s32
    %s67 = sor.u32 %s65, %s66
    %p68 = scmp.eq.s32.totalorder %s67, 0
    %s70 = sadd.s32 %s69, 1
    %s71 = scalar_select %p68, %s69, %s70
    %p74 = pneg %p68
    %p75 = scmp.eq.s32.totalorder %s10, 3
    %p76 = por %p74, %p75
    %p77 = scmp.ne.s32.totalorder %s69, %s72
    %p78 = scmp.eq.s32.totalorder %s10, 0
    %p79 = por %p77, %p78
    %p80 = scmp.ne.s32.totalorder %s69, %s72
    %p81 = scmp.eq.s32.totalorder %s15, 3
    %p82 = por %p80, %p81
    %p83 = scmp.ne.s32.totalorder %s72, %s73
    %p84 = scmp.eq.s32.totalorder %s15, 0
    %p85 = por %p83, %p84
    %p86 = scmp.ne.s32.totalorder %s72, %s73
    %p87 = scmp.eq.s32.totalorder %s16, 3
    %p88 = por %p86, %p87
    %p90 = scmp.ne.s32.totalorder %s73, %s89
    %p91 = scmp.eq.s32.totalorder %s16, 0
    %p92 = por %p90, %p91
    %s93 = ssub.s32 %s17, %s36
    %s94 = ssub.s32 %s18, %s32
    %s95 = sor.u32 %s93, %s94
    %p96 = scmp.eq.s32.totalorder %s95, 0
    %s98 = sadd.s32 %s97, 1
    %s99 = scalar_select %p96, %s97, %s98
    %p102 = pneg %p96
    %p103 = scmp.eq.s32.totalorder %s10, 3
    %p104 = por %p102, %p103
    %p105 = scmp.ne.s32.totalorder %s97, %s100
    %p106 = scmp.eq.s32.totalorder %s10, 0
    %p107 = por %p105, %p106
    %p108 = scmp.ne.s32.totalorder %s97, %s100
    %p109 = scmp.eq.s32.totalorder %s15, 3
    %p110 = por %p108, %p109
    %p111 = scmp.ne.s32.totalorder %s100, %s101
    %p112 = scmp.eq.s32.totalorder %s15, 0
    %p113 = por %p111, %p112
    %p114 = scmp.ne.s32.totalorder %s100, %s101
    %p115 = scmp.eq.s32.totalorder %s16, 3
    %p116 = por %p114, %p115
    %p118 = scmp.ne.s32.totalorder %s101, %s117
    %p119 = scmp.eq.s32.totalorder %s16, 0
    %p120 = por %p118, %p119
    %s121 = ssub.s32 %s17, %s36
    %s122 = ssub.s32 %s18, %s32
    %s123 = sor.u32 %s121, %s122
    %p124 = scmp.eq.s32.totalorder %s123, 0
    %s126 = sadd.s32 %s125, 1
    %s127 = scalar_select %p124, %s125, %s126
    %p130 = pneg %p124
    %p131 = scmp.eq.s32.totalorder %s10, 3
    %p132 = por %p130, %p131
    %p133 = scmp.ne.s32.totalorder %s125, %s128
    %p134 = scmp.eq.s32.totalorder %s10, 0
    %p135 = por %p133, %p134
    %p136 = scmp.ne.s32.totalorder %s125, %s128
    %p137 = scmp.eq.s32.totalorder %s15, 3
    %p138 = por %p136, %p137
    %p139 = scmp.ne.s32.totalorder %s128, %s129
    %p140 = scmp.eq.s32.totalorder %s15, 0
    %p141 = por %p139, %p140
    %p142 = scmp.ne.s32.totalorder %s128, %s129
    %p143 = scmp.eq.s32.totalorder %s16, 3
    %p144 = por %p142, %p143
    %p146 = scmp.ne.s32.totalorder %s129, %s145
    %p147 = scmp.eq.s32.totalorder %s16, 0
    %p148 = por %p146, %p147
    %p149 = scmp.le.s32.totalorder 1, %s10
    %p150 = scmp.lt.s32.totalorder %s10, 5
    %p151 = pnand %p149, %p150
    %p152 = pneg %p151
    // Predicated region
    $region9: #{conv_bn_act.2} parent=5 // pred_check
      _
    $region10: #{conv_bn_act.2} parent=5 // pred_check_branch
      %154 = sbr.rel (%p151) target = $region12
    $region11: #{conv_bn_act.2} parent=5 // pred_region
      %s155 = ssub.s32 %s10, 1
      // Predicated region
      $region13: #{conv_bn_act.2} parent=11 // pred_check
        %p156 = pneg %p85
      $region14: #{conv_bn_act.2} parent=11 // pred_check_branch
        %158 = sbr.rel (%p156) target = $region16
      $region15: #{conv_bn_act.2} parent=11 // pred_region
        %s159 = smul.u32 32, %s22
        %p160 = scmp.lt.s32.totalorder %s159, 31
        %s161 = scalar_select %p160, %s159, 31
        %p162 = scmp.lt.s32.totalorder %s21, 0
        %s163 = scalar_select %p162, %s21, 0
        %s164 = sadd.s32 %s163, %s161
        %s165 = smul.addr %s164, 4
        %s166 = scalar_lea.vmem %s1, %s165
        %s167 = smul.u32 32, %s22
      $region16: #{conv_bn_act.2} parent=11 // pred_fallthru
        _
    $region12: #{conv_bn_act.2} parent=5 // pred_fallthru
      _
    %p168 = scmp.lt.s32.totalorder %s10, 4
    // Predicated region
    $region17: #{conv_bn_act.2} parent=5 // pred_check
      %p169 = pneg %p168
    $region18: #{conv_bn_act.2} parent=5 // pred_check_branch
      %171 = sbr.rel (%p169) target = $region20
    $region19: #{conv_bn_act.2} parent=5 // pred_region
      // Predicated region
      $region21: #{conv_bn_act.2} parent=19 // pred_check
        %p172 = pneg %p51
      $region22: #{conv_bn_act.2} parent=19 // pred_check_branch
        %174 = sbr.rel (%p172) target = $region24
      $region23: #{conv_bn_act.2} parent=19 // pred_region
        %s175 = smul.u32 64, %s17
        %s176 = smul.u32 2, %s19
        %p177 = scmp.lt.s32.totalorder %s175, 255
        %s178 = scalar_select %p177, %s175, 255
        %p179 = scmp.lt.s32.totalorder %s176, 1
        %s180 = scalar_select %p179, %s176, 1
        %s181 = smul.addr %s178, 2
        %s182 = sadd.s32 %s180, %s181
        %s183 = smul.addr %s182, 4
        %s184 = scalar_lea.vmem %s0, %s183
        %s185 = smul.u32 64, %s17
        %s186 = smul.u32 2, %s19
      $region24: #{conv_bn_act.2} parent=19 // pred_fallthru
        _
    $region20: #{conv_bn_act.2} parent=5 // pred_fallthru
      _
    %p187 = scmp.le.s32.totalorder 1, %s10
    %p188 = scmp.lt.s32.totalorder %s10, 5
    %p189 = pnand %p187, %p188
    %p190 = pneg %p189
    // Predicated region
    $region25: #{conv_bn_act.2} parent=5 // pred_check
      _
    $region26: #{conv_bn_act.2} parent=5 // pred_check_branch
      %192 = sbr.rel (%p189) target = $region28
    $region27: #{conv_bn_act.2} parent=5 // pred_region
      %s193 = ssub.s32 %s10, 1
      %s194 = smul.u32 64, %s20
      %s195 = smul.u32 2, %s22
      %p196 = scmp.lt.s32.totalorder %s194, 255
      %s197 = scalar_select %p196, %s194, 255
      %p198 = scmp.lt.s32.totalorder %s195, 1
      %s199 = scalar_select %p198, %s195, 1
      %s200 = smul.addr %s197, 2
      %s201 = sadd.s32 %s199, %s200
      %s202 = smul.addr %s201, 4
      %s203 = scalar_lea.vmem %s0, %s202
      %p204 = pneg %p57
      %p205 = pneg %p54
      %s206 = smul.u32 32, %s22
      %p207 = scmp.lt.s32.totalorder %s206, 31
      %s208 = scalar_select %p207, %s206, 31
      %p209 = scmp.lt.s32.totalorder %s21, 0
      %s210 = scalar_select %p209, %s21, 0
      %s211 = sadd.s32 %s210, %s208
      %s212 = smul.addr %s211, 4
      %s213 = scalar_lea.vmem %s1, %s212
      %p214 = pneg %p85
      %p215 = pneg %p82
      %p216 = pneg %p113
      %p217 = pneg %p110
      %s218 = smul.u32 64, %s20
      %p219 = scmp.lt.s32.totalorder %s218, 255
      %s220 = scalar_select %p219, %s218, 255
      %p221 = scmp.lt.s32.totalorder %s21, 0
      %s222 = scalar_select %p221, %s21, 0
      %s223 = sadd.s32 %s222, %s220
      %s224 = smul.addr %s223, 4
      %s225 = scalar_lea.vmem %s2, %s224
      %p226 = pneg %p141
      %p227 = pneg %p138
      %p228 = scmp.lt.s32.totalorder %s20, 3
      %s229 = scalar_select %p228, %s20, 3
      %p230 = scmp.lt.s32.totalorder %s21, 0
      %s231 = scalar_select %p230, %s21, 0
      %s232 = sadd.s32 %s231, %s229
      %s233 = smul.addr %s232, 8
      %s234 = scalar_lea.vmem %s3, %s233
      %s235 = smul.u32 64, %s20
      %s236 = smul.u32 2, %s22
      %p237 = scmp.lt.s32.totalorder %s235, 255
      %s238 = scalar_select %p237, %s235, 255
      %p239 = scmp.lt.s32.totalorder %s236, 1
      %s240 = scalar_select %p239, %s236, 1
      %s241 = smul.addr %s238, 2
      %s242 = sadd.s32 %s240, %s241
      %s243 = smul.addr %s242, 4
      %s244 = scalar_lea.vmem %s0, %s243
      %s245 = smul.u32 64, %s20
      %s246 = smul.u32 2, %s22
      %s247 = smul.u32 32, %s22
      %p248 = scmp.lt.s32.totalorder %s247, 31
      %s249 = scalar_select %p248, %s247, 31
      %p250 = scmp.lt.s32.totalorder %s21, 0
      %s251 = scalar_select %p250, %s21, 0
      %s252 = sadd.s32 %s251, %s249
      %s253 = smul.addr %s252, 4
      %s254 = scalar_lea.vmem %s1, %s253
      %s255 = smul.u32 32, %s22
      %s256 = smul.u32 64, %s20
      %p257 = scmp.lt.s32.totalorder %s256, 255
      %s258 = scalar_select %p257, %s256, 255
      %p259 = scmp.lt.s32.totalorder %s21, 0
      %s260 = scalar_select %p259, %s21, 0
      %s261 = sadd.s32 %s260, %s258
      %s262 = smul.addr %s261, 4
      %s263 = scalar_lea.vmem %s2, %s262
      %s264 = smul.u32 64, %s20
      %p265 = scmp.lt.s32.totalorder %s20, 3
      %s266 = scalar_select %p265, %s20, 3
      %p267 = scmp.lt.s32.totalorder %s21, 0
      %s268 = scalar_select %p267, %s21, 0
      %s269 = sadd.s32 %s268, %s266
      %s270 = smul.addr %s269, 8
      %s271 = scalar_lea.vmem %s3, %s270
      %p273 = scmp.eq.s32.totalorder %s22, 0
      // Predicated region
      $region29: #{conv_bn_act.2} parent=27 // pred_check
        %p274 = pneg %p273
      $region30: #{conv_bn_act.2} parent=27 // pred_check_branch
        %276 = sbr.rel (%p274) target = $region32
      $region31: #{conv_bn_act.2} parent=27 // pred_region
        %277 = vst [vmem:[#allocation2] sm:$0xff] 0.0
        %278 = vst [vmem:[#allocation2 + $0x8] sm:$0xff] 0.0
        %279 = vst [vmem:[#allocation2 + $0x10] sm:$0xff] 0.0
        %280 = vst [vmem:[#allocation2 + $0x18] sm:$0xff] 0.0
        %281 = vst [vmem:[#allocation2 + $0x20] sm:$0xff] 0.0
        %282 = vst [vmem:[#allocation2 + $0x28] sm:$0xff] 0.0
        %283 = vst [vmem:[#allocation2 + $0x30] sm:$0xff] 0.0
        %284 = vst [vmem:[#allocation2 + $0x38] sm:$0xff] 0.0
        %285 = vst [vmem:[#allocation2 + $0x40] sm:$0xff] 0.0
        %286 = vst [vmem:[#allocation2 + $0x48] sm:$0xff] 0.0
        %287 = vst [vmem:[#allocation2 + $0x50] sm:$0xff] 0.0
        %288 = vst [vmem:[#allocation2 + $0x58] sm:$0xff] 0.0
        %289 = vst [vmem:[#allocation2 + $0x60] sm:$0xff] 0.0
        %290 = vst [vmem:[#allocation2 + $0x68] sm:$0xff] 0.0
        %291 = vst [vmem:[#allocation2 + $0x70] sm:$0xff] 0.0
        %292 = vst [vmem:[#allocation2 + $0x78] sm:$0xff] 0.0
        %293 = vst [vmem:[#allocation2 + $0x80] sm:$0xff] 0.0
        %294 = vst [vmem:[#allocation2 + $0x88] sm:$0xff] 0.0
        %295 = vst [vmem:[#allocation2 + $0x90] sm:$0xff] 0.0
        %296 = vst [vmem:[#allocation2 + $0x98] sm:$0xff] 0.0
        %297 = vst [vmem:[#allocation2 + $0xa0] sm:$0xff] 0.0
        %298 = vst [vmem:[#allocation2 + $0xa8] sm:$0xff] 0.0
        %299 = vst [vmem:[#allocation2 + $0xb0] sm:$0xff] 0.0
        %300 = vst [vmem:[#allocation2 + $0xb8] sm:$0xff] 0.0
        %301 = vst [vmem:[#allocation2 + $0xc0] sm:$0xff] 0.0
        %302 = vst [vmem:[#allocation2 + $0xc8] sm:$0xff] 0.0
        %303 = vst [vmem:[#allocation2 + $0xd0] sm:$0xff] 0.0
        %304 = vst [vmem:[#allocation2 + $0xd8] sm:$0xff] 0.0
        %305 = vst [vmem:[#allocation2 + $0xe0] sm:$0xff] 0.0
        %306 = vst [vmem:[#allocation2 + $0xe8] sm:$0xff] 0.0
        %307 = vst [vmem:[#allocation2 + $0xf0] sm:$0xff] 0.0
        %308 = vst [vmem:[#allocation2 + $0xf8] sm:$0xff] 0.0
        %309 = vst [vmem:[#allocation2 + $0x100] sm:$0xff] 0.0
        %310 = vst [vmem:[#allocation2 + $0x108] sm:$0xff] 0.0
        %311 = vst [vmem:[#allocation2 + $0x110] sm:$0xff] 0.0
        %312 = vst [vmem:[#allocation2 + $0x118] sm:$0xff] 0.0
        %313 = vst [vmem:[#allocation2 + $0x120] sm:$0xff] 0.0
        %314 = vst [vmem:[#allocation2 + $0x128] sm:$0xff] 0.0
        %315 = vst [vmem:[#allocation2 + $0x130] sm:$0xff] 0.0
        %316 = vst [vmem:[#allocation2 + $0x138] sm:$0xff] 0.0
        %317 = vst [vmem:[#allocation2 + $0x140] sm:$0xff] 0.0
        %318 = vst [vmem:[#allocation2 + $0x148] sm:$0xff] 0.0
        %319 = vst [vmem:[#allocation2 + $0x150] sm:$0xff] 0.0
        %320 = vst [vmem:[#allocation2 + $0x158] sm:$0xff] 0.0
        %321 = vst [vmem:[#allocation2 + $0x160] sm:$0xff] 0.0
        %322 = vst [vmem:[#allocation2 + $0x168] sm:$0xff] 0.0
        %323 = vst [vmem:[#allocation2 + $0x170] sm:$0xff] 0.0
        %324 = vst [vmem:[#allocation2 + $0x178] sm:$0xff] 0.0
        %325 = vst [vmem:[#allocation2 + $0x180] sm:$0xff] 0.0
        %326 = vst [vmem:[#allocation2 + $0x188] sm:$0xff] 0.0
        %327 = vst [vmem:[#allocation2 + $0x190] sm:$0xff] 0.0
        %328 = vst [vmem:[#allocation2 + $0x198] sm:$0xff] 0.0
        %329 = vst [vmem:[#allocation2 + $0x1a0] sm:$0xff] 0.0
        %330 = vst [vmem:[#allocation2 + $0x1a8] sm:$0xff] 0.0
        %331 = vst [vmem:[#allocation2 + $0x1b0] sm:$0xff] 0.0
        %332 = vst [vmem:[#allocation2 + $0x1b8] sm:$0xff] 0.0
        %333 = vst [vmem:[#allocation2 + $0x1c0] sm:$0xff] 0.0
        %334 = vst [vmem:[#allocation2 + $0x1c8] sm:$0xff] 0.0
        %335 = vst [vmem:[#allocation2 + $0x1d0] sm:$0xff] 0.0
        %336 = vst [vmem:[#allocation2 + $0x1d8] sm:$0xff] 0.0
        %337 = vst [vmem:[#allocation2 + $0x1e0] sm:$0xff] 0.0
        %338 = vst [vmem:[#allocation2 + $0x1e8] sm:$0xff] 0.0
        %339 = vst [vmem:[#allocation2 + $0x1f0] sm:$0xff] 0.0
        %340 = vst [vmem:[#allocation2 + $0x1f8] sm:$0xff] 0.0
      $region32: #{conv_bn_act.2} parent=27 // pred_fallthru
        _
      %v341 = vld [vmem:[#allocation2] sm:$0xff]
      %v342 = vld [vmem:[#allocation2 + $0x8] sm:$0xff]
      %v343 = vld [vmem:[#allocation2 + $0x10] sm:$0xff]
      %v344 = vld [vmem:[#allocation2 + $0x18] sm:$0xff]
      %v345 = vld [vmem:[#allocation2 + $0x20] sm:$0xff]
      %v346 = vld [vmem:[#allocation2 + $0x28] sm:$0xff]
      %v347 = vld [vmem:[#allocation2 + $0x30] sm:$0xff]
      %v348 = vld [vmem:[#allocation2 + $0x38] sm:$0xff]
      %v349 = vld [vmem:[#allocation2 + $0x40] sm:$0xff]
      %v350 = vld [vmem:[#allocation2 + $0x48] sm:$0xff]
      %v351 = vld [vmem:[#allocation2 + $0x50] sm:$0xff]
      %v352 = vld [vmem:[#allocation2 + $0x58] sm:$0xff]
      %v353 = vld [vmem:[#allocation2 + $0x60] sm:$0xff]
      %v354 = vld [vmem:[#allocation2 + $0x68] sm:$0xff]
      %v355 = vld [vmem:[#allocation2 + $0x70] sm:$0xff]
      %v356 = vld [vmem:[#allocation2 + $0x78] sm:$0xff]
      %v357 = vld [vmem:[#allocation2 + $0x80] sm:$0xff]
      %v358 = vld [vmem:[#allocation2 + $0x88] sm:$0xff]
      %v359 = vld [vmem:[#allocation2 + $0x90] sm:$0xff]
      %v360 = vld [vmem:[#allocation2 + $0x98] sm:$0xff]
      %v361 = vld [vmem:[#allocation2 + $0xa0] sm:$0xff]
      %v362 = vld [vmem:[#allocation2 + $0xa8] sm:$0xff]
      %v363 = vld [vmem:[#allocation2 + $0xb0] sm:$0xff]
      %v364 = vld [vmem:[#allocation2 + $0xb8] sm:$0xff]
      %v365 = vld [vmem:[#allocation2 + $0xc0] sm:$0xff]
      %v366 = vld [vmem:[#allocation2 + $0xc8] sm:$0xff]
      %v367 = vld [vmem:[#allocation2 + $0xd0] sm:$0xff]
      %v368 = vld [vmem:[#allocation2 + $0xd8] sm:$0xff]
      %v369 = vld [vmem:[#allocation2 + $0xe0] sm:$0xff]
      %v370 = vld [vmem:[#allocation2 + $0xe8] sm:$0xff]
      %v371 = vld [vmem:[#allocation2 + $0xf0] sm:$0xff]
      %v372 = vld [vmem:[#allocation2 + $0xf8] sm:$0xff]
      %v373 = vld [vmem:[#allocation2 + $0x100] sm:$0xff]
      %v374 = vld [vmem:[#allocation2 + $0x108] sm:$0xff]
      %v375 = vld [vmem:[#allocation2 + $0x110] sm:$0xff]
      %v376 = vld [vmem:[#allocation2 + $0x118] sm:$0xff]
      %v377 = vld [vmem:[#allocation2 + $0x120] sm:$0xff]
      %v378 = vld [vmem:[#allocation2 + $0x128] sm:$0xff]
      %v379 = vld [vmem:[#allocation2 + $0x130] sm:$0xff]
      %v380 = vld [vmem:[#allocation2 + $0x138] sm:$0xff]
      %v381 = vld [vmem:[#allocation2 + $0x140] sm:$0xff]
      %v382 = vld [vmem:[#allocation2 + $0x148] sm:$0xff]
      %v383 = vld [vmem:[#allocation2 + $0x150] sm:$0xff]
      %v384 = vld [vmem:[#allocation2 + $0x158] sm:$0xff]
      %v385 = vld [vmem:[#allocation2 + $0x160] sm:$0xff]
      %v386 = vld [vmem:[#allocation2 + $0x168] sm:$0xff]
      %v387 = vld [vmem:[#allocation2 + $0x170] sm:$0xff]
      %v388 = vld [vmem:[#allocation2 + $0x178] sm:$0xff]
      %v389 = vld [vmem:[#allocation2 + $0x180] sm:$0xff]
      %v390 = vld [vmem:[#allocation2 + $0x188] sm:$0xff]
      %v391 = vld [vmem:[#allocation2 + $0x190] sm:$0xff]
      %v392 = vld [vmem:[#allocation2 + $0x198] sm:$0xff]
      %v393 = vld [vmem:[#allocation2 + $0x1a0] sm:$0xff]
      %v394 = vld [vmem:[#allocation2 + $0x1a8] sm:$0xff]
      %v395 = vld [vmem:[#allocation2 + $0x1b0] sm:$0xff]
      %v396 = vld [vmem:[#allocation2 + $0x1b8] sm:$0xff]
      %v397 = vld [vmem:[#allocation2 + $0x1c0] sm:$0xff]
      %v398 = vld [vmem:[#allocation2 + $0x1c8] sm:$0xff]
      %v399 = vld [vmem:[#allocation2 + $0x1d0] sm:$0xff]
      %v400 = vld [vmem:[#allocation2 + $0x1d8] sm:$0xff]
      %v401 = vld [vmem:[#allocation2 + $0x1e0] sm:$0xff]
      %v402 = vld [vmem:[#allocation2 + $0x1e8] sm:$0xff]
      %v403 = vld [vmem:[#allocation2 + $0x1f0] sm:$0xff]
      %v404 = vld [vmem:[#allocation2 + $0x1f8] sm:$0xff]
      %v405 = vld [vmem:[%s244] sm:$0xff]
      %v406 = vld [vmem:[%s244 + $0x8] sm:$0xff]
      %v407 = vld [vmem:[%s244 + $0x10] sm:$0xff]
      %v408 = vld [vmem:[%s244 + $0x18] sm:$0xff]
      %v409 = vld [vmem:[%s244 + $0x20] sm:$0xff]
      %v410 = vld [vmem:[%s244 + $0x28] sm:$0xff]
      %v411 = vld [vmem:[%s244 + $0x30] sm:$0xff]
      %v412 = vld [vmem:[%s244 + $0x38] sm:$0xff]
      %v413 = vld [vmem:[%s244 + $0x40] sm:$0xff]
      %v414 = vld [vmem:[%s244 + $0x48] sm:$0xff]
      %v415 = vld [vmem:[%s244 + $0x50] sm:$0xff]
      %v416 = vld [vmem:[%s244 + $0x58] sm:$0xff]
      %v417 = vld [vmem:[%s244 + $0x60] sm:$0xff]
      %v418 = vld [vmem:[%s244 + $0x68] sm:$0xff]
      %v419 = vld [vmem:[%s244 + $0x70] sm:$0xff]
      %v420 = vld [vmem:[%s244 + $0x78] sm:$0xff]
      %v421 = vld [vmem:[%s244 + $0x80] sm:$0xff]
      %v422 = vld [vmem:[%s244 + $0x88] sm:$0xff]
      %v423 = vld [vmem:[%s244 + $0x90] sm:$0xff]
      %v424 = vld [vmem:[%s244 + $0x98] sm:$0xff]
      %v425 = vld [vmem:[%s244 + $0xa0] sm:$0xff]
      %v426 = vld [vmem:[%s244 + $0xa8] sm:$0xff]
      %v427 = vld [vmem:[%s244 + $0xb0] sm:$0xff]
      %v428 = vld [vmem:[%s244 + $0xb8] sm:$0xff]
      %v429 = vld [vmem:[%s244 + $0xc0] sm:$0xff]
      %v430 = vld [vmem:[%s244 + $0xc8] sm:$0xff]
      %v431 = vld [vmem:[%s244 + $0xd0] sm:$0xff]
      %v432 = vld [vmem:[%s244 + $0xd8] sm:$0xff]
      %v433 = vld [vmem:[%s244 + $0xe0] sm:$0xff]
      %v434 = vld [vmem:[%s244 + $0xe8] sm:$0xff]
      %v435 = vld [vmem:[%s244 + $0xf0] sm:$0xff]
      %v436 = vld [vmem:[%s244 + $0xf8] sm:$0xff]
      %v437 = vld [vmem:[%s244 + $0x100] sm:$0xff]
      %v438 = vld [vmem:[%s244 + $0x108] sm:$0xff]
      %v439 = vld [vmem:[%s244 + $0x110] sm:$0xff]
      %v440 = vld [vmem:[%s244 + $0x118] sm:$0xff]
      %v441 = vld [vmem:[%s244 + $0x120] sm:$0xff]
      %v442 = vld [vmem:[%s244 + $0x128] sm:$0xff]
      %v443 = vld [vmem:[%s244 + $0x130] sm:$0xff]
      %v444 = vld [vmem:[%s244 + $0x138] sm:$0xff]
      %v445 = vld [vmem:[%s244 + $0x140] sm:$0xff]
      %v446 = vld [vmem:[%s244 + $0x148] sm:$0xff]
      %v447 = vld [vmem:[%s244 + $0x150] sm:$0xff]
      %v448 = vld [vmem:[%s244 + $0x158] sm:$0xff]
      %v449 = vld [vmem:[%s244 + $0x160] sm:$0xff]
      %v450 = vld [vmem:[%s244 + $0x168] sm:$0xff]
      %v451 = vld [vmem:[%s244 + $0x170] sm:$0xff]
      %v452 = vld [vmem:[%s244 + $0x178] sm:$0xff]
      %v453 = vld [vmem:[%s244 + $0x180] sm:$0xff]
      %v454 = vld [vmem:[%s244 + $0x188] sm:$0xff]
      %v455 = vld [vmem:[%s244 + $0x190] sm:$0xff]
      %v456 = vld [vmem:[%s244 + $0x198] sm:$0xff]
      %v457 = vld [vmem:[%s244 + $0x1a0] sm:$0xff]
      %v458 = vld [vmem:[%s244 + $0x1a8] sm:$0xff]
      %v459 = vld [vmem:[%s244 + $0x1b0] sm:$0xff]
      %v460 = vld [vmem:[%s244 + $0x1b8] sm:$0xff]
      %v461 = vld [vmem:[%s244 + $0x1c0] sm:$0xff]
      %v462 = vld [vmem:[%s244 + $0x1c8] sm:$0xff]
      %v463 = vld [vmem:[%s244 + $0x1d0] sm:$0xff]
      %v464 = vld [vmem:[%s244 + $0x1d8] sm:$0xff]
      %v465 = vld [vmem:[%s244 + $0x1e0] sm:$0xff]
      %v466 = vld [vmem:[%s244 + $0x1e8] sm:$0xff]
      %v467 = vld [vmem:[%s244 + $0x1f0] sm:$0xff]
      %v468 = vld [vmem:[%s244 + $0x1f8] sm:$0xff]
      %v469 = vld [vmem:[%s254] sm:$0xf]
      %v470 = vld [vmem:[%s254 + $0x4] sm:$0xf]
      %v471 = vld [vmem:[%s254 + $0x8] sm:$0xf]
      %v472 = vld [vmem:[%s254 + $0xc] sm:$0xf]
      %v473 = vld [vmem:[%s254 + $0x10] sm:$0xf]
      %v474 = vld [vmem:[%s254 + $0x14] sm:$0xf]
      %v475 = vld [vmem:[%s254 + $0x18] sm:$0xf]
      %v476 = vld [vmem:[%s254 + $0x1c] sm:$0xf]
      %v477 = vld [vmem:[%s254 + $0x20] sm:$0xf]
      %v478 = vld [vmem:[%s254 + $0x24] sm:$0xf]
      %v479 = vld [vmem:[%s254 + $0x28] sm:$0xf]
      %v480 = vld [vmem:[%s254 + $0x2c] sm:$0xf]
      %v481 = vld [vmem:[%s254 + $0x30] sm:$0xf]
      %v482 = vld [vmem:[%s254 + $0x34] sm:$0xf]
      %v483 = vld [vmem:[%s254 + $0x38] sm:$0xf]
      %v484 = vld [vmem:[%s254 + $0x3c] sm:$0xf]
      %v485 = vld [vmem:[%s254 + $0x40] sm:$0xf]
      %v486 = vld [vmem:[%s254 + $0x44] sm:$0xf]
      %v487 = vld [vmem:[%s254 + $0x48] sm:$0xf]
      %v488 = vld [vmem:[%s254 + $0x4c] sm:$0xf]
      %v489 = vld [vmem:[%s254 + $0x50] sm:$0xf]
      %v490 = vld [vmem:[%s254 + $0x54] sm:$0xf]
      %v491 = vld [vmem:[%s254 + $0x58] sm:$0xf]
      %v492 = vld [vmem:[%s254 + $0x5c] sm:$0xf]
      %v493 = vld [vmem:[%s254 + $0x60] sm:$0xf]
      %v494 = vld [vmem:[%s254 + $0x64] sm:$0xf]
      %v495 = vld [vmem:[%s254 + $0x68] sm:$0xf]
      %v496 = vld [vmem:[%s254 + $0x6c] sm:$0xf]
      %v497 = vld [vmem:[%s254 + $0x70] sm:$0xf]
      %v498 = vld [vmem:[%s254 + $0x74] sm:$0xf]
      %v499 = vld [vmem:[%s254 + $0x78] sm:$0xf]
      %v500 = vld [vmem:[%s254 + $0x7c] sm:$0xf]
      %v565 = vunpack.c.l.b16 %v405
      %v566 = vunpack.c.h.b16 %v405
      %v567 = vunpack.c.l.b16 %v406
      %v568 = vunpack.c.h.b16 %v406
      %v569 = vunpack.c.l.b16 %v407
      %v570 = vunpack.c.h.b16 %v407
      %v571 = vunpack.c.l.b16 %v408
      %v572 = vunpack.c.h.b16 %v408
      %v573 = vunpack.c.l.b16 %v409
      %v574 = vunpack.c.h.b16 %v409
      %v575 = vunpack.c.l.b16 %v410
      %v576 = vunpack.c.h.b16 %v410
      %v577 = vunpack.c.l.b16 %v411
      %v578 = vunpack.c.h.b16 %v411
      %v579 = vunpack.c.l.b16 %v412
      %v580 = vunpack.c.h.b16 %v412
      %v581 = vunpack.c.l.b16 %v413
      %v582 = vunpack.c.h.b16 %v413
      %v583 = vunpack.c.l.b16 %v414
      %v584 = vunpack.c.h.b16 %v414
      %v585 = vunpack.c.l.b16 %v415
      %v586 = vunpack.c.h.b16 %v415
      %v587 = vunpack.c.l.b16 %v416
      %v588 = vunpack.c.h.b16 %v416
      %v589 = vunpack.c.l.b16 %v417
      %v590 = vunpack.c.h.b16 %v417
      %v591 = vunpack.c.l.b16 %v418
      %v592 = vunpack.c.h.b16 %v418
      %v593 = vunpack.c.l.b16 %v419
      %v594 = vunpack.c.h.b16 %v419
      %v595 = vunpack.c.l.b16 %v420
      %v596 = vunpack.c.h.b16 %v420
      %v597 = vunpack.c.l.b16 %v421
      %v598 = vunpack.c.h.b16 %v421
      %v599 = vunpack.c.l.b16 %v422
      %v600 = vunpack.c.h.b16 %v422
      %v601 = vunpack.c.l.b16 %v423
      %v602 = vunpack.c.h.b16 %v423
      %v603 = vunpack.c.l.b16 %v424
      %v604 = vunpack.c.h.b16 %v424
      %v605 = vunpack.c.l.b16 %v425
      %v606 = vunpack.c.h.b16 %v425
      %v607 = vunpack.c.l.b16 %v426
      %v608 = vunpack.c.h.b16 %v426
      %v609 = vunpack.c.l.b16 %v427
      %v610 = vunpack.c.h.b16 %v427
      %v611 = vunpack.c.l.b16 %v428
      %v612 = vunpack.c.h.b16 %v428
      %v613 = vunpack.c.l.b16 %v429
      %v614 = vunpack.c.h.b16 %v429
      %v615 = vunpack.c.l.b16 %v430
      %v616 = vunpack.c.h.b16 %v430
      %v617 = vunpack.c.l.b16 %v431
      %v618 = vunpack.c.h.b16 %v431
      %v619 = vunpack.c.l.b16 %v432
      %v620 = vunpack.c.h.b16 %v432
      %v621 = vunpack.c.l.b16 %v433
      %v622 = vunpack.c.h.b16 %v433
      %v623 = vunpack.c.l.b16 %v434
      %v624 = vunpack.c.h.b16 %v434
      %v625 = vunpack.c.l.b16 %v435
      %v626 = vunpack.c.h.b16 %v435
      %v627 = vunpack.c.l.b16 %v436
      %v628 = vunpack.c.h.b16 %v436
      %v629 = vunpack.c.l.b16 %v437
      %v630 = vunpack.c.h.b16 %v437
      %v631 = vunpack.c.l.b16 %v438
      %v632 = vunpack.c.h.b16 %v438
      %v633 = vunpack.c.l.b16 %v439
      %v634 = vunpack.c.h.b16 %v439
      %v635 = vunpack.c.l.b16 %v440
      %v636 = vunpack.c.h.b16 %v440
      %v637 = vunpack.c.l.b16 %v441
      %v638 = vunpack.c.h.b16 %v441
      %v639 = vunpack.c.l.b16 %v442
      %v640 = vunpack.c.h.b16 %v442
      %v641 = vunpack.c.l.b16 %v443
      %v642 = vunpack.c.h.b16 %v443
      %v643 = vunpack.c.l.b16 %v444
      %v644 = vunpack.c.h.b16 %v444
      %v645 = vunpack.c.l.b16 %v445
      %v646 = vunpack.c.h.b16 %v445
      %v647 = vunpack.c.l.b16 %v446
      %v648 = vunpack.c.h.b16 %v446
      %v649 = vunpack.c.l.b16 %v447
      %v650 = vunpack.c.h.b16 %v447
      %v651 = vunpack.c.l.b16 %v448
      %v652 = vunpack.c.h.b16 %v448
      %v653 = vunpack.c.l.b16 %v449
      %v654 = vunpack.c.h.b16 %v449
      %v655 = vunpack.c.l.b16 %v450
      %v656 = vunpack.c.h.b16 %v450
      %v657 = vunpack.c.l.b16 %v451
      %v658 = vunpack.c.h.b16 %v451
      %v659 = vunpack.c.l.b16 %v452
      %v660 = vunpack.c.h.b16 %v452
      %v661 = vunpack.c.l.b16 %v453
      %v662 = vunpack.c.h.b16 %v453
      %v663 = vunpack.c.l.b16 %v454
      %v664 = vunpack.c.h.b16 %v454
      %v665 = vunpack.c.l.b16 %v455
      %v666 = vunpack.c.h.b16 %v455
      %v667 = vunpack.c.l.b16 %v456
      %v668 = vunpack.c.h.b16 %v456
      %v669 = vunpack.c.l.b16 %v457
      %v670 = vunpack.c.h.b16 %v457
      %v671 = vunpack.c.l.b16 %v458
      %v672 = vunpack.c.h.b16 %v458
      %v673 = vunpack.c.l.b16 %v459
      %v674 = vunpack.c.h.b16 %v459
      %v675 = vunpack.c.l.b16 %v460
      %v676 = vunpack.c.h.b16 %v460
      %v677 = vunpack.c.l.b16 %v461
      %v678 = vunpack.c.h.b16 %v461
      %v679 = vunpack.c.l.b16 %v462
      %v680 = vunpack.c.h.b16 %v462
      %v681 = vunpack.c.l.b16 %v463
      %v682 = vunpack.c.h.b16 %v463
      %v683 = vunpack.c.l.b16 %v464
      %v684 = vunpack.c.h.b16 %v464
      %v685 = vunpack.c.l.b16 %v465
      %v686 = vunpack.c.h.b16 %v465
      %v687 = vunpack.c.l.b16 %v466
      %v688 = vunpack.c.h.b16 %v466
      %v689 = vunpack.c.l.b16 %v467
      %v690 = vunpack.c.h.b16 %v467
      %v691 = vunpack.c.l.b16 %v468
      %v692 = vunpack.c.h.b16 %v468
      %v693 = vpack.c.b16 %v567, %v565
      %v694 = vpack.c.b16 %v568, %v566
      %v695 = vpack.c.b16 %v571, %v569
      %v696 = vpack.c.b16 %v572, %v570
      %v697 = vpack.c.b16 %v575, %v573
      %v698 = vpack.c.b16 %v576, %v574
      %v699 = vpack.c.b16 %v579, %v577
      %v700 = vpack.c.b16 %v580, %v578
      %v701 = vpack.c.b16 %v583, %v581
      %v702 = vpack.c.b16 %v584, %v582
      %v703 = vpack.c.b16 %v587, %v585
      %v704 = vpack.c.b16 %v588, %v586
      %v705 = vpack.c.b16 %v591, %v589
      %v706 = vpack.c.b16 %v592, %v590
      %v707 = vpack.c.b16 %v595, %v593
      %v708 = vpack.c.b16 %v596, %v594
      %v709 = vpack.c.b16 %v599, %v597
      %v710 = vpack.c.b16 %v600, %v598
      %v711 = vpack.c.b16 %v603, %v601
      %v712 = vpack.c.b16 %v604, %v602
      %v713 = vpack.c.b16 %v607, %v605
      %v714 = vpack.c.b16 %v608, %v606
      %v715 = vpack.c.b16 %v611, %v609
      %v716 = vpack.c.b16 %v612, %v610
      %v717 = vpack.c.b16 %v615, %v613
      %v718 = vpack.c.b16 %v616, %v614
      %v719 = vpack.c.b16 %v619, %v617
      %v720 = vpack.c.b16 %v620, %v618
      %v721 = vpack.c.b16 %v623, %v621
      %v722 = vpack.c.b16 %v624, %v622
      %v723 = vpack.c.b16 %v627, %v625
      %v724 = vpack.c.b16 %v628, %v626
      %v725 = vpack.c.b16 %v631, %v629
      %v726 = vpack.c.b16 %v632, %v630
      %v727 = vpack.c.b16 %v635, %v633
      %v728 = vpack.c.b16 %v636, %v634
      %v729 = vpack.c.b16 %v639, %v637
      %v730 = vpack.c.b16 %v640, %v638
      %v731 = vpack.c.b16 %v643, %v641
      %v732 = vpack.c.b16 %v644, %v642
      %v733 = vpack.c.b16 %v647, %v645
      %v734 = vpack.c.b16 %v648, %v646
      %v735 = vpack.c.b16 %v651, %v649
      %v736 = vpack.c.b16 %v652, %v650
      %v737 = vpack.c.b16 %v655, %v653
      %v738 = vpack.c.b16 %v656, %v654
      %v739 = vpack.c.b16 %v659, %v657
      %v740 = vpack.c.b16 %v660, %v658
      %v741 = vpack.c.b16 %v663, %v661
      %v742 = vpack.c.b16 %v664, %v662
      %v743 = vpack.c.b16 %v667, %v665
      %v744 = vpack.c.b16 %v668, %v666
      %v745 = vpack.c.b16 %v671, %v669
      %v746 = vpack.c.b16 %v672, %v670
      %v747 = vpack.c.b16 %v675, %v673
      %v748 = vpack.c.b16 %v676, %v674
      %v749 = vpack.c.b16 %v679, %v677
      %v750 = vpack.c.b16 %v680, %v678
      %v751 = vpack.c.b16 %v683, %v681
      %v752 = vpack.c.b16 %v684, %v682
      %v753 = vpack.c.b16 %v687, %v685
      %v754 = vpack.c.b16 %v688, %v686
      %v755 = vpack.c.b16 %v691, %v689
      %v756 = vpack.c.b16 %v692, %v690
      %v853 = vunpack.c.l.b16 %v469
      %v854 = vunpack.c.l.b16 %v470
      %v855 = vunpack.c.l.b16 %v471
      %v856 = vunpack.c.l.b16 %v472
      %v857 = vunpack.c.l.b16 %v473
      %v858 = vunpack.c.l.b16 %v474
      %v859 = vunpack.c.l.b16 %v475
      %v860 = vunpack.c.l.b16 %v476
      %v861 = vunpack.c.l.b16 %v477
      %v862 = vunpack.c.l.b16 %v478
      %v863 = vunpack.c.l.b16 %v479
      %v864 = vunpack.c.l.b16 %v480
      %v865 = vunpack.c.l.b16 %v481
      %v866 = vunpack.c.l.b16 %v482
      %v867 = vunpack.c.l.b16 %v483
      %v868 = vunpack.c.l.b16 %v484
      %v869 = vunpack.c.l.b16 %v485
      %v870 = vunpack.c.l.b16 %v486
      %v871 = vunpack.c.l.b16 %v487
      %v872 = vunpack.c.l.b16 %v488
      %v873 = vunpack.c.l.b16 %v489
      %v874 = vunpack.c.l.b16 %v490
      %v875 = vunpack.c.l.b16 %v491
      %v876 = vunpack.c.l.b16 %v492
      %v877 = vunpack.c.l.b16 %v493
      %v878 = vunpack.c.l.b16 %v494
      %v879 = vunpack.c.l.b16 %v495
      %v880 = vunpack.c.l.b16 %v496
      %v881 = vunpack.c.l.b16 %v497
      %v882 = vunpack.c.l.b16 %v498
      %v883 = vunpack.c.l.b16 %v499
      %v884 = vunpack.c.l.b16 %v500
      %v885 = vpack.c.b16 %v854, %v853
      %v886 = vpack.c.b16 %v856, %v855
      %v887 = vpack.c.b16 %v858, %v857
      %v888 = vpack.c.b16 %v860, %v859
      %v889 = vpack.c.b16 %v862, %v861
      %v890 = vpack.c.b16 %v864, %v863
      %v891 = vpack.c.b16 %v866, %v865
      %v892 = vpack.c.b16 %v868, %v867
      %v893 = vpack.c.b16 %v870, %v869
      %v894 = vpack.c.b16 %v872, %v871
      %v895 = vpack.c.b16 %v874, %v873
      %v896 = vpack.c.b16 %v876, %v875
      %v897 = vpack.c.b16 %v878, %v877
      %v898 = vpack.c.b16 %v880, %v879
      %v899 = vpack.c.b16 %v882, %v881
      %v900 = vpack.c.b16 %v884, %v883
      %917 = vmatprep.subr.bf16.mxu0 0
      %918 = vmatpush1.bf16.msra.mxu0 %v885
      %919 = vmatprep.subr.bf16.mxu0 0
      %920 = vmatpush1.bf16.msra.mxu0 %v886
      %921 = vmatprep.subr.bf16.mxu0 0
      %922 = vmatpush1.bf16.msra.mxu0 %v887
      %923 = vmatprep.subr.bf16.mxu0 0
      %924 = vmatpush1.bf16.msra.mxu0 %v888
      %925 = vmatprep.subr.bf16.mxu0 0
      %926 = vmatpush1.bf16.msra.mxu0 %v889
      %927 = vmatprep.subr.bf16.mxu0 0
      %928 = vmatpush1.bf16.msra.mxu0 %v890
      %929 = vmatprep.subr.bf16.mxu0 0
      %930 = vmatpush1.bf16.msra.mxu0 %v891
      %931 = vmatprep.subr.bf16.mxu0 0
      %932 = vmatpush1.bf16.msra.mxu0 %v892
      %933 = vmatprep.subr.bf16.mxu0 0
      %934 = vmatpush1.bf16.msra.mxu0 %v893
      %935 = vmatprep.subr.bf16.mxu0 0
      %936 = vmatpush1.bf16.msra.mxu0 %v894
      %937 = vmatprep.subr.bf16.mxu0 0
      %938 = vmatpush1.bf16.msra.mxu0 %v895
      %939 = vmatprep.subr.bf16.mxu0 0
      %940 = vmatpush1.bf16.msra.mxu0 %v896
      %941 = vmatprep.subr.bf16.mxu0 0
      %942 = vmatpush1.bf16.msra.mxu0 %v897
      %943 = vmatprep.subr.bf16.mxu0 0
      %944 = vmatpush1.bf16.msra.mxu0 %v898
      %945 = vmatprep.subr.bf16.mxu0 0
      %946 = vmatpush1.bf16.msra.mxu0 %v899
      %947 = vmatprep.subr.bf16.mxu0 0
      %948 = vmatpush1.bf16.msra.mxu0 %v900
      %949 = vmatprep.mubr.bf16.mxu0 %v694
      %950 = vmatmul.mubr.bf16.gmra.mrb[0].mxu0 %v693
      %v951 = vpop.f32.mrb[0].mxu0
      %v952 = vadd.f32 0.0, %v951
      %v953 = vpop.f32.mrb[0].mxu0
      %v954 = vpop.f32.mrb[0].mxu0
      %v955 = vadd.f32 0.0, %v954
      %v956 = vpop.f32.mrb[0].mxu0
      %957 = vmatprep.mubr.bf16.mxu0 %v696
      %958 = vmatmul.mubr.bf16.gmra.mrb[0].mxu0 %v695
      %v959 = vpop.f32.mrb[0].mxu0
      %v960 = vadd.f32 0.0, %v959
      %v961 = vpop.f32.mrb[0].mxu0
      %v962 = vpop.f32.mrb[0].mxu0
      %v963 = vadd.f32 0.0, %v962
      %v964 = vpop.f32.mrb[0].mxu0
      %965 = vmatprep.mubr.bf16.mxu0 %v698
      %966 = vmatmul.mubr.bf16.gmra.mrb[0].mxu0 %v697
      %v967 = vpop.f32.mrb[0].mxu0
      %v968 = vadd.f32 0.0, %v967
      %v969 = vpop.f32.mrb[0].mxu0
      %v970 = vpop.f32.mrb[0].mxu0
      %v971 = vadd.f32 0.0, %v970
      %v972 = vpop.f32.mrb[0].mxu0
      %973 = vmatprep.mubr.bf16.mxu0 %v700
      %974 = vmatmul.mubr.bf16.gmra.mrb[0].mxu0 %v699
      %v975 = vpop.f32.mrb[0].mxu0
      %v976 = vadd.f32 0.0, %v975
      %v977 = vpop.f32.mrb[0].mxu0
      %v978 = vpop.f32.mrb[0].mxu0
      %v979 = vadd.f32 0.0, %v978
      %v980 = vpop.f32.mrb[0].mxu0
      %981 = vmatprep.mubr.bf16.mxu0 %v702
      %982 = vmatmul.mubr.bf16.gmra.mrb[0].mxu0 %v701
      %v983 = vpop.f32.mrb[0].mxu0
      %v984 = vadd.f32 0.0, %v983
      %v985 = vpop.f32.mrb[0].mxu0
      %v986 = vpop.f32.mrb[0].mxu0
      %v987 = vadd.f32 0.0, %v986
      %v988 = vpop.f32.mrb[0].mxu0
      %989 = vmatprep.mubr.bf16.mxu0 %v704
      %990 = vmatmul.mubr.bf16.gmra.mrb[0].mxu0 %v703
      %v991 = vpop.f32.mrb[0].mxu0
      %v992 = vadd.f32 0.0, %v991
      %v993 = vpop.f32.mrb[0].mxu0
      %v994 = vpop.f32.mrb[0].mxu0
      %v995 = vadd.f32 0.0, %v994
      %v996 = vpop.f32.mrb[0].mxu0
      %997 = vmatprep.mubr.bf16.mxu0 %v706
      %998 = vmatmul.mubr.bf16.gmra.mrb[0].mxu0 %v705
      %v999 = vpop.f32.mrb[0].mxu0
      %v1000 = vadd.f32 0.0, %v999
      %v1001 = vpop.f32.mrb[0].mxu0
      %v1002 = vpop.f32.mrb[0].mxu0
      %v1003 = vadd.f32 0.0, %v1002
      %v1004 = vpop.f32.mrb[0].mxu0
      %1005 = vmatprep.mubr.bf16.mxu0 %v708
      %1006 = vmatmul.mubr.bf16.gmra.mrb[0].mxu0 %v707
      %v1007 = vpop.f32.mrb[0].mxu0
      %v1008 = vadd.f32 0.0, %v1007
      %v1009 = vpop.f32.mrb[0].mxu0
      %v1010 = vpop.f32.mrb[0].mxu0
      %v1011 = vadd.f32 0.0, %v1010
      %v1012 = vpop.f32.mrb[0].mxu0
      %1013 = vmatprep.mubr.bf16.mxu0 %v710
      %1014 = vmatmul.mubr.bf16.gmra.mrb[0].mxu0 %v709
      %v1015 = vpop.f32.mrb[0].mxu0
      %v1016 = vadd.f32 0.0, %v1015
      %v1017 = vpop.f32.mrb[0].mxu0
      %v1018 = vpop.f32.mrb[0].mxu0
      %v1019 = vadd.f32 0.0, %v1018
      %v1020 = vpop.f32.mrb[0].mxu0
      %1021 = vmatprep.mubr.bf16.mxu0 %v712
      %1022 = vmatmul.mubr.bf16.gmra.mrb[0].mxu0 %v711
      %v1023 = vpop.f32.mrb[0].mxu0
      %v1024 = vadd.f32 0.0, %v1023
      %v1025 = vpop.f32.mrb[0].mxu0
      %v1026 = vpop.f32.mrb[0].mxu0
      %v1027 = vadd.f32 0.0, %v1026
      %v1028 = vpop.f32.mrb[0].mxu0
      %1029 = vmatprep.mubr.bf16.mxu0 %v714
      %1030 = vmatmul.mubr.bf16.gmra.mrb[0].mxu0 %v713
      %v1031 = vpop.f32.mrb[0].mxu0
      %v1032 = vadd.f32 0.0, %v1031
      %v1033 = vpop.f32.mrb[0].mxu0
      %v1034 = vpop.f32.mrb[0].mxu0
      %v1035 = vadd.f32 0.0, %v1034
      %v1036 = vpop.f32.mrb[0].mxu0
      %1037 = vmatprep.mubr.bf16.mxu0 %v716
      %1038 = vmatmul.mubr.bf16.gmra.mrb[0].mxu0 %v715
      %v1039 = vpop.f32.mrb[0].mxu0
      %v1040 = vadd.f32 0.0, %v1039
      %v1041 = vpop.f32.mrb[0].mxu0
      %v1042 = vpop.f32.mrb[0].mxu0
      %v1043 = vadd.f32 0.0, %v1042
      %v1044 = vpop.f32.mrb[0].mxu0
      %1045 = vmatprep.mubr.bf16.mxu0 %v718
      %1046 = vmatmul.mubr.bf16.gmra.mrb[0].mxu0 %v717
      %v1047 = vpop.f32.mrb[0].mxu0
      %v1048 = vadd.f32 0.0, %v1047
      %v1049 = vpop.f32.mrb[0].mxu0
      %v1050 = vpop.f32.mrb[0].mxu0
      %v1051 = vadd.f32 0.0, %v1050
      %v1052 = vpop.f32.mrb[0].mxu0
      %1053 = vmatprep.mubr.bf16.mxu0 %v720
      %1054 = vmatmul.mubr.bf16.gmra.mrb[0].mxu0 %v719
      %v1055 = vpop.f32.mrb[0].mxu0
      %v1056 = vadd.f32 0.0, %v1055
      %v1057 = vpop.f32.mrb[0].mxu0
      %v1058 = vpop.f32.mrb[0].mxu0
      %v1059 = vadd.f32 0.0, %v1058
      %v1060 = vpop.f32.mrb[0].mxu0
      %1061 = vmatprep.mubr.bf16.mxu0 %v722
      %1062 = vmatmul.mubr.bf16.gmra.mrb[0].mxu0 %v721
      %v1063 = vpop.f32.mrb[0].mxu0
      %v1064 = vadd.f32 0.0, %v1063
      %v1065 = vpop.f32.mrb[0].mxu0
      %v1066 = vpop.f32.mrb[0].mxu0
      %v1067 = vadd.f32 0.0, %v1066
      %v1068 = vpop.f32.mrb[0].mxu0
      %1069 = vmatprep.mubr.bf16.mxu0 %v724
      %1070 = vmatmul.mubr.bf16.gmra.mrb[0].mxu0 %v723
      %v1071 = vpop.f32.mrb[0].mxu0
      %v1072 = vadd.f32 0.0, %v1071
      %v1073 = vpop.f32.mrb[0].mxu0
      %v1074 = vpop.f32.mrb[0].mxu0
      %v1075 = vadd.f32 0.0, %v1074
      %v1076 = vpop.f32.mrb[0].mxu0
      %1077 = vmatprep.mubr.bf16.mxu0 %v726
      %1078 = vmatmul.mubr.bf16.gmra.mrb[0].mxu0 %v725
      %v1079 = vpop.f32.mrb[0].mxu0
      %v1080 = vadd.f32 0.0, %v1079
      %v1081 = vpop.f32.mrb[0].mxu0
      %v1082 = vpop.f32.mrb[0].mxu0
      %v1083 = vadd.f32 0.0, %v1082
      %v1084 = vpop.f32.mrb[0].mxu0
      %1085 = vmatprep.mubr.bf16.mxu0 %v728
      %1086 = vmatmul.mubr.bf16.gmra.mrb[0].mxu0 %v727
      %v1087 = vpop.f32.mrb[0].mxu0
      %v1088 = vadd.f32 0.0, %v1087
      %v1089 = vpop.f32.mrb[0].mxu0
      %v1090 = vpop.f32.mrb[0].mxu0
      %v1091 = vadd.f32 0.0, %v1090
      %v1092 = vpop.f32.mrb[0].mxu0
      %1093 = vmatprep.mubr.bf16.mxu0 %v730
      %1094 = vmatmul.mubr.bf16.gmra.mrb[0].mxu0 %v729
      %v1095 = vpop.f32.mrb[0].mxu0
      %v1096 = vadd.f32 0.0, %v1095
      %v1097 = vpop.f32.mrb[0].mxu0
      %v1098 = vpop.f32.mrb[0].mxu0
      %v1099 = vadd.f32 0.0, %v1098
      %v1100 = vpop.f32.mrb[0].mxu0
      %1101 = vmatprep.mubr.bf16.mxu0 %v732
      %1102 = vmatmul.mubr.bf16.gmra.mrb[0].mxu0 %v731
      %v1103 = vpop.f32.mrb[0].mxu0
      %v1104 = vadd.f32 0.0, %v1103
      %v1105 = vpop.f32.mrb[0].mxu0
      %v1106 = vpop.f32.mrb[0].mxu0
      %v1107 = vadd.f32 0.0, %v1106
      %v1108 = vpop.f32.mrb[0].mxu0
      %1109 = vmatprep.mubr.bf16.mxu0 %v734
      %1110 = vmatmul.mubr.bf16.gmra.mrb[0].mxu0 %v733
      %v1111 = vpop.f32.mrb[0].mxu0
      %v1112 = vadd.f32 0.0, %v1111
      %v1113 = vpop.f32.mrb[0].mxu0
      %v1114 = vpop.f32.mrb[0].mxu0
      %v1115 = vadd.f32 0.0, %v1114
      %v1116 = vpop.f32.mrb[0].mxu0
      %1117 = vmatprep.mubr.bf16.mxu0 %v736
      %1118 = vmatmul.mubr.bf16.gmra.mrb[0].mxu0 %v735
      %v1119 = vpop.f32.mrb[0].mxu0
      %v1120 = vadd.f32 0.0, %v1119
      %v1121 = vpop.f32.mrb[0].mxu0
      %v1122 = vpop.f32.mrb[0].mxu0
      %v1123 = vadd.f32 0.0, %v1122
      %v1124 = vpop.f32.mrb[0].mxu0
      %1125 = vmatprep.mubr.bf16.mxu0 %v738
      %1126 = vmatmul.mubr.bf16.gmra.mrb[0].mxu0 %v737
      %v1127 = vpop.f32.mrb[0].mxu0
      %v1128 = vadd.f32 0.0, %v1127
      %v1129 = vpop.f32.mrb[0].mxu0
      %v1130 = vpop.f32.mrb[0].mxu0
      %v1131 = vadd.f32 0.0, %v1130
      %v1132 = vpop.f32.mrb[0].mxu0
      %1133 = vmatprep.mubr.bf16.mxu0 %v740
      %1134 = vmatmul.mubr.bf16.gmra.mrb[0].mxu0 %v739
      %v1135 = vpop.f32.mrb[0].mxu0
      %v1136 = vadd.f32 0.0, %v1135
      %v1137 = vpop.f32.mrb[0].mxu0
      %v1138 = vpop.f32.mrb[0].mxu0
      %v1139 = vadd.f32 0.0, %v1138
      %v1140 = vpop.f32.mrb[0].mxu0
      %1141 = vmatprep.mubr.bf16.mxu0 %v742
      %1142 = vmatmul.mubr.bf16.gmra.mrb[0].mxu0 %v741
      %v1143 = vpop.f32.mrb[0].mxu0
      %v1144 = vadd.f32 0.0, %v1143
      %v1145 = vpop.f32.mrb[0].mxu0
      %v1146 = vpop.f32.mrb[0].mxu0
      %v1147 = vadd.f32 0.0, %v1146
      %v1148 = vpop.f32.mrb[0].mxu0
      %1149 = vmatprep.mubr.bf16.mxu0 %v744
      %1150 = vmatmul.mubr.bf16.gmra.mrb[0].mxu0 %v743
      %v1151 = vpop.f32.mrb[0].mxu0
      %v1152 = vadd.f32 0.0, %v1151
      %v1153 = vpop.f32.mrb[0].mxu0
      %v1154 = vpop.f32.mrb[0].mxu0
      %v1155 = vadd.f32 0.0, %v1154
      %v1156 = vpop.f32.mrb[0].mxu0
      %1157 = vmatprep.mubr.bf16.mxu0 %v746
      %1158 = vmatmul.mubr.bf16.gmra.mrb[0].mxu0 %v745
      %v1159 = vpop.f32.mrb[0].mxu0
      %v1160 = vadd.f32 0.0, %v1159
      %v1161 = vpop.f32.mrb[0].mxu0
      %v1162 = vpop.f32.mrb[0].mxu0
      %v1163 = vadd.f32 0.0, %v1162
      %v1164 = vpop.f32.mrb[0].mxu0
      %1165 = vmatprep.mubr.bf16.mxu0 %v748
      %1166 = vmatmul.mubr.bf16.gmra.mrb[0].mxu0 %v747
      %v1167 = vpop.f32.mrb[0].mxu0
      %v1168 = vadd.f32 0.0, %v1167
      %v1169 = vpop.f32.mrb[0].mxu0
      %v1170 = vpop.f32.mrb[0].mxu0
      %v1171 = vadd.f32 0.0, %v1170
      %v1172 = vpop.f32.mrb[0].mxu0
      %1173 = vmatprep.mubr.bf16.mxu0 %v750
      %1174 = vmatmul.mubr.bf16.gmra.mrb[0].mxu0 %v749
      %v1175 = vpop.f32.mrb[0].mxu0
      %v1176 = vadd.f32 0.0, %v1175
      %v1177 = vpop.f32.mrb[0].mxu0
      %v1178 = vpop.f32.mrb[0].mxu0
      %v1179 = vadd.f32 0.0, %v1178
      %v1180 = vpop.f32.mrb[0].mxu0
      %1181 = vmatprep.mubr.bf16.mxu0 %v752
      %1182 = vmatmul.mubr.bf16.gmra.mrb[0].mxu0 %v751
      %v1183 = vpop.f32.mrb[0].mxu0
      %v1184 = vadd.f32 0.0, %v1183
      %v1185 = vpop.f32.mrb[0].mxu0
      %v1186 = vpop.f32.mrb[0].mxu0
      %v1187 = vadd.f32 0.0, %v1186
      %v1188 = vpop.f32.mrb[0].mxu0
      %1189 = vmatprep.mubr.bf16.mxu0 %v754
      %1190 = vmatmul.mubr.bf16.gmra.mrb[0].mxu0 %v753
      %v1191 = vpop.f32.mrb[0].mxu0
      %v1192 = vadd.f32 0.0, %v1191
      %v1193 = vpop.f32.mrb[0].mxu0
      %v1194 = vpop.f32.mrb[0].mxu0
      %v1195 = vadd.f32 0.0, %v1194
      %v1196 = vpop.f32.mrb[0].mxu0
      %1197 = vmatprep.mubr.bf16.mxu0 %v756
      %1198 = vmatmul.mubr.bf16.gmra.mrb[0].mxu0 %v755
      %v1199 = vpop.f32.mrb[0].mxu0
      %v1200 = vadd.f32 0.0, %v1199
      %v1201 = vpop.f32.mrb[0].mxu0
      %v1202 = vpop.f32.mrb[0].mxu0
      %v1203 = vadd.f32 0.0, %v1202
      %v1204 = vpop.f32.mrb[0].mxu0
      %1205 = vdwg.mxu0
      %v1206 = vadd.f32 %v341, %v952
      %v1207 = vadd.f32 %v342, %v955
      %v1208 = vadd.f32 %v343, %v960
      %v1209 = vadd.f32 %v344, %v963
      %v1210 = vadd.f32 %v345, %v968
      %v1211 = vadd.f32 %v346, %v971
      %v1212 = vadd.f32 %v347, %v976
      %v1213 = vadd.f32 %v348, %v979
      %v1214 = vadd.f32 %v349, %v984
      %v1215 = vadd.f32 %v350, %v987
      %v1216 = vadd.f32 %v351, %v992
      %v1217 = vadd.f32 %v352, %v995
      %v1218 = vadd.f32 %v353, %v1000
      %v1219 = vadd.f32 %v354, %v1003
      %v1220 = vadd.f32 %v355, %v1008
      %v1221 = vadd.f32 %v356, %v1011
      %v1222 = vadd.f32 %v357, %v1016
      %v1223 = vadd.f32 %v358, %v1019
      %v1224 = vadd.f32 %v359, %v1024
      %v1225 = vadd.f32 %v360, %v1027
      %v1226 = vadd.f32 %v361, %v1032
      %v1227 = vadd.f32 %v362, %v1035
      %v1228 = vadd.f32 %v363, %v1040
      %v1229 = vadd.f32 %v364, %v1043
      %v1230 = vadd.f32 %v365, %v1048
      %v1231 = vadd.f32 %v366, %v1051
      %v1232 = vadd.f32 %v367, %v1056
      %v1233 = vadd.f32 %v368, %v1059
      %v1234 = vadd.f32 %v369, %v1064
      %v1235 = vadd.f32 %v370, %v1067
      %v1236 = vadd.f32 %v371, %v1072
      %v1237 = vadd.f32 %v372, %v1075
      %v1238 = vadd.f32 %v373, %v1080
      %v1239 = vadd.f32 %v374, %v1083
      %v1240 = vadd.f32 %v375, %v1088
      %v1241 = vadd.f32 %v376, %v1091
      %v1242 = vadd.f32 %v377, %v1096
      %v1243 = vadd.f32 %v378, %v1099
      %v1244 = vadd.f32 %v379, %v1104
      %v1245 = vadd.f32 %v380, %v1107
      %v1246 = vadd.f32 %v381, %v1112
      %v1247 = vadd.f32 %v382, %v1115
      %v1248 = vadd.f32 %v383, %v1120
      %v1249 = vadd.f32 %v384, %v1123
      %v1250 = vadd.f32 %v385, %v1128
      %v1251 = vadd.f32 %v386, %v1131
      %v1252 = vadd.f32 %v387, %v1136
      %v1253 = vadd.f32 %v388, %v1139
      %v1254 = vadd.f32 %v389, %v1144
      %v1255 = vadd.f32 %v390, %v1147
      %v1256 = vadd.f32 %v391, %v1152
      %v1257 = vadd.f32 %v392, %v1155
      %v1258 = vadd.f32 %v393, %v1160
      %v1259 = vadd.f32 %v394, %v1163
      %v1260 = vadd.f32 %v395, %v1168
      %v1261 = vadd.f32 %v396, %v1171
      %v1262 = vadd.f32 %v397, %v1176
      %v1263 = vadd.f32 %v398, %v1179
      %v1264 = vadd.f32 %v399, %v1184
      %v1265 = vadd.f32 %v400, %v1187
      %v1266 = vadd.f32 %v401, %v1192
      %v1267 = vadd.f32 %v402, %v1195
      %v1268 = vadd.f32 %v403, %v1200
      %v1269 = vadd.f32 %v404, %v1203
      %1270 = vst [vmem:[#allocation2] sm:$0xff] %v1206
      %1271 = vst [vmem:[#allocation2 + $0x8] sm:$0xff] %v1207
      %1272 = vst [vmem:[#allocation2 + $0x10] sm:$0xff] %v1208
      %1273 = vst [vmem:[#allocation2 + $0x18] sm:$0xff] %v1209
      %1274 = vst [vmem:[#allocation2 + $0x20] sm:$0xff] %v1210
      %1275 = vst [vmem:[#allocation2 + $0x28] sm:$0xff] %v1211
      %1276 = vst [vmem:[#allocation2 + $0x30] sm:$0xff] %v1212
      %1277 = vst [vmem:[#allocation2 + $0x38] sm:$0xff] %v1213
      %1278 = vst [vmem:[#allocation2 + $0x40] sm:$0xff] %v1214
      %1279 = vst [vmem:[#allocation2 + $0x48] sm:$0xff] %v1215
      %1280 = vst [vmem:[#allocation2 + $0x50] sm:$0xff] %v1216
      %1281 = vst [vmem:[#allocation2 + $0x58] sm:$0xff] %v1217
      %1282 = vst [vmem:[#allocation2 + $0x60] sm:$0xff] %v1218
      %1283 = vst [vmem:[#allocation2 + $0x68] sm:$0xff] %v1219
      %1284 = vst [vmem:[#allocation2 + $0x70] sm:$0xff] %v1220
      %1285 = vst [vmem:[#allocation2 + $0x78] sm:$0xff] %v1221
      %1286 = vst [vmem:[#allocation2 + $0x80] sm:$0xff] %v1222
      %1287 = vst [vmem:[#allocation2 + $0x88] sm:$0xff] %v1223
      %1288 = vst [vmem:[#allocation2 + $0x90] sm:$0xff] %v1224
      %1289 = vst [vmem:[#allocation2 + $0x98] sm:$0xff] %v1225
      %1290 = vst [vmem:[#allocation2 + $0xa0] sm:$0xff] %v1226
      %1291 = vst [vmem:[#allocation2 + $0xa8] sm:$0xff] %v1227
      %1292 = vst [vmem:[#allocation2 + $0xb0] sm:$0xff] %v1228
      %1293 = vst [vmem:[#allocation2 + $0xb8] sm:$0xff] %v1229
      %1294 = vst [vmem:[#allocation2 + $0xc0] sm:$0xff] %v1230
      %1295 = vst [vmem:[#allocation2 + $0xc8] sm:$0xff] %v1231
      %1296 = vst [vmem:[#allocation2 + $0xd0] sm:$0xff] %v1232
      %1297 = vst [vmem:[#allocation2 + $0xd8] sm:$0xff] %v1233
      %1298 = vst [vmem:[#allocation2 + $0xe0] sm:$0xff] %v1234
      %1299 = vst [vmem:[#allocation2 + $0xe8] sm:$0xff] %v1235
      %1300 = vst [vmem:[#allocation2 + $0xf0] sm:$0xff] %v1236
      %1301 = vst [vmem:[#allocation2 + $0xf8] sm:$0xff] %v1237
      %1302 = vst [vmem:[#allocation2 + $0x100] sm:$0xff] %v1238
      %1303 = vst [vmem:[#allocation2 + $0x108] sm:$0xff] %v1239
      %1304 = vst [vmem:[#allocation2 + $0x110] sm:$0xff] %v1240
      %1305 = vst [vmem:[#allocation2 + $0x118] sm:$0xff] %v1241
      %1306 = vst [vmem:[#allocation2 + $0x120] sm:$0xff] %v1242
      %1307 = vst [vmem:[#allocation2 + $0x128] sm:$0xff] %v1243
      %1308 = vst [vmem:[#allocation2 + $0x130] sm:$0xff] %v1244
      %1309 = vst [vmem:[#allocation2 + $0x138] sm:$0xff] %v1245
      %1310 = vst [vmem:[#allocation2 + $0x140] sm:$0xff] %v1246
      %1311 = vst [vmem:[#allocation2 + $0x148] sm:$0xff] %v1247
      %1312 = vst [vmem:[#allocation2 + $0x150] sm:$0xff] %v1248
      %1313 = vst [vmem:[#allocation2 + $0x158] sm:$0xff] %v1249
      %1314 = vst [vmem:[#allocation2 + $0x160] sm:$0xff] %v1250
      %1315 = vst [vmem:[#allocation2 + $0x168] sm:$0xff] %v1251
      %1316 = vst [vmem:[#allocation2 + $0x170] sm:$0xff] %v1252
      %1317 = vst [vmem:[#allocation2 + $0x178] sm:$0xff] %v1253
      %1318 = vst [vmem:[#allocation2 + $0x180] sm:$0xff] %v1254
      %1319 = vst [vmem:[#allocation2 + $0x188] sm:$0xff] %v1255
      %1320 = vst [vmem:[#allocation2 + $0x190] sm:$0xff] %v1256
      %1321 = vst [vmem:[#allocation2 + $0x198] sm:$0xff] %v1257
      %1322 = vst [vmem:[#allocation2 + $0x1a0] sm:$0xff] %v1258
      %1323 = vst [vmem:[#allocation2 + $0x1a8] sm:$0xff] %v1259
      %1324 = vst [vmem:[#allocation2 + $0x1b0] sm:$0xff] %v1260
      %1325 = vst [vmem:[#allocation2 + $0x1b8] sm:$0xff] %v1261
      %1326 = vst [vmem:[#allocation2 + $0x1c0] sm:$0xff] %v1262
      %1327 = vst [vmem:[#allocation2 + $0x1c8] sm:$0xff] %v1263
      %1328 = vst [vmem:[#allocation2 + $0x1d0] sm:$0xff] %v1264
      %1329 = vst [vmem:[#allocation2 + $0x1d8] sm:$0xff] %v1265
      %1330 = vst [vmem:[#allocation2 + $0x1e0] sm:$0xff] %v1266
      %1331 = vst [vmem:[#allocation2 + $0x1e8] sm:$0xff] %v1267
      %1332 = vst [vmem:[#allocation2 + $0x1f0] sm:$0xff] %v1268
      %1333 = vst [vmem:[#allocation2 + $0x1f8] sm:$0xff] %v1269
      // Predicated region
      $region33: #{conv_bn_act.2} parent=27 // pred_check
        %p1334 = pneg %p273
      $region34: #{conv_bn_act.2} parent=27 // pred_check_branch
        %1336 = sbr.rel (%p1334) target = $region36
      $region35: #{conv_bn_act.2} parent=27 // pred_region
        %v1337 = vld [vmem:[#allocation2] sm:$0xff]
        %v1338 = vld [vmem:[#allocation2 + $0x8] sm:$0xff]
        %v1339 = vld [vmem:[#allocation2 + $0x10] sm:$0xff]
        %v1340 = vld [vmem:[#allocation2 + $0x18] sm:$0xff]
        %v1341 = vld [vmem:[#allocation2 + $0x20] sm:$0xff]
        %v1342 = vld [vmem:[#allocation2 + $0x28] sm:$0xff]
        %v1343 = vld [vmem:[#allocation2 + $0x30] sm:$0xff]
        %v1344 = vld [vmem:[#allocation2 + $0x38] sm:$0xff]
        %v1345 = vld [vmem:[#allocation2 + $0x40] sm:$0xff]
        %v1346 = vld [vmem:[#allocation2 + $0x48] sm:$0xff]
        %v1347 = vld [vmem:[#allocation2 + $0x50] sm:$0xff]
        %v1348 = vld [vmem:[#allocation2 + $0x58] sm:$0xff]
        %v1349 = vld [vmem:[#allocation2 + $0x60] sm:$0xff]
        %v1350 = vld [vmem:[#allocation2 + $0x68] sm:$0xff]
        %v1351 = vld [vmem:[#allocation2 + $0x70] sm:$0xff]
        %v1352 = vld [vmem:[#allocation2 + $0x78] sm:$0xff]
        %v1353 = vld [vmem:[#allocation2 + $0x80] sm:$0xff]
        %v1354 = vld [vmem:[#allocation2 + $0x88] sm:$0xff]
        %v1355 = vld [vmem:[#allocation2 + $0x90] sm:$0xff]
        %v1356 = vld [vmem:[#allocation2 + $0x98] sm:$0xff]
        %v1357 = vld [vmem:[#allocation2 + $0xa0] sm:$0xff]
        %v1358 = vld [vmem:[#allocation2 + $0xa8] sm:$0xff]
        %v1359 = vld [vmem:[#allocation2 + $0xb0] sm:$0xff]
        %v1360 = vld [vmem:[#allocation2 + $0xb8] sm:$0xff]
        %v1361 = vld [vmem:[#allocation2 + $0xc0] sm:$0xff]
        %v1362 = vld [vmem:[#allocation2 + $0xc8] sm:$0xff]
        %v1363 = vld [vmem:[#allocation2 + $0xd0] sm:$0xff]
        %v1364 = vld [vmem:[#allocation2 + $0xd8] sm:$0xff]
        %v1365 = vld [vmem:[#allocation2 + $0xe0] sm:$0xff]
        %v1366 = vld [vmem:[#allocation2 + $0xe8] sm:$0xff]
        %v1367 = vld [vmem:[#allocation2 + $0xf0] sm:$0xff]
        %v1368 = vld [vmem:[#allocation2 + $0xf8] sm:$0xff]
        %v1369 = vld [vmem:[#allocation2 + $0x100] sm:$0xff]
        %v1370 = vld [vmem:[#allocation2 + $0x108] sm:$0xff]
        %v1371 = vld [vmem:[#allocation2 + $0x110] sm:$0xff]
        %v1372 = vld [vmem:[#allocation2 + $0x118] sm:$0xff]
        %v1373 = vld [vmem:[#allocation2 + $0x120] sm:$0xff]
        %v1374 = vld [vmem:[#allocation2 + $0x128] sm:$0xff]
        %v1375 = vld [vmem:[#allocation2 + $0x130] sm:$0xff]
        %v1376 = vld [vmem:[#allocation2 + $0x138] sm:$0xff]
        %v1377 = vld [vmem:[#allocation2 + $0x140] sm:$0xff]
        %v1378 = vld [vmem:[#allocation2 + $0x148] sm:$0xff]
        %v1379 = vld [vmem:[#allocation2 + $0x150] sm:$0xff]
        %v1380 = vld [vmem:[#allocation2 + $0x158] sm:$0xff]
        %v1381 = vld [vmem:[#allocation2 + $0x160] sm:$0xff]
        %v1382 = vld [vmem:[#allocation2 + $0x168] sm:$0xff]
        %v1383 = vld [vmem:[#allocation2 + $0x170] sm:$0xff]
        %v1384 = vld [vmem:[#allocation2 + $0x178] sm:$0xff]
        %v1385 = vld [vmem:[#allocation2 + $0x180] sm:$0xff]
        %v1386 = vld [vmem:[#allocation2 + $0x188] sm:$0xff]
        %v1387 = vld [vmem:[#allocation2 + $0x190] sm:$0xff]
        %v1388 = vld [vmem:[#allocation2 + $0x198] sm:$0xff]
        %v1389 = vld [vmem:[#allocation2 + $0x1a0] sm:$0xff]
        %v1390 = vld [vmem:[#allocation2 + $0x1a8] sm:$0xff]
        %v1391 = vld [vmem:[#allocation2 + $0x1b0] sm:$0xff]
        %v1392 = vld [vmem:[#allocation2 + $0x1b8] sm:$0xff]
        %v1393 = vld [vmem:[#allocation2 + $0x1c0] sm:$0xff]
        %v1394 = vld [vmem:[#allocation2 + $0x1c8] sm:$0xff]
        %v1395 = vld [vmem:[#allocation2 + $0x1d0] sm:$0xff]
        %v1396 = vld [vmem:[#allocation2 + $0x1d8] sm:$0xff]
        %v1397 = vld [vmem:[#allocation2 + $0x1e0] sm:$0xff]
        %v1398 = vld [vmem:[#allocation2 + $0x1e8] sm:$0xff]
        %v1399 = vld [vmem:[#allocation2 + $0x1f0] sm:$0xff]
        %v1400 = vld [vmem:[#allocation2 + $0x1f8] sm:$0xff]
        %v1401 = vadd.f32 %v1337, %v1338
        %v1402 = vadd.f32 %v1401, %v1339
        %v1403 = vadd.f32 %v1402, %v1340
        %v1404 = vadd.f32 %v1403, %v1341
        %v1405 = vadd.f32 %v1404, %v1342
        %v1406 = vadd.f32 %v1405, %v1343
        %v1407 = vadd.f32 %v1406, %v1344
        %v1408 = vadd.f32 %v1407, %v1345
        %v1409 = vadd.f32 %v1408, %v1346
        %v1410 = vadd.f32 %v1409, %v1347
        %v1411 = vadd.f32 %v1410, %v1348
        %v1412 = vadd.f32 %v1411, %v1349
        %v1413 = vadd.f32 %v1412, %v1350
        %v1414 = vadd.f32 %v1413, %v1351
        %v1415 = vadd.f32 %v1414, %v1352
        %v1416 = vadd.f32 %v1415, %v1353
        %v1417 = vadd.f32 %v1416, %v1354
        %v1418 = vadd.f32 %v1417, %v1355
        %v1419 = vadd.f32 %v1418, %v1356
        %v1420 = vadd.f32 %v1419, %v1357
        %v1421 = vadd.f32 %v1420, %v1358
        %v1422 = vadd.f32 %v1421, %v1359
        %v1423 = vadd.f32 %v1422, %v1360
        %v1424 = vadd.f32 %v1423, %v1361
        %v1425 = vadd.f32 %v1424, %v1362
        %v1426 = vadd.f32 %v1425, %v1363
        %v1427 = vadd.f32 %v1426, %v1364
        %v1428 = vadd.f32 %v1427, %v1365
        %v1429 = vadd.f32 %v1428, %v1366
        %v1430 = vadd.f32 %v1429, %v1367
        %v1431 = vadd.f32 %v1430, %v1368
        %v1432 = vadd.f32 %v1431, %v1369
        %v1433 = vadd.f32 %v1432, %v1370
        %v1434 = vadd.f32 %v1433, %v1371
        %v1435 = vadd.f32 %v1434, %v1372
        %v1436 = vadd.f32 %v1435, %v1373
        %v1437 = vadd.f32 %v1436, %v1374
        %v1438 = vadd.f32 %v1437, %v1375
        %v1439 = vadd.f32 %v1438, %v1376
        %v1440 = vadd.f32 %v1439, %v1377
        %v1441 = vadd.f32 %v1440, %v1378
        %v1442 = vadd.f32 %v1441, %v1379
        %v1443 = vadd.f32 %v1442, %v1380
        %v1444 = vadd.f32 %v1443, %v1381
        %v1445 = vadd.f32 %v1444, %v1382
        %v1446 = vadd.f32 %v1445, %v1383
        %v1447 = vadd.f32 %v1446, %v1384
        %v1448 = vadd.f32 %v1447, %v1385
        %v1449 = vadd.f32 %v1448, %v1386
        %v1450 = vadd.f32 %v1449, %v1387
        %v1451 = vadd.f32 %v1450, %v1388
        %v1452 = vadd.f32 %v1451, %v1389
        %v1453 = vadd.f32 %v1452, %v1390
        %v1454 = vadd.f32 %v1453, %v1391
        %v1455 = vadd.f32 %v1454, %v1392
        %v1456 = vadd.f32 %v1455, %v1393
        %v1457 = vadd.f32 %v1456, %v1394
        %v1458 = vadd.f32 %v1457, %v1395
        %v1459 = vadd.f32 %v1458, %v1396
        %v1460 = vadd.f32 %v1459, %v1397
        %v1461 = vadd.f32 %v1460, %v1398
        %v1462 = vadd.f32 %v1461, %v1399
        %v1463 = vadd.f32 %v1462, %v1400
        %v1464 = vrot.slane %v1463, 4
        %v1465 = vadd.f32 %v1463, %v1464
        %v1466 = vrot.slane %v1465, 2
        %v1467 = vadd.f32 %v1465, %v1466
        %v1468 = vrot.slane %v1467, 1
        %v1469 = vadd.f32 %v1467, %v1468
        %v1470 = vmul.f32 %v1469, 0.001953125
        %v1471 = vsub.f32 %v1337, %v1470
        %v1472 = vsub.f32 %v1338, %v1470
        %v1473 = vsub.f32 %v1339, %v1470
        %v1474 = vsub.f32 %v1340, %v1470
        %v1475 = vsub.f32 %v1341, %v1470
        %v1476 = vsub.f32 %v1342, %v1470
        %v1477 = vsub.f32 %v1343, %v1470
        %v1478 = vsub.f32 %v1344, %v1470
        %v1479 = vsub.f32 %v1345, %v1470
        %v1480 = vsub.f32 %v1346, %v1470
        %v1481 = vsub.f32 %v1347, %v1470
        %v1482 = vsub.f32 %v1348, %v1470
        %v1483 = vsub.f32 %v1349, %v1470
        %v1484 = vsub.f32 %v1350, %v1470
        %v1485 = vsub.f32 %v1351, %v1470
        %v1486 = vsub.f32 %v1352, %v1470
        %v1487 = vsub.f32 %v1353, %v1470
        %v1488 = vsub.f32 %v1354, %v1470
        %v1489 = vsub.f32 %v1355, %v1470
        %v1490 = vsub.f32 %v1356, %v1470
        %v1491 = vsub.f32 %v1357, %v1470
        %v1492 = vsub.f32 %v1358, %v1470
        %v1493 = vsub.f32 %v1359, %v1470
        %v1494 = vsub.f32 %v1360, %v1470
        %v1495 = vsub.f32 %v1361, %v1470
        %v1496 = vsub.f32 %v1362, %v1470
        %v1497 = vsub.f32 %v1363, %v1470
        %v1498 = vsub.f32 %v1364, %v1470
        %v1499 = vsub.f32 %v1365, %v1470
        %v1500 = vsub.f32 %v1366, %v1470
        %v1501 = vsub.f32 %v1367, %v1470
        %v1502 = vsub.f32 %v1368, %v1470
        %v1503 = vsub.f32 %v1369, %v1470
        %v1504 = vsub.f32 %v1370, %v1470
        %v1505 = vsub.f32 %v1371, %v1470
        %v1506 = vsub.f32 %v1372, %v1470
        %v1507 = vsub.f32 %v1373, %v1470
        %v1508 = vsub.f32 %v1374, %v1470
        %v1509 = vsub.f32 %v1375, %v1470
        %v1510 = vsub.f32 %v1376, %v1470
        %v1511 = vsub.f32 %v1377, %v1470
        %v1512 = vsub.f32 %v1378, %v1470
        %v1513 = vsub.f32 %v1379, %v1470
        %v1514 = vsub.f32 %v1380, %v1470
        %v1515 = vsub.f32 %v1381, %v1470
        %v1516 = vsub.f32 %v1382, %v1470
        %v1517 = vsub.f32 %v1383, %v1470
        %v1518 = vsub.f32 %v1384, %v1470
        %v1519 = vsub.f32 %v1385, %v1470
        %v1520 = vsub.f32 %v1386, %v1470
        %v1521 = vsub.f32 %v1387, %v1470
        %v1522 = vsub.f32 %v1388, %v1470
        %v1523 = vsub.f32 %v1389, %v1470
        %v1524 = vsub.f32 %v1390, %v1470
        %v1525 = vsub.f32 %v1391, %v1470
        %v1526 = vsub.f32 %v1392, %v1470
        %v1527 = vsub.f32 %v1393, %v1470
        %v1528 = vsub.f32 %v1394, %v1470
        %v1529 = vsub.f32 %v1395, %v1470
        %v1530 = vsub.f32 %v1396, %v1470
        %v1531 = vsub.f32 %v1397, %v1470
        %v1532 = vsub.f32 %v1398, %v1470
        %v1533 = vsub.f32 %v1399, %v1470
        %v1534 = vsub.f32 %v1400, %v1470
        %v1535 = vmul.f32 %v1471, %v1471
        %v1536 = vmul.f32 %v1472, %v1472
        %v1537 = vmul.f32 %v1473, %v1473
        %v1538 = vmul.f32 %v1474, %v1474
        %v1539 = vmul.f32 %v1475, %v1475
        %v1540 = vmul.f32 %v1476, %v1476
        %v1541 = vmul.f32 %v1477, %v1477
        %v1542 = vmul.f32 %v1478, %v1478
        %v1543 = vmul.f32 %v1479, %v1479
        %v1544 = vmul.f32 %v1480, %v1480
        %v1545 = vmul.f32 %v1481, %v1481
        %v1546 = vmul.f32 %v1482, %v1482
        %v1547 = vmul.f32 %v1483, %v1483
        %v1548 = vmul.f32 %v1484, %v1484
        %v1549 = vmul.f32 %v1485, %v1485
        %v1550 = vmul.f32 %v1486, %v1486
        %v1551 = vmul.f32 %v1487, %v1487
        %v1552 = vmul.f32 %v1488, %v1488
        %v1553 = vmul.f32 %v1489, %v1489
        %v1554 = vmul.f32 %v1490, %v1490
        %v1555 = vmul.f32 %v1491, %v1491
        %v1556 = vmul.f32 %v1492, %v1492
        %v1557 = vmul.f32 %v1493, %v1493
        %v1558 = vmul.f32 %v1494, %v1494
        %v1559 = vmul.f32 %v1495, %v1495
        %v1560 = vmul.f32 %v1496, %v1496
        %v1561 = vmul.f32 %v1497, %v1497
        %v1562 = vmul.f32 %v1498, %v1498
        %v1563 = vmul.f32 %v1499, %v1499
        %v1564 = vmul.f32 %v1500, %v1500
        %v1565 = vmul.f32 %v1501, %v1501
        %v1566 = vmul.f32 %v1502, %v1502
        %v1567 = vmul.f32 %v1503, %v1503
        %v1568 = vmul.f32 %v1504, %v1504
        %v1569 = vmul.f32 %v1505, %v1505
        %v1570 = vmul.f32 %v1506, %v1506
        %v1571 = vmul.f32 %v1507, %v1507
        %v1572 = vmul.f32 %v1508, %v1508
        %v1573 = vmul.f32 %v1509, %v1509
        %v1574 = vmul.f32 %v1510, %v1510
        %v1575 = vmul.f32 %v1511, %v1511
        %v1576 = vmul.f32 %v1512, %v1512
        %v1577 = vmul.f32 %v1513, %v1513
        %v1578 = vmul.f32 %v1514, %v1514
        %v1579 = vmul.f32 %v1515, %v1515
        %v1580 = vmul.f32 %v1516, %v1516
        %v1581 = vmul.f32 %v1517, %v1517
        %v1582 = vmul.f32 %v1518, %v1518
        %v1583 = vmul.f32 %v1519, %v1519
        %v1584 = vmul.f32 %v1520, %v1520
        %v1585 = vmul.f32 %v1521, %v1521
        %v1586 = vmul.f32 %v1522, %v1522
        %v1587 = vmul.f32 %v1523, %v1523
        %v1588 = vmul.f32 %v1524, %v1524
        %v1589 = vmul.f32 %v1525, %v1525
        %v1590 = vmul.f32 %v1526, %v1526
        %v1591 = vmul.f32 %v1527, %v1527
        %v1592 = vmul.f32 %v1528, %v1528
        %v1593 = vmul.f32 %v1529, %v1529
        %v1594 = vmul.f32 %v1530, %v1530
        %v1595 = vmul.f32 %v1531, %v1531
        %v1596 = vmul.f32 %v1532, %v1532
        %v1597 = vmul.f32 %v1533, %v1533
        %v1598 = vmul.f32 %v1534, %v1534
        %v1599 = vadd.f32 %v1535, %v1536
        %v1600 = vadd.f32 %v1599, %v1537
        %v1601 = vadd.f32 %v1600, %v1538
        %v1602 = vadd.f32 %v1601, %v1539
        %v1603 = vadd.f32 %v1602, %v1540
        %v1604 = vadd.f32 %v1603, %v1541
        %v1605 = vadd.f32 %v1604, %v1542
        %v1606 = vadd.f32 %v1605, %v1543
        %v1607 = vadd.f32 %v1606, %v1544
        %v1608 = vadd.f32 %v1607, %v1545
        %v1609 = vadd.f32 %v1608, %v1546
        %v1610 = vadd.f32 %v1609, %v1547
        %v1611 = vadd.f32 %v1610, %v1548
        %v1612 = vadd.f32 %v1611, %v1549
        %v1613 = vadd.f32 %v1612, %v1550
        %v1614 = vadd.f32 %v1613, %v1551
        %v1615 = vadd.f32 %v1614, %v1552
        %v1616 = vadd.f32 %v1615, %v1553
        %v1617 = vadd.f32 %v1616, %v1554
        %v1618 = vadd.f32 %v1617, %v1555
        %v1619 = vadd.f32 %v1618, %v1556
        %v1620 = vadd.f32 %v1619, %v1557
        %v1621 = vadd.f32 %v1620, %v1558
        %v1622 = vadd.f32 %v1621, %v1559
        %v1623 = vadd.f32 %v1622, %v1560
        %v1624 = vadd.f32 %v1623, %v1561
        %v1625 = vadd.f32 %v1624, %v1562
        %v1626 = vadd.f32 %v1625, %v1563
        %v1627 = vadd.f32 %v1626, %v1564
        %v1628 = vadd.f32 %v1627, %v1565
        %v1629 = vadd.f32 %v1628, %v1566
        %v1630 = vadd.f32 %v1629, %v1567
        %v1631 = vadd.f32 %v1630, %v1568
        %v1632 = vadd.f32 %v1631, %v1569
        %v1633 = vadd.f32 %v1632, %v1570
        %v1634 = vadd.f32 %v1633, %v1571
        %v1635 = vadd.f32 %v1634, %v1572
        %v1636 = vadd.f32 %v1635, %v1573
        %v1637 = vadd.f32 %v1636, %v1574
        %v1638 = vadd.f32 %v1637, %v1575
        %v1639 = vadd.f32 %v1638, %v1576
        %v1640 = vadd.f32 %v1639, %v1577
        %v1641 = vadd.f32 %v1640, %v1578
        %v1642 = vadd.f32 %v1641, %v1579
        %v1643 = vadd.f32 %v1642, %v1580
        %v1644 = vadd.f32 %v1643, %v1581
        %v1645 = vadd.f32 %v1644, %v1582
        %v1646 = vadd.f32 %v1645, %v1583
        %v1647 = vadd.f32 %v1646, %v1584
        %v1648 = vadd.f32 %v1647, %v1585
        %v1649 = vadd.f32 %v1648, %v1586
        %v1650 = vadd.f32 %v1649, %v1587
        %v1651 = vadd.f32 %v1650, %v1588
        %v1652 = vadd.f32 %v1651, %v1589
        %v1653 = vadd.f32 %v1652, %v1590
        %v1654 = vadd.f32 %v1653, %v1591
        %v1655 = vadd.f32 %v1654, %v1592
        %v1656 = vadd.f32 %v1655, %v1593
        %v1657 = vadd.f32 %v1656, %v1594
        %v1658 = vadd.f32 %v1657, %v1595
        %v1659 = vadd.f32 %v1658, %v1596
        %v1660 = vadd.f32 %v1659, %v1597
        %v1661 = vadd.f32 %v1660, %v1598
        %v1662 = vrot.slane %v1661, 4
        %v1663 = vadd.f32 %v1661, %v1662
        %v1664 = vrot.slane %v1663, 2
        %v1665 = vadd.f32 %v1663, %v1664
        %v1666 = vrot.slane %v1665, 1
        %v1667 = vadd.f32 %v1665, %v1666
        %1668 = vst [vmem:[%s271] sm:$0x1] %v1469
        %1669 = vst [vmem:[%s271 + $0x1] sm:$0x1] %v1667
        %v1670 = vpack.c.bf16 %v1338, %v1337
        %v1671 = vpack.c.bf16 %v1340, %v1339
        %v1672 = vpack.c.bf16 %v1342, %v1341
        %v1673 = vpack.c.bf16 %v1344, %v1343
        %v1674 = vpack.c.bf16 %v1346, %v1345
        %v1675 = vpack.c.bf16 %v1348, %v1347
        %v1676 = vpack.c.bf16 %v1350, %v1349
        %v1677 = vpack.c.bf16 %v1352, %v1351
        %v1678 = vpack.c.bf16 %v1354, %v1353
        %v1679 = vpack.c.bf16 %v1356, %v1355
        %v1680 = vpack.c.bf16 %v1358, %v1357
        %v1681 = vpack.c.bf16 %v1360, %v1359
        %v1682 = vpack.c.bf16 %v1362, %v1361
        %v1683 = vpack.c.bf16 %v1364, %v1363
        %v1684 = vpack.c.bf16 %v1366, %v1365
        %v1685 = vpack.c.bf16 %v1368, %v1367
        %v1686 = vpack.c.bf16 %v1370, %v1369
        %v1687 = vpack.c.bf16 %v1372, %v1371
        %v1688 = vpack.c.bf16 %v1374, %v1373
        %v1689 = vpack.c.bf16 %v1376, %v1375
        %v1690 = vpack.c.bf16 %v1378, %v1377
        %v1691 = vpack.c.bf16 %v1380, %v1379
        %v1692 = vpack.c.bf16 %v1382, %v1381
        %v1693 = vpack.c.bf16 %v1384, %v1383
        %v1694 = vpack.c.bf16 %v1386, %v1385
        %v1695 = vpack.c.bf16 %v1388, %v1387
        %v1696 = vpack.c.bf16 %v1390, %v1389
        %v1697 = vpack.c.bf16 %v1392, %v1391
        %v1698 = vpack.c.bf16 %v1394, %v1393
        %v1699 = vpack.c.bf16 %v1396, %v1395
        %v1700 = vpack.c.bf16 %v1398, %v1397
        %v1701 = vpack.c.bf16 %v1400, %v1399
        %v1734 = vunpack.c.l.b16 %v1670
        %v1735 = vunpack.c.h.b16 %v1670
        %v1736 = vunpack.c.l.b16 %v1671
        %v1737 = vunpack.c.h.b16 %v1671
        %v1738 = vunpack.c.l.b16 %v1672
        %v1739 = vunpack.c.h.b16 %v1672
        %v1740 = vunpack.c.l.b16 %v1673
        %v1741 = vunpack.c.h.b16 %v1673
        %v1742 = vunpack.c.l.b16 %v1674
        %v1743 = vunpack.c.h.b16 %v1674
        %v1744 = vunpack.c.l.b16 %v1675
        %v1745 = vunpack.c.h.b16 %v1675
        %v1746 = vunpack.c.l.b16 %v1676
        %v1747 = vunpack.c.h.b16 %v1676
        %v1748 = vunpack.c.l.b16 %v1677
        %v1749 = vunpack.c.h.b16 %v1677
        %v1750 = vunpack.c.l.b16 %v1678
        %v1751 = vunpack.c.h.b16 %v1678
        %v1752 = vunpack.c.l.b16 %v1679
        %v1753 = vunpack.c.h.b16 %v1679
        %v1754 = vunpack.c.l.b16 %v1680
        %v1755 = vunpack.c.h.b16 %v1680
        %v1756 = vunpack.c.l.b16 %v1681
        %v1757 = vunpack.c.h.b16 %v1681
        %v1758 = vunpack.c.l.b16 %v1682
        %v1759 = vunpack.c.h.b16 %v1682
        %v1760 = vunpack.c.l.b16 %v1683
        %v1761 = vunpack.c.h.b16 %v1683
        %v1762 = vunpack.c.l.b16 %v1684
        %v1763 = vunpack.c.h.b16 %v1684
        %v1764 = vunpack.c.l.b16 %v1685
        %v1765 = vunpack.c.h.b16 %v1685
        %v1766 = vunpack.c.l.b16 %v1686
        %v1767 = vunpack.c.h.b16 %v1686
        %v1768 = vunpack.c.l.b16 %v1687
        %v1769 = vunpack.c.h.b16 %v1687
        %v1770 = vunpack.c.l.b16 %v1688
        %v1771 = vunpack.c.h.b16 %v1688
        %v1772 = vunpack.c.l.b16 %v1689
        %v1773 = vunpack.c.h.b16 %v1689
        %v1774 = vunpack.c.l.b16 %v1690
        %v1775 = vunpack.c.h.b16 %v1690
        %v1776 = vunpack.c.l.b16 %v1691
        %v1777 = vunpack.c.h.b16 %v1691
        %v1778 = vunpack.c.l.b16 %v1692
        %v1779 = vunpack.c.h.b16 %v1692
        %v1780 = vunpack.c.l.b16 %v1693
        %v1781 = vunpack.c.h.b16 %v1693
        %v1782 = vunpack.c.l.b16 %v1694
        %v1783 = vunpack.c.h.b16 %v1694
        %v1784 = vunpack.c.l.b16 %v1695
        %v1785 = vunpack.c.h.b16 %v1695
        %v1786 = vunpack.c.l.b16 %v1696
        %v1787 = vunpack.c.h.b16 %v1696
        %v1788 = vunpack.c.l.b16 %v1697
        %v1789 = vunpack.c.h.b16 %v1697
        %v1790 = vunpack.c.l.b16 %v1698
        %v1791 = vunpack.c.h.b16 %v1698
        %v1792 = vunpack.c.l.b16 %v1699
        %v1793 = vunpack.c.h.b16 %v1699
        %v1794 = vunpack.c.l.b16 %v1700
        %v1795 = vunpack.c.h.b16 %v1700
        %v1796 = vunpack.c.l.b16 %v1701
        %v1797 = vunpack.c.h.b16 %v1701
        %v1798 = vpack.c.b16 %v1734, %v1734
        %v1799 = vpack.c.b16 %v1735, %v1735
        %v1800 = vpack.c.b16 %v1736, %v1736
        %v1801 = vpack.c.b16 %v1737, %v1737
        %v1802 = vpack.c.b16 %v1738, %v1738
        %v1803 = vpack.c.b16 %v1739, %v1739
        %v1804 = vpack.c.b16 %v1740, %v1740
        %v1805 = vpack.c.b16 %v1741, %v1741
        %v1806 = vpack.c.b16 %v1742, %v1742
        %v1807 = vpack.c.b16 %v1743, %v1743
        %v1808 = vpack.c.b16 %v1744, %v1744
        %v1809 = vpack.c.b16 %v1745, %v1745
        %v1810 = vpack.c.b16 %v1746, %v1746
        %v1811 = vpack.c.b16 %v1747, %v1747
        %v1812 = vpack.c.b16 %v1748, %v1748
        %v1813 = vpack.c.b16 %v1749, %v1749
        %v1814 = vpack.c.b16 %v1750, %v1750
        %v1815 = vpack.c.b16 %v1751, %v1751
        %v1816 = vpack.c.b16 %v1752, %v1752
        %v1817 = vpack.c.b16 %v1753, %v1753
        %v1818 = vpack.c.b16 %v1754, %v1754
        %v1819 = vpack.c.b16 %v1755, %v1755
        %v1820 = vpack.c.b16 %v1756, %v1756
        %v1821 = vpack.c.b16 %v1757, %v1757
        %v1822 = vpack.c.b16 %v1758, %v1758
        %v1823 = vpack.c.b16 %v1759, %v1759
        %v1824 = vpack.c.b16 %v1760, %v1760
        %v1825 = vpack.c.b16 %v1761, %v1761
        %v1826 = vpack.c.b16 %v1762, %v1762
        %v1827 = vpack.c.b16 %v1763, %v1763
        %v1828 = vpack.c.b16 %v1764, %v1764
        %v1829 = vpack.c.b16 %v1765, %v1765
        %v1830 = vpack.c.b16 %v1766, %v1766
        %v1831 = vpack.c.b16 %v1767, %v1767
        %v1832 = vpack.c.b16 %v1768, %v1768
        %v1833 = vpack.c.b16 %v1769, %v1769
        %v1834 = vpack.c.b16 %v1770, %v1770
        %v1835 = vpack.c.b16 %v1771, %v1771
        %v1836 = vpack.c.b16 %v1772, %v1772
        %v1837 = vpack.c.b16 %v1773, %v1773
        %v1838 = vpack.c.b16 %v1774, %v1774
        %v1839 = vpack.c.b16 %v1775, %v1775
        %v1840 = vpack.c.b16 %v1776, %v1776
        %v1841 = vpack.c.b16 %v1777, %v1777
        %v1842 = vpack.c.b16 %v1778, %v1778
        %v1843 = vpack.c.b16 %v1779, %v1779
        %v1844 = vpack.c.b16 %v1780, %v1780
        %v1845 = vpack.c.b16 %v1781, %v1781
        %v1846 = vpack.c.b16 %v1782, %v1782
        %v1847 = vpack.c.b16 %v1783, %v1783
        %v1848 = vpack.c.b16 %v1784, %v1784
        %v1849 = vpack.c.b16 %v1785, %v1785
        %v1850 = vpack.c.b16 %v1786, %v1786
        %v1851 = vpack.c.b16 %v1787, %v1787
        %v1852 = vpack.c.b16 %v1788, %v1788
        %v1853 = vpack.c.b16 %v1789, %v1789
        %v1854 = vpack.c.b16 %v1790, %v1790
        %v1855 = vpack.c.b16 %v1791, %v1791
        %v1856 = vpack.c.b16 %v1792, %v1792
        %v1857 = vpack.c.b16 %v1793, %v1793
        %v1858 = vpack.c.b16 %v1794, %v1794
        %v1859 = vpack.c.b16 %v1795, %v1795
        %v1860 = vpack.c.b16 %v1796, %v1796
        %v1861 = vpack.c.b16 %v1797, %v1797
        %1926 = vst [vmem:[%s263] sm:$0xf] %v1798
        %1927 = vst [vmem:[%s263 + $0x4] sm:$0xf] %v1799
        %1928 = vst [vmem:[%s263 + $0x8] sm:$0xf] %v1800
        %1929 = vst [vmem:[%s263 + $0xc] sm:$0xf] %v1801
        %1930 = vst [vmem:[%s263 + $0x10] sm:$0xf] %v1802
        %1931 = vst [vmem:[%s263 + $0x14] sm:$0xf] %v1803
        %1932 = vst [vmem:[%s263 + $0x18] sm:$0xf] %v1804
        %1933 = vst [vmem:[%s263 + $0x1c] sm:$0xf] %v1805
        %1934 = vst [vmem:[%s263 + $0x20] sm:$0xf] %v1806
        %1935 = vst [vmem:[%s263 + $0x24] sm:$0xf] %v1807
        %1936 = vst [vmem:[%s263 + $0x28] sm:$0xf] %v1808
        %1937 = vst [vmem:[%s263 + $0x2c] sm:$0xf] %v1809
        %1938 = vst [vmem:[%s263 + $0x30] sm:$0xf] %v1810
        %1939 = vst [vmem:[%s263 + $0x34] sm:$0xf] %v1811
        %1940 = vst [vmem:[%s263 + $0x38] sm:$0xf] %v1812
        %1941 = vst [vmem:[%s263 + $0x3c] sm:$0xf] %v1813
        %1942 = vst [vmem:[%s263 + $0x40] sm:$0xf] %v1814
        %1943 = vst [vmem:[%s263 + $0x44] sm:$0xf] %v1815
        %1944 = vst [vmem:[%s263 + $0x48] sm:$0xf] %v1816
        %1945 = vst [vmem:[%s263 + $0x4c] sm:$0xf] %v1817
        %1946 = vst [vmem:[%s263 + $0x50] sm:$0xf] %v1818
        %1947 = vst [vmem:[%s263 + $0x54] sm:$0xf] %v1819
        %1948 = vst [vmem:[%s263 + $0x58] sm:$0xf] %v1820
        %1949 = vst [vmem:[%s263 + $0x5c] sm:$0xf] %v1821
        %1950 = vst [vmem:[%s263 + $0x60] sm:$0xf] %v1822
        %1951 = vst [vmem:[%s263 + $0x64] sm:$0xf] %v1823
        %1952 = vst [vmem:[%s263 + $0x68] sm:$0xf] %v1824
        %1953 = vst [vmem:[%s263 + $0x6c] sm:$0xf] %v1825
        %1954 = vst [vmem:[%s263 + $0x70] sm:$0xf] %v1826
        %1955 = vst [vmem:[%s263 + $0x74] sm:$0xf] %v1827
        %1956 = vst [vmem:[%s263 + $0x78] sm:$0xf] %v1828
        %1957 = vst [vmem:[%s263 + $0x7c] sm:$0xf] %v1829
        %1958 = vst [vmem:[%s263 + $0x80] sm:$0xf] %v1830
        %1959 = vst [vmem:[%s263 + $0x84] sm:$0xf] %v1831
        %1960 = vst [vmem:[%s263 + $0x88] sm:$0xf] %v1832
        %1961 = vst [vmem:[%s263 + $0x8c] sm:$0xf] %v1833
        %1962 = vst [vmem:[%s263 + $0x90] sm:$0xf] %v1834
        %1963 = vst [vmem:[%s263 + $0x94] sm:$0xf] %v1835
        %1964 = vst [vmem:[%s263 + $0x98] sm:$0xf] %v1836
        %1965 = vst [vmem:[%s263 + $0x9c] sm:$0xf] %v1837
        %1966 = vst [vmem:[%s263 + $0xa0] sm:$0xf] %v1838
        %1967 = vst [vmem:[%s263 + $0xa4] sm:$0xf] %v1839
        %1968 = vst [vmem:[%s263 + $0xa8] sm:$0xf] %v1840
        %1969 = vst [vmem:[%s263 + $0xac] sm:$0xf] %v1841
        %1970 = vst [vmem:[%s263 + $0xb0] sm:$0xf] %v1842
        %1971 = vst [vmem:[%s263 + $0xb4] sm:$0xf] %v1843
        %1972 = vst [vmem:[%s263 + $0xb8] sm:$0xf] %v1844
        %1973 = vst [vmem:[%s263 + $0xbc] sm:$0xf] %v1845
        %1974 = vst [vmem:[%s263 + $0xc0] sm:$0xf] %v1846
        %1975 = vst [vmem:[%s263 + $0xc4] sm:$0xf] %v1847
        %1976 = vst [vmem:[%s263 + $0xc8] sm:$0xf] %v1848
        %1977 = vst [vmem:[%s263 + $0xcc] sm:$0xf] %v1849
        %1978 = vst [vmem:[%s263 + $0xd0] sm:$0xf] %v1850
        %1979 = vst [vmem:[%s263 + $0xd4] sm:$0xf] %v1851
        %1980 = vst [vmem:[%s263 + $0xd8] sm:$0xf] %v1852
        %1981 = vst [vmem:[%s263 + $0xdc] sm:$0xf] %v1853
        %1982 = vst [vmem:[%s263 + $0xe0] sm:$0xf] %v1854
        %1983 = vst [vmem:[%s263 + $0xe4] sm:$0xf] %v1855
        %1984 = vst [vmem:[%s263 + $0xe8] sm:$0xf] %v1856
        %1985 = vst [vmem:[%s263 + $0xec] sm:$0xf] %v1857
        %1986 = vst [vmem:[%s263 + $0xf0] sm:$0xf] %v1858
        %1987 = vst [vmem:[%s263 + $0xf4] sm:$0xf] %v1859
        %1988 = vst [vmem:[%s263 + $0xf8] sm:$0xf] %v1860
        %1989 = vst [vmem:[%s263 + $0xfc] sm:$0xf] %v1861
      $region36: #{conv_bn_act.2} parent=27 // pred_fallthru
        _
      %s1990 = smul.u32 64, %s20
      %p1991 = scmp.lt.s32.totalorder %s1990, 255
      %s1992 = scalar_select %p1991, %s1990, 255
      %p1993 = scmp.lt.s32.totalorder %s21, 0
      %s1994 = scalar_select %p1993, %s21, 0
      %s1995 = sadd.s32 %s1994, %s1992
      %s1996 = smul.addr %s1995, 4
      %s1997 = scalar_lea.vmem %s2, %s1996
      %p1998 = scmp.lt.s32.totalorder %s20, 3
      %s1999 = scalar_select %p1998, %s20, 3
      %p2000 = scmp.lt.s32.totalorder %s21, 0
      %s2001 = scalar_select %p2000, %s21, 0
      %s2002 = sadd.s32 %s2001, %s1999
      %s2003 = smul.addr %s2002, 8
      %s2004 = scalar_lea.vmem %s3, %s2003
      // Predicated region
      $region37: #{conv_bn_act.2} parent=27 // pred_check
        %p2005 = pneg %p110
      $region38: #{conv_bn_act.2} parent=27 // pred_check_branch
        %2007 = sbr.rel (%p2005) target = $region40
      $region39: #{conv_bn_act.2} parent=27 // pred_region
        %s2008 = smul.u32 64, %s20
      $region40: #{conv_bn_act.2} parent=27 // pred_fallthru
        _
      // Predicated region
      $region41: #{conv_bn_act.2} parent=27 // pred_check
        %p2009 = pneg %p138
      $region42: #{conv_bn_act.2} parent=27 // pred_check_branch
        %2011 = sbr.rel (%p2009) target = $region44
      $region43: #{conv_bn_act.2} parent=27 // pred_region
        _
      $region44: #{conv_bn_act.2} parent=27 // pred_fallthru
        _
    $region28: #{conv_bn_act.2} parent=5 // pred_fallthru
      _
    %p2012 = scmp.le.s32.totalorder 2, %s10
    // Predicated region
    $region45: #{conv_bn_act.2} parent=5 // pred_check
      %p2013 = pneg %p2012
    $region46: #{conv_bn_act.2} parent=5 // pred_check_branch
      %2015 = sbr.rel (%p2013) target = $region48
    $region47: #{conv_bn_act.2} parent=5 // pred_region
      %s2016 = ssub.s32 %s10, 2
      // Predicated region
      $region49: #{conv_bn_act.2} parent=47 // pred_check
        %p2017 = pneg %p116
      $region50: #{conv_bn_act.2} parent=47 // pred_check_branch
        %2019 = sbr.rel (%p2017) target = $region52
      $region51: #{conv_bn_act.2} parent=47 // pred_region
        %s2020 = smul.u32 64, %s23
        %p2021 = scmp.lt.s32.totalorder %s2020, 255
        %s2022 = scalar_select %p2021, %s2020, 255
        %p2023 = scmp.lt.s32.totalorder %s24, 0
        %s2024 = scalar_select %p2023, %s24, 0
        %s2025 = sadd.s32 %s2024, %s2022
        %s2026 = smul.addr %s2025, 4
        %s2027 = scalar_lea.vmem %s2, %s2026
      $region52: #{conv_bn_act.2} parent=47 // pred_fallthru
        _
      // Predicated region
      $region53: #{conv_bn_act.2} parent=47 // pred_check
        %p2028 = pneg %p144
      $region54: #{conv_bn_act.2} parent=47 // pred_check_branch
        %2030 = sbr.rel (%p2028) target = $region56
      $region55: #{conv_bn_act.2} parent=47 // pred_region
        %p2031 = scmp.lt.s32.totalorder %s23, 3
        %s2032 = scalar_select %p2031, %s23, 3
        %p2033 = scmp.lt.s32.totalorder %s24, 0
        %s2034 = scalar_select %p2033, %s24, 0
        %s2035 = sadd.s32 %s2034, %s2032
        %s2036 = smul.addr %s2035, 8
        %s2037 = scalar_lea.vmem %s3, %s2036
      $region56: #{conv_bn_act.2} parent=47 // pred_fallthru
        _
    $region48: #{conv_bn_act.2} parent=5 // pred_fallthru
      _
  $region6: #{conv_bn_act.2} parent=0 // loop_footer
    %s14 = sadd.s32 1, %s10
  $region7: #{conv_bn_act.2} parent=0 // loop_footer_branch
    %9 = sbr.rel target = $region3
  $region8: #{conv_bn_act.2} parent=0 // loop_exit
    _

</llo_original>
